<compile_context>
chip_gen: v5e
topology: v5e:2x2
jax: 0.10.0
libtpu: 0.0.40
codegen_flags: <defaults>
</compile_context>

<pallas_src>
import functools

import jax
import jax.numpy as jnp
from jax.experimental import pallas as pl
from jax.experimental.pallas import tpu as pltpu


def _ccsam_kernel(x_ref, w1t_ref, w2_ref, cw_ref, cb_ref, o_ref, *, C, Cr, H, W, K, Bblk):
    HW = H * W
    pad = K // 2
    Hp = H + 2 * pad
    Wp = W + 2 * pad

    # ---- parameter loads hoisted out of the per-image loop ----
    w1t = w1t_ref[...]                                   # (C, Cr) == fc1.weight.T
    w2 = w2_ref[...]                                     # (C, Cr) == fc2.weight
    wvals = [cw_ref[i] for i in range(2 * K * K)]        # 2*7*7 conv taps (SMEM scalars)
    bias = cb_ref[0]

    zrow = jnp.zeros((1, W), dtype=jnp.float32)
    zcol = jnp.zeros((Hp, pad), dtype=jnp.float32)

    def unflatten_pad(row):                              # (1, HW) -> zero-padded (Hp, Wp)
        pieces = ([zrow] * pad
                  + [row[:, r * W:(r + 1) * W] for r in range(H)]
                  + [zrow] * pad)
        a = jnp.concatenate(pieces, axis=0)              # (Hp, W)
        return jnp.concatenate([zcol, a, zcol], axis=1)  # (Hp, Wp)

    for bi in range(Bblk):                               # static unroll over the batch block
        xb = x_ref[bi]                                   # (C, HW), lane-dense f32

        # ---------------- Channel attention ----------------
        # Global avg / max pool over the flattened spatial axis (one lane reduce each).
        avg_c = jnp.mean(xb, axis=1, keepdims=True)      # (C, 1)
        max_c = jnp.max(xb, axis=1, keepdims=True)       # (C, 1)
        p = jnp.concatenate([avg_c, max_c], axis=1)      # (C, 2): [avg | max]

        # fc1 (1x1 conv, no bias) + ReLU, applied to both pooled vectors at once.
        # TODO(synk): for large C (>=128) switch these contractions to
        # jnp.dot(..., preferred_element_type=jnp.float32) so they run on the MXU.
        h_rows = [jnp.sum(w1t[:, j:j + 1] * p, axis=0, keepdims=True) for j in range(Cr)]
        h = jnp.maximum(jnp.concatenate(h_rows, axis=0), 0.0)      # (Cr, 2)

        # fc2 (1x1 conv, no bias)
        attn = w2[:, 0:1] * h[0:1, :]                               # (C, 2)
        for j in range(1, Cr):
            attn = attn + w2[:, j:j + 1] * h[j:j + 1, :]

        ca = jax.nn.sigmoid(attn[:, 0:1] + attn[:, 1:2])            # (C, 1)
        xc = xb * ca                                                # (C, HW), channel-weighted

        # ---------------- Spatial attention ----------------
        avg_sp = jnp.mean(xc, axis=0, keepdims=True)                # (1, HW)
        max_sp = jnp.max(xc, axis=0, keepdims=True)                 # (1, HW)
        # Descriptor channel order matches torch.cat([avg, max], dim=1).
        pads = (unflatten_pad(avg_sp), unflatten_pad(max_sp))

        # 7x7 conv, 2 in-channels -> 1 out-channel, padding=3, stride=1.
        # Hoist the K lane (kx) shifts per channel; the inner loop only takes
        # sublane row slices and does scalar-weighted adds spread over 4
        # independent accumulators (breaks the serial add chain).
        accs = [jnp.zeros((H, W), dtype=jnp.float32) for _ in range(4)]
        t = 0
        for c in range(2):
            pc = pads[c]                                            # (Hp, Wp)
            shifted = [pc[:, kx:kx + W] for kx in range(K)]         # K x (Hp, W)
            for ky in range(K):
                base = c * K * K + ky * K
                for kx in range(K):
                    accs[t % 4] = accs[t % 4] + wvals[base + kx] * shifted[kx][ky:ky + H, :]
                    t += 1
        conv = (accs[0] + accs[1]) + (accs[2] + accs[3]) + bias
        sa = jax.nn.sigmoid(conv)                                   # (H, W)

        # Flatten back to the lane-dense layout and gate; (C, HW) store -> unmasked vst.
        sa_flat = jnp.concatenate([sa[r:r + 1, :] for r in range(H)], axis=1)   # (1, HW)
        o_ref[bi] = (xc * sa_flat).astype(o_ref.dtype)


def ccsam_pallas(x, w1, w2, conv_w, conv_b):
    """x: (B, C, H, W) f32. w1: (Cr, C), w2: (C, Cr), conv_w: (1, 2, 7, 7), conv_b: (1,)."""
    B, C, H, W = x.shape
    Cr = w1.shape[0]
    K = conv_w.shape[-1]
    HW = H * W

    # Lane-dense I/O layout: (B, C, H*W). Free (contiguous) reshape outside the kernel.
    x_flat = jnp.asarray(x, jnp.float32).reshape(B, C, HW)
    w1t = jnp.asarray(w1, jnp.float32).T                     # (C, Cr)
    w2f = jnp.asarray(w2, jnp.float32)                       # (C, Cr)
    cw_flat = jnp.asarray(conv_w, jnp.float32).reshape(-1)   # (2*K*K,) SMEM scalars
    cb = jnp.asarray(conv_b, jnp.float32).reshape(-1)        # (1,)     SMEM scalar

    # Fold the batch into (at most) 2 grid steps: big DMAs + amortized per-step
    # overhead, while keeping 2 "parallel" steps for a v7x megacore. Odd batches
    # fall back to one image per step.
    # TODO(synk): for production shapes (C>=256, H=W>=56) add a channel-tile grid
    # axis and raise vmem_limit_bytes; a full f32 feature map per step can exceed
    # v7x's 64 MiB physical / default scoped VMEM.
    if B >= 2 and B % 2 == 0:
        Bblk = B // 2
    else:
        Bblk = 1
    n_steps = B // Bblk

    kernel = functools.partial(_ccsam_kernel, C=C, Cr=Cr, H=H, W=W, K=K, Bblk=Bblk)

    out_flat = pl.pallas_call(
        kernel,
        out_shape=jax.ShapeDtypeStruct((B, C, HW), jnp.float32),
        grid=(n_steps,),
        in_specs=[
            pl.BlockSpec((Bblk, C, HW), lambda b: (b, 0, 0)),
            pl.BlockSpec((C, Cr), lambda b: (0, 0)),
            pl.BlockSpec((C, Cr), lambda b: (0, 0)),
            pl.BlockSpec(memory_space=pltpu.MemorySpace.SMEM),
            pl.BlockSpec(memory_space=pltpu.MemorySpace.SMEM),
        ],
        out_specs=pl.BlockSpec((Bblk, C, HW), lambda b: (b, 0, 0)),
        compiler_params=pltpu.CompilerParams(dimension_semantics=("parallel",)),
    )(x_flat, w1t, w2f, cw_flat, cb)

    return out_flat.reshape(B, C, H, W)


def ccsam_ref(x, w1, w2, conv_w, conv_b):
    """Pure-JAX reference matching the PyTorch forward."""
    avg = jnp.mean(x, axis=(2, 3))                         # (B, C)
    mx = jnp.max(x, axis=(2, 3))                           # (B, C)

    def mlp(p):
        h = jnp.maximum(p @ w1.T, 0.0)                     # (B, Cr)
        return h @ w2.T                                    # (B, C)

    ca = jax.nn.sigmoid(mlp(avg) + mlp(mx))                # (B, C)
    xc = x * ca[:, :, None, None]

    avg_sp = jnp.mean(xc, axis=1, keepdims=True)
    max_sp = jnp.max(xc, axis=1, keepdims=True)
    desc = jnp.concatenate([avg_sp, max_sp], axis=1)       # (B, 2, H, W)
    conv = jax.lax.conv_general_dilated(
        desc, conv_w, window_strides=(1, 1), padding=((3, 3), (3, 3)),
        dimension_numbers=("NCHW", "OIHW", "NCHW"),
    ) + conv_b.reshape(1, 1, 1, 1)
    sa = jax.nn.sigmoid(conv)                              # (B, 1, H, W)
    return xc * sa


if __name__ == "__main__":
    # Small but valid shapes: in_planes must be divisible by ratio=16.
    B, C, H, W = 2, 32, 16, 16
    ratio = 16
    Cr = C // ratio

    key = jax.random.PRNGKey(0)
    kx_, k1, k2, k3, k4 = jax.random.split(key, 5)

    x = jax.random.normal(kx_, (B, C, H, W), dtype=jnp.float32)
    # Deterministic synthetic parameters (module __init__ shapes):
    w1 = 0.1 * jax.random.normal(k1, (Cr, C), dtype=jnp.float32)           # fc1: Conv2d(C, Cr, 1, bias=False)
    w2 = 0.1 * jax.random.normal(k2, (C, Cr), dtype=jnp.float32)           # fc2: Conv2d(Cr, C, 1, bias=False)
    conv_w = 0.1 * jax.random.normal(k3, (1, 2, 7, 7), dtype=jnp.float32)  # SpatialAttention conv weight
    conv_b = 0.1 * jax.random.normal(k4, (1,), dtype=jnp.float32)          # SpatialAttention conv bias

    out = ccsam_pallas(x, w1, w2, conv_w, conv_b)
    jax.block_until_ready(out)

    ref = ccsam_ref(x, w1, w2, conv_w, conv_b)
    assert out.shape == (B, C, H, W)
    assert jnp.allclose(out, ref, rtol=1e-4, atol=1e-4), float(jnp.max(jnp.abs(out - ref)))

    print("KERNEL_OK")
</pallas_src>

<mosaic_0001>
module attributes {stable_mosaic.version = 11 : i64} {
  func.func @_ccsam_kernel(%arg0: i32, %arg1: memref<1x32x256xf32, #tpu.memory_space<vmem>>, %arg2: memref<32x2xf32, #tpu.memory_space<vmem>>, %arg3: memref<32x2xf32, #tpu.memory_space<vmem>>, %arg4: memref<98xf32, #tpu.memory_space<smem>>, %arg5: memref<1xf32, #tpu.memory_space<smem>>, %arg6: memref<1x32x256xf32, #tpu.memory_space<vmem>>) attributes {dimension_semantics = [#tpu.dimension_semantics<parallel>], iteration_bounds = array<i64: 2>, scalar_prefetch = 0 : i64, scratch_operands = 0 : i64, tpu.core_type = #tpu.core_type<tc>, window_params = [{transform_indices = @transform_0, window_bounds = array<i64: 1, 32, 256>}, {pipeline_mode = #tpu.pipeline_mode<synchronous>, transform_indices = @transform_1, window_bounds = array<i64: 32, 2>}, {pipeline_mode = #tpu.pipeline_mode<synchronous>, transform_indices = @transform_2, window_bounds = array<i64: 32, 2>}, {transform_indices = @transform_3, window_bounds = array<i64: 98>}, {transform_indices = @transform_4, window_bounds = array<i64: 1>}, {transform_indices = @transform_5, window_bounds = array<i64: 1, 32, 256>}]} {
    %c0 = arith.constant 0 : index
    %c0_0 = arith.constant 0 : index
    %0 = vector.load %arg2[%c0, %c0_0] : memref<32x2xf32, #tpu.memory_space<vmem>>, vector<32x2xf32>
    %c0_1 = arith.constant 0 : index
    %c0_2 = arith.constant 0 : index
    %1 = vector.load %arg3[%c0_1, %c0_2] : memref<32x2xf32, #tpu.memory_space<vmem>>, vector<32x2xf32>
    %c0_3 = arith.constant 0 : index
    %2 = memref.load %arg4[%c0_3] : memref<98xf32, #tpu.memory_space<smem>>
    %c1 = arith.constant 1 : index
    %3 = memref.load %arg4[%c1] : memref<98xf32, #tpu.memory_space<smem>>
    %c2 = arith.constant 2 : index
    %4 = memref.load %arg4[%c2] : memref<98xf32, #tpu.memory_space<smem>>
    %c3 = arith.constant 3 : index
    %5 = memref.load %arg4[%c3] : memref<98xf32, #tpu.memory_space<smem>>
    %c4 = arith.constant 4 : index
    %6 = memref.load %arg4[%c4] : memref<98xf32, #tpu.memory_space<smem>>
    %c5 = arith.constant 5 : index
    %7 = memref.load %arg4[%c5] : memref<98xf32, #tpu.memory_space<smem>>
    %c6 = arith.constant 6 : index
    %8 = memref.load %arg4[%c6] : memref<98xf32, #tpu.memory_space<smem>>
    %c7 = arith.constant 7 : index
    %9 = memref.load %arg4[%c7] : memref<98xf32, #tpu.memory_space<smem>>
    %c8 = arith.constant 8 : index
    %10 = memref.load %arg4[%c8] : memref<98xf32, #tpu.memory_space<smem>>
    %c9 = arith.constant 9 : index
    %11 = memref.load %arg4[%c9] : memref<98xf32, #tpu.memory_space<smem>>
    %c10 = arith.constant 10 : index
    %12 = memref.load %arg4[%c10] : memref<98xf32, #tpu.memory_space<smem>>
    %c11 = arith.constant 11 : index
    %13 = memref.load %arg4[%c11] : memref<98xf32, #tpu.memory_space<smem>>
    %c12 = arith.constant 12 : index
    %14 = memref.load %arg4[%c12] : memref<98xf32, #tpu.memory_space<smem>>
    %c13 = arith.constant 13 : index
    %15 = memref.load %arg4[%c13] : memref<98xf32, #tpu.memory_space<smem>>
    %c14 = arith.constant 14 : index
    %16 = memref.load %arg4[%c14] : memref<98xf32, #tpu.memory_space<smem>>
    %c15 = arith.constant 15 : index
    %17 = memref.load %arg4[%c15] : memref<98xf32, #tpu.memory_space<smem>>
    %c16 = arith.constant 16 : index
    %18 = memref.load %arg4[%c16] : memref<98xf32, #tpu.memory_space<smem>>
    %c17 = arith.constant 17 : index
    %19 = memref.load %arg4[%c17] : memref<98xf32, #tpu.memory_space<smem>>
    %c18 = arith.constant 18 : index
    %20 = memref.load %arg4[%c18] : memref<98xf32, #tpu.memory_space<smem>>
    %c19 = arith.constant 19 : index
    %21 = memref.load %arg4[%c19] : memref<98xf32, #tpu.memory_space<smem>>
    %c20 = arith.constant 20 : index
    %22 = memref.load %arg4[%c20] : memref<98xf32, #tpu.memory_space<smem>>
    %c21 = arith.constant 21 : index
    %23 = memref.load %arg4[%c21] : memref<98xf32, #tpu.memory_space<smem>>
    %c22 = arith.constant 22 : index
    %24 = memref.load %arg4[%c22] : memref<98xf32, #tpu.memory_space<smem>>
    %c23 = arith.constant 23 : index
    %25 = memref.load %arg4[%c23] : memref<98xf32, #tpu.memory_space<smem>>
    %c24 = arith.constant 24 : index
    %26 = memref.load %arg4[%c24] : memref<98xf32, #tpu.memory_space<smem>>
    %c25 = arith.constant 25 : index
    %27 = memref.load %arg4[%c25] : memref<98xf32, #tpu.memory_space<smem>>
    %c26 = arith.constant 26 : index
    %28 = memref.load %arg4[%c26] : memref<98xf32, #tpu.memory_space<smem>>
    %c27 = arith.constant 27 : index
    %29 = memref.load %arg4[%c27] : memref<98xf32, #tpu.memory_space<smem>>
    %c28 = arith.constant 28 : index
    %30 = memref.load %arg4[%c28] : memref<98xf32, #tpu.memory_space<smem>>
    %c29 = arith.constant 29 : index
    %31 = memref.load %arg4[%c29] : memref<98xf32, #tpu.memory_space<smem>>
    %c30 = arith.constant 30 : index
    %32 = memref.load %arg4[%c30] : memref<98xf32, #tpu.memory_space<smem>>
    %c31 = arith.constant 31 : index
    %33 = memref.load %arg4[%c31] : memref<98xf32, #tpu.memory_space<smem>>
    %c32 = arith.constant 32 : index
    %34 = memref.load %arg4[%c32] : memref<98xf32, #tpu.memory_space<smem>>
    %c33 = arith.constant 33 : index
    %35 = memref.load %arg4[%c33] : memref<98xf32, #tpu.memory_space<smem>>
    %c34 = arith.constant 34 : index
    %36 = memref.load %arg4[%c34] : memref<98xf32, #tpu.memory_space<smem>>
    %c35 = arith.constant 35 : index
    %37 = memref.load %arg4[%c35] : memref<98xf32, #tpu.memory_space<smem>>
    %c36 = arith.constant 36 : index
    %38 = memref.load %arg4[%c36] : memref<98xf32, #tpu.memory_space<smem>>
    %c37 = arith.constant 37 : index
    %39 = memref.load %arg4[%c37] : memref<98xf32, #tpu.memory_space<smem>>
    %c38 = arith.constant 38 : index
    %40 = memref.load %arg4[%c38] : memref<98xf32, #tpu.memory_space<smem>>
    %c39 = arith.constant 39 : index
    %41 = memref.load %arg4[%c39] : memref<98xf32, #tpu.memory_space<smem>>
    %c40 = arith.constant 40 : index
    %42 = memref.load %arg4[%c40] : memref<98xf32, #tpu.memory_space<smem>>
    %c41 = arith.constant 41 : index
    %43 = memref.load %arg4[%c41] : memref<98xf32, #tpu.memory_space<smem>>
    %c42 = arith.constant 42 : index
    %44 = memref.load %arg4[%c42] : memref<98xf32, #tpu.memory_space<smem>>
    %c43 = arith.constant 43 : index
    %45 = memref.load %arg4[%c43] : memref<98xf32, #tpu.memory_space<smem>>
    %c44 = arith.constant 44 : index
    %46 = memref.load %arg4[%c44] : memref<98xf32, #tpu.memory_space<smem>>
    %c45 = arith.constant 45 : index
    %47 = memref.load %arg4[%c45] : memref<98xf32, #tpu.memory_space<smem>>
    %c46 = arith.constant 46 : index
    %48 = memref.load %arg4[%c46] : memref<98xf32, #tpu.memory_space<smem>>
    %c47 = arith.constant 47 : index
    %49 = memref.load %arg4[%c47] : memref<98xf32, #tpu.memory_space<smem>>
    %c48 = arith.constant 48 : index
    %50 = memref.load %arg4[%c48] : memref<98xf32, #tpu.memory_space<smem>>
    %c49 = arith.constant 49 : index
    %51 = memref.load %arg4[%c49] : memref<98xf32, #tpu.memory_space<smem>>
    %c50 = arith.constant 50 : index
    %52 = memref.load %arg4[%c50] : memref<98xf32, #tpu.memory_space<smem>>
    %c51 = arith.constant 51 : index
    %53 = memref.load %arg4[%c51] : memref<98xf32, #tpu.memory_space<smem>>
    %c52 = arith.constant 52 : index
    %54 = memref.load %arg4[%c52] : memref<98xf32, #tpu.memory_space<smem>>
    %c53 = arith.constant 53 : index
    %55 = memref.load %arg4[%c53] : memref<98xf32, #tpu.memory_space<smem>>
    %c54 = arith.constant 54 : index
    %56 = memref.load %arg4[%c54] : memref<98xf32, #tpu.memory_space<smem>>
    %c55 = arith.constant 55 : index
    %57 = memref.load %arg4[%c55] : memref<98xf32, #tpu.memory_space<smem>>
    %c56 = arith.constant 56 : index
    %58 = memref.load %arg4[%c56] : memref<98xf32, #tpu.memory_space<smem>>
    %c57 = arith.constant 57 : index
    %59 = memref.load %arg4[%c57] : memref<98xf32, #tpu.memory_space<smem>>
    %c58 = arith.constant 58 : index
    %60 = memref.load %arg4[%c58] : memref<98xf32, #tpu.memory_space<smem>>
    %c59 = arith.constant 59 : index
    %61 = memref.load %arg4[%c59] : memref<98xf32, #tpu.memory_space<smem>>
    %c60 = arith.constant 60 : index
    %62 = memref.load %arg4[%c60] : memref<98xf32, #tpu.memory_space<smem>>
    %c61 = arith.constant 61 : index
    %63 = memref.load %arg4[%c61] : memref<98xf32, #tpu.memory_space<smem>>
    %c62 = arith.constant 62 : index
    %64 = memref.load %arg4[%c62] : memref<98xf32, #tpu.memory_space<smem>>
    %c63 = arith.constant 63 : index
    %65 = memref.load %arg4[%c63] : memref<98xf32, #tpu.memory_space<smem>>
    %c64 = arith.constant 64 : index
    %66 = memref.load %arg4[%c64] : memref<98xf32, #tpu.memory_space<smem>>
    %c65 = arith.constant 65 : index
    %67 = memref.load %arg4[%c65] : memref<98xf32, #tpu.memory_space<smem>>
    %c66 = arith.constant 66 : index
    %68 = memref.load %arg4[%c66] : memref<98xf32, #tpu.memory_space<smem>>
    %c67 = arith.constant 67 : index
    %69 = memref.load %arg4[%c67] : memref<98xf32, #tpu.memory_space<smem>>
    %c68 = arith.constant 68 : index
    %70 = memref.load %arg4[%c68] : memref<98xf32, #tpu.memory_space<smem>>
    %c69 = arith.constant 69 : index
    %71 = memref.load %arg4[%c69] : memref<98xf32, #tpu.memory_space<smem>>
    %c70 = arith.constant 70 : index
    %72 = memref.load %arg4[%c70] : memref<98xf32, #tpu.memory_space<smem>>
    %c71 = arith.constant 71 : index
    %73 = memref.load %arg4[%c71] : memref<98xf32, #tpu.memory_space<smem>>
    %c72 = arith.constant 72 : index
    %74 = memref.load %arg4[%c72] : memref<98xf32, #tpu.memory_space<smem>>
    %c73 = arith.constant 73 : index
    %75 = memref.load %arg4[%c73] : memref<98xf32, #tpu.memory_space<smem>>
    %c74 = arith.constant 74 : index
    %76 = memref.load %arg4[%c74] : memref<98xf32, #tpu.memory_space<smem>>
    %c75 = arith.constant 75 : index
    %77 = memref.load %arg4[%c75] : memref<98xf32, #tpu.memory_space<smem>>
    %c76 = arith.constant 76 : index
    %78 = memref.load %arg4[%c76] : memref<98xf32, #tpu.memory_space<smem>>
    %c77 = arith.constant 77 : index
    %79 = memref.load %arg4[%c77] : memref<98xf32, #tpu.memory_space<smem>>
    %c78 = arith.constant 78 : index
    %80 = memref.load %arg4[%c78] : memref<98xf32, #tpu.memory_space<smem>>
    %c79 = arith.constant 79 : index
    %81 = memref.load %arg4[%c79] : memref<98xf32, #tpu.memory_space<smem>>
    %c80 = arith.constant 80 : index
    %82 = memref.load %arg4[%c80] : memref<98xf32, #tpu.memory_space<smem>>
    %c81 = arith.constant 81 : index
    %83 = memref.load %arg4[%c81] : memref<98xf32, #tpu.memory_space<smem>>
    %c82 = arith.constant 82 : index
    %84 = memref.load %arg4[%c82] : memref<98xf32, #tpu.memory_space<smem>>
    %c83 = arith.constant 83 : index
    %85 = memref.load %arg4[%c83] : memref<98xf32, #tpu.memory_space<smem>>
    %c84 = arith.constant 84 : index
    %86 = memref.load %arg4[%c84] : memref<98xf32, #tpu.memory_space<smem>>
    %c85 = arith.constant 85 : index
    %87 = memref.load %arg4[%c85] : memref<98xf32, #tpu.memory_space<smem>>
    %c86 = arith.constant 86 : index
    %88 = memref.load %arg4[%c86] : memref<98xf32, #tpu.memory_space<smem>>
    %c87 = arith.constant 87 : index
    %89 = memref.load %arg4[%c87] : memref<98xf32, #tpu.memory_space<smem>>
    %c88 = arith.constant 88 : index
    %90 = memref.load %arg4[%c88] : memref<98xf32, #tpu.memory_space<smem>>
    %c89 = arith.constant 89 : index
    %91 = memref.load %arg4[%c89] : memref<98xf32, #tpu.memory_space<smem>>
    %c90 = arith.constant 90 : index
    %92 = memref.load %arg4[%c90] : memref<98xf32, #tpu.memory_space<smem>>
    %c91 = arith.constant 91 : index
    %93 = memref.load %arg4[%c91] : memref<98xf32, #tpu.memory_space<smem>>
    %c92 = arith.constant 92 : index
    %94 = memref.load %arg4[%c92] : memref<98xf32, #tpu.memory_space<smem>>
    %c93 = arith.constant 93 : index
    %95 = memref.load %arg4[%c93] : memref<98xf32, #tpu.memory_space<smem>>
    %c94 = arith.constant 94 : index
    %96 = memref.load %arg4[%c94] : memref<98xf32, #tpu.memory_space<smem>>
    %c95 = arith.constant 95 : index
    %97 = memref.load %arg4[%c95] : memref<98xf32, #tpu.memory_space<smem>>
    %c96 = arith.constant 96 : index
    %98 = memref.load %arg4[%c96] : memref<98xf32, #tpu.memory_space<smem>>
    %c97 = arith.constant 97 : index
    %99 = memref.load %arg4[%c97] : memref<98xf32, #tpu.memory_space<smem>>
    %c0_4 = arith.constant 0 : index
    %100 = memref.load %arg5[%c0_4] : memref<1xf32, #tpu.memory_space<smem>>
    %cst = arith.constant 0.000000e+00 : f32
    %101 = vector.broadcast %cst : f32 to vector<1x16xf32>
    %cst_5 = arith.constant 0.000000e+00 : f32
    %102 = vector.broadcast %cst_5 : f32 to vector<22x3xf32>
    %c0_6 = arith.constant 0 : index
    %c0_7 = arith.constant 0 : index
    %c0_8 = arith.constant 0 : index
    %103 = vector.load %arg1[%c0_6, %c0_7, %c0_8] : memref<1x32x256xf32, #tpu.memory_space<vmem>>, vector<1x32x256xf32>
    %104 = vector.shape_cast %103 : vector<1x32x256xf32> to vector<32x256xf32>
    %cst_9 = arith.constant dense<0.000000e+00> : vector<32xf32>
    %105 = vector.multi_reduction <add>, %104, %cst_9 [1] : vector<32x256xf32> to vector<32xf32>
    %106 = vector.shape_cast %105 : vector<32xf32> to vector<32x1xf32>
    %cst_10 = arith.constant 2.560000e+02 : f32
    %107 = vector.broadcast %cst_10 : f32 to vector<32x1xf32>
    %108 = arith.divf %106, %107 : vector<32x1xf32>
    %cst_11 = arith.constant dense<0xFF800000> : vector<32xf32>
    %109 = vector.multi_reduction <maximumf>, %104, %cst_11 [1] : vector<32x256xf32> to vector<32xf32>
    %110 = vector.shape_cast %109 : vector<32xf32> to vector<32x1xf32>
    %111 = tpu.concatenate %108, %110 in 1 : vector<32x1xf32>, vector<32x1xf32> -> vector<32x2xf32>
    %112 = vector.extract_strided_slice %0 {offsets = [0, 0], sizes = [32, 1], strides = [1, 1]} : vector<32x2xf32> to vector<32x1xf32>
    %113 = vector.broadcast %112 : vector<32x1xf32> to vector<32x2xf32>
    %114 = arith.mulf %113, %111 : vector<32x2xf32>
    %cst_12 = arith.constant dense<0.000000e+00> : vector<2xf32>
    %115 = vector.multi_reduction <add>, %114, %cst_12 [0] : vector<32x2xf32> to vector<2xf32>
    %116 = vector.shape_cast %115 : vector<2xf32> to vector<1x2xf32>
    %117 = vector.extract_strided_slice %0 {offsets = [0, 1], sizes = [32, 1], strides = [1, 1]} : vector<32x2xf32> to vector<32x1xf32>
    %118 = vector.broadcast %117 : vector<32x1xf32> to vector<32x2xf32>
    %119 = arith.mulf %118, %111 : vector<32x2xf32>
    %cst_13 = arith.constant dense<0.000000e+00> : vector<2xf32>
    %120 = vector.multi_reduction <add>, %119, %cst_13 [0] : vector<32x2xf32> to vector<2xf32>
    %121 = vector.shape_cast %120 : vector<2xf32> to vector<1x2xf32>
    %122 = tpu.concatenate %116, %121 in 0 : vector<1x2xf32>, vector<1x2xf32> -> vector<2x2xf32>
    %cst_14 = arith.constant 0.000000e+00 : f32
    %123 = vector.broadcast %cst_14 : f32 to vector<2x2xf32>
    %124 = arith.maximumf %122, %123 : vector<2x2xf32>
    %125 = vector.extract_strided_slice %1 {offsets = [0, 0], sizes = [32, 1], strides = [1, 1]} : vector<32x2xf32> to vector<32x1xf32>
    %126 = vector.extract_strided_slice %124 {offsets = [0, 0], sizes = [1, 2], strides = [1, 1]} : vector<2x2xf32> to vector<1x2xf32>
    %127 = vector.broadcast %125 : vector<32x1xf32> to vector<32x2xf32>
    %128 = vector.broadcast %126 : vector<1x2xf32> to vector<32x2xf32>
    %129 = arith.mulf %127, %128 : vector<32x2xf32>
    %130 = vector.extract_strided_slice %1 {offsets = [0, 1], sizes = [32, 1], strides = [1, 1]} : vector<32x2xf32> to vector<32x1xf32>
    %131 = vector.extract_strided_slice %124 {offsets = [1, 0], sizes = [1, 2], strides = [1, 1]} : vector<2x2xf32> to vector<1x2xf32>
    %132 = vector.broadcast %130 : vector<32x1xf32> to vector<32x2xf32>
    %133 = vector.broadcast %131 : vector<1x2xf32> to vector<32x2xf32>
    %134 = arith.mulf %132, %133 : vector<32x2xf32>
    %135 = arith.addf %129, %134 : vector<32x2xf32>
    %136 = vector.extract_strided_slice %135 {offsets = [0, 0], sizes = [32, 1], strides = [1, 1]} : vector<32x2xf32> to vector<32x1xf32>
    %137 = vector.extract_strided_slice %135 {offsets = [0, 1], sizes = [32, 1], strides = [1, 1]} : vector<32x2xf32> to vector<32x1xf32>
    %138 = arith.addf %136, %137 : vector<32x1xf32>
    %139 = arith.negf %138 : vector<32x1xf32>
    %140 = math.exp %139 : vector<32x1xf32>
    %cst_15 = arith.constant 1.000000e+00 : f32
    %141 = vector.broadcast %cst_15 : f32 to vector<32x1xf32>
    %142 = arith.addf %141, %140 : vector<32x1xf32>
    %143 = arith.divf %141, %142 : vector<32x1xf32>
    %144 = vector.broadcast %143 : vector<32x1xf32> to vector<32x256xf32>
    %145 = arith.mulf %104, %144 : vector<32x256xf32>
    %cst_16 = arith.constant dense<0.000000e+00> : vector<256xf32>
    %146 = vector.multi_reduction <add>, %145, %cst_16 [0] : vector<32x256xf32> to vector<256xf32>
    %147 = vector.shape_cast %146 : vector<256xf32> to vector<1x256xf32>
    %cst_17 = arith.constant 3.200000e+01 : f32
    %148 = vector.broadcast %cst_17 : f32 to vector<1x256xf32>
    %149 = arith.divf %147, %148 : vector<1x256xf32>
    %cst_18 = arith.constant dense<0xFF800000> : vector<256xf32>
    %150 = vector.multi_reduction <maximumf>, %145, %cst_18 [0] : vector<32x256xf32> to vector<256xf32>
    %151 = vector.shape_cast %150 : vector<256xf32> to vector<1x256xf32>
    %152 = vector.extract_strided_slice %149 {offsets = [0, 0], sizes = [1, 16], strides = [1, 1]} : vector<1x256xf32> to vector<1x16xf32>
    %153 = vector.extract_strided_slice %149 {offsets = [0, 16], sizes = [1, 16], strides = [1, 1]} : vector<1x256xf32> to vector<1x16xf32>
    %154 = vector.extract_strided_slice %149 {offsets = [0, 32], sizes = [1, 16], strides = [1, 1]} : vector<1x256xf32> to vector<1x16xf32>
    %155 = vector.extract_strided_slice %149 {offsets = [0, 48], sizes = [1, 16], strides = [1, 1]} : vector<1x256xf32> to vector<1x16xf32>
    %156 = vector.extract_strided_slice %149 {offsets = [0, 64], sizes = [1, 16], strides = [1, 1]} : vector<1x256xf32> to vector<1x16xf32>
    %157 = vector.extract_strided_slice %149 {offsets = [0, 80], sizes = [1, 16], strides = [1, 1]} : vector<1x256xf32> to vector<1x16xf32>
    %158 = vector.extract_strided_slice %149 {offsets = [0, 96], sizes = [1, 16], strides = [1, 1]} : vector<1x256xf32> to vector<1x16xf32>
    %159 = vector.extract_strided_slice %149 {offsets = [0, 112], sizes = [1, 16], strides = [1, 1]} : vector<1x256xf32> to vector<1x16xf32>
    %160 = vector.extract_strided_slice %149 {offsets = [0, 128], sizes = [1, 16], strides = [1, 1]} : vector<1x256xf32> to vector<1x16xf32>
    %161 = vector.extract_strided_slice %149 {offsets = [0, 144], sizes = [1, 16], strides = [1, 1]} : vector<1x256xf32> to vector<1x16xf32>
    %162 = vector.extract_strided_slice %149 {offsets = [0, 160], sizes = [1, 16], strides = [1, 1]} : vector<1x256xf32> to vector<1x16xf32>
    %163 = vector.extract_strided_slice %149 {offsets = [0, 176], sizes = [1, 16], strides = [1, 1]} : vector<1x256xf32> to vector<1x16xf32>
    %164 = vector.extract_strided_slice %149 {offsets = [0, 192], sizes = [1, 16], strides = [1, 1]} : vector<1x256xf32> to vector<1x16xf32>
    %165 = vector.extract_strided_slice %149 {offsets = [0, 208], sizes = [1, 16], strides = [1, 1]} : vector<1x256xf32> to vector<1x16xf32>
    %166 = vector.extract_strided_slice %149 {offsets = [0, 224], sizes = [1, 16], strides = [1, 1]} : vector<1x256xf32> to vector<1x16xf32>
    %167 = vector.extract_strided_slice %149 {offsets = [0, 240], sizes = [1, 16], strides = [1, 1]} : vector<1x256xf32> to vector<1x16xf32>
    %168 = tpu.concatenate %101, %101, %101, %152, %153, %154, %155, %156, %157, %158, %159, %160, %161, %162, %163, %164 in 0 : vector<1x16xf32>, vector<1x16xf32>, vector<1x16xf32>, vector<1x16xf32>, vector<1x16xf32>, vector<1x16xf32>, vector<1x16xf32>, vector<1x16xf32>, vector<1x16xf32>, vector<1x16xf32>, vector<1x16xf32>, vector<1x16xf32>, vector<1x16xf32>, vector<1x16xf32>, vector<1x16xf32>, vector<1x16xf32> -> vector<16x16xf32>
    %169 = tpu.concatenate %165, %166, %167, %101, %101, %101 in 0 : vector<1x16xf32>, vector<1x16xf32>, vector<1x16xf32>, vector<1x16xf32>, vector<1x16xf32>, vector<1x16xf32> -> vector<6x16xf32>
    %170 = tpu.concatenate %168, %169 in 0 : vector<16x16xf32>, vector<6x16xf32> -> vector<22x16xf32>
    %171 = tpu.concatenate %102, %170, %102 in 1 : vector<22x3xf32>, vector<22x16xf32>, vector<22x3xf32> -> vector<22x22xf32>
    %172 = vector.extract_strided_slice %151 {offsets = [0, 0], sizes = [1, 16], strides = [1, 1]} : vector<1x256xf32> to vector<1x16xf32>
    %173 = vector.extract_strided_slice %151 {offsets = [0, 16], sizes = [1, 16], strides = [1, 1]} : vector<1x256xf32> to vector<1x16xf32>
    %174 = vector.extract_strided_slice %151 {offsets = [0, 32], sizes = [1, 16], strides = [1, 1]} : vector<1x256xf32> to vector<1x16xf32>
    %175 = vector.extract_strided_slice %151 {offsets = [0, 48], sizes = [1, 16], strides = [1, 1]} : vector<1x256xf32> to vector<1x16xf32>
    %176 = vector.extract_strided_slice %151 {offsets = [0, 64], sizes = [1, 16], strides = [1, 1]} : vector<1x256xf32> to vector<1x16xf32>
    %177 = vector.extract_strided_slice %151 {offsets = [0, 80], sizes = [1, 16], strides = [1, 1]} : vector<1x256xf32> to vector<1x16xf32>
    %178 = vector.extract_strided_slice %151 {offsets = [0, 96], sizes = [1, 16], strides = [1, 1]} : vector<1x256xf32> to vector<1x16xf32>
    %179 = vector.extract_strided_slice %151 {offsets = [0, 112], sizes = [1, 16], strides = [1, 1]} : vector<1x256xf32> to vector<1x16xf32>
    %180 = vector.extract_strided_slice %151 {offsets = [0, 128], sizes = [1, 16], strides = [1, 1]} : vector<1x256xf32> to vector<1x16xf32>
    %181 = vector.extract_strided_slice %151 {offsets = [0, 144], sizes = [1, 16], strides = [1, 1]} : vector<1x256xf32> to vector<1x16xf32>
    %182 = vector.extract_strided_slice %151 {offsets = [0, 160], sizes = [1, 16], strides = [1, 1]} : vector<1x256xf32> to vector<1x16xf32>
    %183 = vector.extract_strided_slice %151 {offsets = [0, 176], sizes = [1, 16], strides = [1, 1]} : vector<1x256xf32> to vector<1x16xf32>
    %184 = vector.extract_strided_slice %151 {offsets = [0, 192], sizes = [1, 16], strides = [1, 1]} : vector<1x256xf32> to vector<1x16xf32>
    %185 = vector.extract_strided_slice %151 {offsets = [0, 208], sizes = [1, 16], strides = [1, 1]} : vector<1x256xf32> to vector<1x16xf32>
    %186 = vector.extract_strided_slice %151 {offsets = [0, 224], sizes = [1, 16], strides = [1, 1]} : vector<1x256xf32> to vector<1x16xf32>
    %187 = vector.extract_strided_slice %151 {offsets = [0, 240], sizes = [1, 16], strides = [1, 1]} : vector<1x256xf32> to vector<1x16xf32>
    %188 = tpu.concatenate %101, %101, %101, %172, %173, %174, %175, %176, %177, %178, %179, %180, %181, %182, %183, %184 in 0 : vector<1x16xf32>, vector<1x16xf32>, vector<1x16xf32>, vector<1x16xf32>, vector<1x16xf32>, vector<1x16xf32>, vector<1x16xf32>, vector<1x16xf32>, vector<1x16xf32>, vector<1x16xf32>, vector<1x16xf32>, vector<1x16xf32>, vector<1x16xf32>, vector<1x16xf32>, vector<1x16xf32>, vector<1x16xf32> -> vector<16x16xf32>
    %189 = tpu.concatenate %185, %186, %187, %101, %101, %101 in 0 : vector<1x16xf32>, vector<1x16xf32>, vector<1x16xf32>, vector<1x16xf32>, vector<1x16xf32>, vector<1x16xf32> -> vector<6x16xf32>
    %190 = tpu.concatenate %188, %189 in 0 : vector<16x16xf32>, vector<6x16xf32> -> vector<22x16xf32>
    %191 = tpu.concatenate %102, %190, %102 in 1 : vector<22x3xf32>, vector<22x16xf32>, vector<22x3xf32> -> vector<22x22xf32>
    %cst_19 = arith.constant 0.000000e+00 : f32
    %192 = vector.broadcast %cst_19 : f32 to vector<16x16xf32>
    %cst_20 = arith.constant 0.000000e+00 : f32
    %193 = vector.broadcast %cst_20 : f32 to vector<16x16xf32>
    %cst_21 = arith.constant 0.000000e+00 : f32
    %194 = vector.broadcast %cst_21 : f32 to vector<16x16xf32>
    %cst_22 = arith.constant 0.000000e+00 : f32
    %195 = vector.broadcast %cst_22 : f32 to vector<16x16xf32>
    %196 = vector.extract_strided_slice %171 {offsets = [0, 0], sizes = [22, 16], strides = [1, 1]} : vector<22x22xf32> to vector<22x16xf32>
    %197 = vector.extract_strided_slice %171 {offsets = [0, 1], sizes = [22, 16], strides = [1, 1]} : vector<22x22xf32> to vector<22x16xf32>
    %198 = vector.extract_strided_slice %171 {offsets = [0, 2], sizes = [22, 16], strides = [1, 1]} : vector<22x22xf32> to vector<22x16xf32>
    %199 = vector.extract_strided_slice %171 {offsets = [0, 3], sizes = [22, 16], strides = [1, 1]} : vector<22x22xf32> to vector<22x16xf32>
    %200 = vector.extract_strided_slice %171 {offsets = [0, 4], sizes = [22, 16], strides = [1, 1]} : vector<22x22xf32> to vector<22x16xf32>
    %201 = vector.extract_strided_slice %171 {offsets = [0, 5], sizes = [22, 16], strides = [1, 1]} : vector<22x22xf32> to vector<22x16xf32>
    %202 = vector.extract_strided_slice %171 {offsets = [0, 6], sizes = [22, 16], strides = [1, 1]} : vector<22x22xf32> to vector<22x16xf32>
    %203 = vector.extract_strided_slice %196 {offsets = [0, 0], sizes = [16, 16], strides = [1, 1]} : vector<22x16xf32> to vector<16x16xf32>
    %204 = vector.broadcast %2 : f32 to vector<16x16xf32>
    %205 = arith.mulf %204, %203 : vector<16x16xf32>
    %206 = arith.addf %192, %205 : vector<16x16xf32>
    %207 = vector.extract_strided_slice %197 {offsets = [0, 0], sizes = [16, 16], strides = [1, 1]} : vector<22x16xf32> to vector<16x16xf32>
    %208 = vector.broadcast %3 : f32 to vector<16x16xf32>
    %209 = arith.mulf %208, %207 : vector<16x16xf32>
    %210 = arith.addf %193, %209 : vector<16x16xf32>
    %211 = vector.extract_strided_slice %198 {offsets = [0, 0], sizes = [16, 16], strides = [1, 1]} : vector<22x16xf32> to vector<16x16xf32>
    %212 = vector.broadcast %4 : f32 to vector<16x16xf32>
    %213 = arith.mulf %212, %211 : vector<16x16xf32>
    %214 = arith.addf %194, %213 : vector<16x16xf32>
    %215 = vector.extract_strided_slice %199 {offsets = [0, 0], sizes = [16, 16], strides = [1, 1]} : vector<22x16xf32> to vector<16x16xf32>
    %216 = vector.broadcast %5 : f32 to vector<16x16xf32>
    %217 = arith.mulf %216, %215 : vector<16x16xf32>
    %218 = arith.addf %195, %217 : vector<16x16xf32>
    %219 = vector.extract_strided_slice %200 {offsets = [0, 0], sizes = [16, 16], strides = [1, 1]} : vector<22x16xf32> to vector<16x16xf32>
    %220 = vector.broadcast %6 : f32 to vector<16x16xf32>
    %221 = arith.mulf %220, %219 : vector<16x16xf32>
    %222 = arith.addf %206, %221 : vector<16x16xf32>
    %223 = vector.extract_strided_slice %201 {offsets = [0, 0], sizes = [16, 16], strides = [1, 1]} : vector<22x16xf32> to vector<16x16xf32>
    %224 = vector.broadcast %7 : f32 to vector<16x16xf32>
    %225 = arith.mulf %224, %223 : vector<16x16xf32>
    %226 = arith.addf %210, %225 : vector<16x16xf32>
    %227 = vector.extract_strided_slice %202 {offsets = [0, 0], sizes = [16, 16], strides = [1, 1]} : vector<22x16xf32> to vector<16x16xf32>
    %228 = vector.broadcast %8 : f32 to vector<16x16xf32>
    %229 = arith.mulf %228, %227 : vector<16x16xf32>
    %230 = arith.addf %214, %229 : vector<16x16xf32>
    %231 = vector.extract_strided_slice %196 {offsets = [1, 0], sizes = [16, 16], strides = [1, 1]} : vector<22x16xf32> to vector<16x16xf32>
    %232 = vector.broadcast %9 : f32 to vector<16x16xf32>
    %233 = arith.mulf %232, %231 : vector<16x16xf32>
    %234 = arith.addf %218, %233 : vector<16x16xf32>
    %235 = vector.extract_strided_slice %197 {offsets = [1, 0], sizes = [16, 16], strides = [1, 1]} : vector<22x16xf32> to vector<16x16xf32>
    %236 = vector.broadcast %10 : f32 to vector<16x16xf32>
    %237 = arith.mulf %236, %235 : vector<16x16xf32>
    %238 = arith.addf %222, %237 : vector<16x16xf32>
    %239 = vector.extract_strided_slice %198 {offsets = [1, 0], sizes = [16, 16], strides = [1, 1]} : vector<22x16xf32> to vector<16x16xf32>
    %240 = vector.broadcast %11 : f32 to vector<16x16xf32>
    %241 = arith.mulf %240, %239 : vector<16x16xf32>
    %242 = arith.addf %226, %241 : vector<16x16xf32>
    %243 = vector.extract_strided_slice %199 {offsets = [1, 0], sizes = [16, 16], strides = [1, 1]} : vector<22x16xf32> to vector<16x16xf32>
    %244 = vector.broadcast %12 : f32 to vector<16x16xf32>
    %245 = arith.mulf %244, %243 : vector<16x16xf32>
    %246 = arith.addf %230, %245 : vector<16x16xf32>
    %247 = vector.extract_strided_slice %200 {offsets = [1, 0], sizes = [16, 16], strides = [1, 1]} : vector<22x16xf32> to vector<16x16xf32>
    %248 = vector.broadcast %13 : f32 to vector<16x16xf32>
    %249 = arith.mulf %248, %247 : vector<16x16xf32>
    %250 = arith.addf %234, %249 : vector<16x16xf32>
    %251 = vector.extract_strided_slice %201 {offsets = [1, 0], sizes = [16, 16], strides = [1, 1]} : vector<22x16xf32> to vector<16x16xf32>
    %252 = vector.broadcast %14 : f32 to vector<16x16xf32>
    %253 = arith.mulf %252, %251 : vector<16x16xf32>
    %254 = arith.addf %238, %253 : vector<16x16xf32>
    %255 = vector.extract_strided_slice %202 {offsets = [1, 0], sizes = [16, 16], strides = [1, 1]} : vector<22x16xf32> to vector<16x16xf32>
    %256 = vector.broadcast %15 : f32 to vector<16x16xf32>
    %257 = arith.mulf %256, %255 : vector<16x16xf32>
    %258 = arith.addf %242, %257 : vector<16x16xf32>
    %259 = vector.extract_strided_slice %196 {offsets = [2, 0], sizes = [16, 16], strides = [1, 1]} : vector<22x16xf32> to vector<16x16xf32>
    %260 = vector.broadcast %16 : f32 to vector<16x16xf32>
    %261 = arith.mulf %260, %259 : vector<16x16xf32>
    %262 = arith.addf %246, %261 : vector<16x16xf32>
    %263 = vector.extract_strided_slice %197 {offsets = [2, 0], sizes = [16, 16], strides = [1, 1]} : vector<22x16xf32> to vector<16x16xf32>
    %264 = vector.broadcast %17 : f32 to vector<16x16xf32>
    %265 = arith.mulf %264, %263 : vector<16x16xf32>
    %266 = arith.addf %250, %265 : vector<16x16xf32>
    %267 = vector.extract_strided_slice %198 {offsets = [2, 0], sizes = [16, 16], strides = [1, 1]} : vector<22x16xf32> to vector<16x16xf32>
    %268 = vector.broadcast %18 : f32 to vector<16x16xf32>
    %269 = arith.mulf %268, %267 : vector<16x16xf32>
    %270 = arith.addf %254, %269 : vector<16x16xf32>
    %271 = vector.extract_strided_slice %199 {offsets = [2, 0], sizes = [16, 16], strides = [1, 1]} : vector<22x16xf32> to vector<16x16xf32>
    %272 = vector.broadcast %19 : f32 to vector<16x16xf32>
    %273 = arith.mulf %272, %271 : vector<16x16xf32>
    %274 = arith.addf %258, %273 : vector<16x16xf32>
    %275 = vector.extract_strided_slice %200 {offsets = [2, 0], sizes = [16, 16], strides = [1, 1]} : vector<22x16xf32> to vector<16x16xf32>
    %276 = vector.broadcast %20 : f32 to vector<16x16xf32>
    %277 = arith.mulf %276, %275 : vector<16x16xf32>
    %278 = arith.addf %262, %277 : vector<16x16xf32>
    %279 = vector.extract_strided_slice %201 {offsets = [2, 0], sizes = [16, 16], strides = [1, 1]} : vector<22x16xf32> to vector<16x16xf32>
    %280 = vector.broadcast %21 : f32 to vector<16x16xf32>
    %281 = arith.mulf %280, %279 : vector<16x16xf32>
    %282 = arith.addf %266, %281 : vector<16x16xf32>
    %283 = vector.extract_strided_slice %202 {offsets = [2, 0], sizes = [16, 16], strides = [1, 1]} : vector<22x16xf32> to vector<16x16xf32>
    %284 = vector.broadcast %22 : f32 to vector<16x16xf32>
    %285 = arith.mulf %284, %283 : vector<16x16xf32>
    %286 = arith.addf %270, %285 : vector<16x16xf32>
    %287 = vector.extract_strided_slice %196 {offsets = [3, 0], sizes = [16, 16], strides = [1, 1]} : vector<22x16xf32> to vector<16x16xf32>
    %288 = vector.broadcast %23 : f32 to vector<16x16xf32>
    %289 = arith.mulf %288, %287 : vector<16x16xf32>
    %290 = arith.addf %274, %289 : vector<16x16xf32>
    %291 = vector.extract_strided_slice %197 {offsets = [3, 0], sizes = [16, 16], strides = [1, 1]} : vector<22x16xf32> to vector<16x16xf32>
    %292 = vector.broadcast %24 : f32 to vector<16x16xf32>
    %293 = arith.mulf %292, %291 : vector<16x16xf32>
    %294 = arith.addf %278, %293 : vector<16x16xf32>
    %295 = vector.extract_strided_slice %198 {offsets = [3, 0], sizes = [16, 16], strides = [1, 1]} : vector<22x16xf32> to vector<16x16xf32>
    %296 = vector.broadcast %25 : f32 to vector<16x16xf32>
    %297 = arith.mulf %296, %295 : vector<16x16xf32>
    %298 = arith.addf %282, %297 : vector<16x16xf32>
    %299 = vector.extract_strided_slice %199 {offsets = [3, 0], sizes = [16, 16], strides = [1, 1]} : vector<22x16xf32> to vector<16x16xf32>
    %300 = vector.broadcast %26 : f32 to vector<16x16xf32>
    %301 = arith.mulf %300, %299 : vector<16x16xf32>
    %302 = arith.addf %286, %301 : vector<16x16xf32>
    %303 = vector.extract_strided_slice %200 {offsets = [3, 0], sizes = [16, 16], strides = [1, 1]} : vector<22x16xf32> to vector<16x16xf32>
    %304 = vector.broadcast %27 : f32 to vector<16x16xf32>
    %305 = arith.mulf %304, %303 : vector<16x16xf32>
    %306 = arith.addf %290, %305 : vector<16x16xf32>
    %307 = vector.extract_strided_slice %201 {offsets = [3, 0], sizes = [16, 16], strides = [1, 1]} : vector<22x16xf32> to vector<16x16xf32>
    %308 = vector.broadcast %28 : f32 to vector<16x16xf32>
    %309 = arith.mulf %308, %307 : vector<16x16xf32>
    %310 = arith.addf %294, %309 : vector<16x16xf32>
    %311 = vector.extract_strided_slice %202 {offsets = [3, 0], sizes = [16, 16], strides = [1, 1]} : vector<22x16xf32> to vector<16x16xf32>
    %312 = vector.broadcast %29 : f32 to vector<16x16xf32>
    %313 = arith.mulf %312, %311 : vector<16x16xf32>
    %314 = arith.addf %298, %313 : vector<16x16xf32>
    %315 = vector.extract_strided_slice %196 {offsets = [4, 0], sizes = [16, 16], strides = [1, 1]} : vector<22x16xf32> to vector<16x16xf32>
    %316 = vector.broadcast %30 : f32 to vector<16x16xf32>
    %317 = arith.mulf %316, %315 : vector<16x16xf32>
    %318 = arith.addf %302, %317 : vector<16x16xf32>
    %319 = vector.extract_strided_slice %197 {offsets = [4, 0], sizes = [16, 16], strides = [1, 1]} : vector<22x16xf32> to vector<16x16xf32>
    %320 = vector.broadcast %31 : f32 to vector<16x16xf32>
    %321 = arith.mulf %320, %319 : vector<16x16xf32>
    %322 = arith.addf %306, %321 : vector<16x16xf32>
    %323 = vector.extract_strided_slice %198 {offsets = [4, 0], sizes = [16, 16], strides = [1, 1]} : vector<22x16xf32> to vector<16x16xf32>
    %324 = vector.broadcast %32 : f32 to vector<16x16xf32>
    %325 = arith.mulf %324, %323 : vector<16x16xf32>
    %326 = arith.addf %310, %325 : vector<16x16xf32>
    %327 = vector.extract_strided_slice %199 {offsets = [4, 0], sizes = [16, 16], strides = [1, 1]} : vector<22x16xf32> to vector<16x16xf32>
    %328 = vector.broadcast %33 : f32 to vector<16x16xf32>
    %329 = arith.mulf %328, %327 : vector<16x16xf32>
    %330 = arith.addf %314, %329 : vector<16x16xf32>
    %331 = vector.extract_strided_slice %200 {offsets = [4, 0], sizes = [16, 16], strides = [1, 1]} : vector<22x16xf32> to vector<16x16xf32>
    %332 = vector.broadcast %34 : f32 to vector<16x16xf32>
    %333 = arith.mulf %332, %331 : vector<16x16xf32>
    %334 = arith.addf %318, %333 : vector<16x16xf32>
    %335 = vector.extract_strided_slice %201 {offsets = [4, 0], sizes = [16, 16], strides = [1, 1]} : vector<22x16xf32> to vector<16x16xf32>
    %336 = vector.broadcast %35 : f32 to vector<16x16xf32>
    %337 = arith.mulf %336, %335 : vector<16x16xf32>
    %338 = arith.addf %322, %337 : vector<16x16xf32>
    %339 = vector.extract_strided_slice %202 {offsets = [4, 0], sizes = [16, 16], strides = [1, 1]} : vector<22x16xf32> to vector<16x16xf32>
    %340 = vector.broadcast %36 : f32 to vector<16x16xf32>
    %341 = arith.mulf %340, %339 : vector<16x16xf32>
    %342 = arith.addf %326, %341 : vector<16x16xf32>
    %343 = vector.extract_strided_slice %196 {offsets = [5, 0], sizes = [16, 16], strides = [1, 1]} : vector<22x16xf32> to vector<16x16xf32>
    %344 = vector.broadcast %37 : f32 to vector<16x16xf32>
    %345 = arith.mulf %344, %343 : vector<16x16xf32>
    %346 = arith.addf %330, %345 : vector<16x16xf32>
    %347 = vector.extract_strided_slice %197 {offsets = [5, 0], sizes = [16, 16], strides = [1, 1]} : vector<22x16xf32> to vector<16x16xf32>
    %348 = vector.broadcast %38 : f32 to vector<16x16xf32>
    %349 = arith.mulf %348, %347 : vector<16x16xf32>
    %350 = arith.addf %334, %349 : vector<16x16xf32>
    %351 = vector.extract_strided_slice %198 {offsets = [5, 0], sizes = [16, 16], strides = [1, 1]} : vector<22x16xf32> to vector<16x16xf32>
    %352 = vector.broadcast %39 : f32 to vector<16x16xf32>
    %353 = arith.mulf %352, %351 : vector<16x16xf32>
    %354 = arith.addf %338, %353 : vector<16x16xf32>
    %355 = vector.extract_strided_slice %199 {offsets = [5, 0], sizes = [16, 16], strides = [1, 1]} : vector<22x16xf32> to vector<16x16xf32>
    %356 = vector.broadcast %40 : f32 to vector<16x16xf32>
    %357 = arith.mulf %356, %355 : vector<16x16xf32>
    %358 = arith.addf %342, %357 : vector<16x16xf32>
    %359 = vector.extract_strided_slice %200 {offsets = [5, 0], sizes = [16, 16], strides = [1, 1]} : vector<22x16xf32> to vector<16x16xf32>
    %360 = vector.broadcast %41 : f32 to vector<16x16xf32>
    %361 = arith.mulf %360, %359 : vector<16x16xf32>
    %362 = arith.addf %346, %361 : vector<16x16xf32>
    %363 = vector.extract_strided_slice %201 {offsets = [5, 0], sizes = [16, 16], strides = [1, 1]} : vector<22x16xf32> to vector<16x16xf32>
    %364 = vector.broadcast %42 : f32 to vector<16x16xf32>
    %365 = arith.mulf %364, %363 : vector<16x16xf32>
    %366 = arith.addf %350, %365 : vector<16x16xf32>
    %367 = vector.extract_strided_slice %202 {offsets = [5, 0], sizes = [16, 16], strides = [1, 1]} : vector<22x16xf32> to vector<16x16xf32>
    %368 = vector.broadcast %43 : f32 to vector<16x16xf32>
    %369 = arith.mulf %368, %367 : vector<16x16xf32>
    %370 = arith.addf %354, %369 : vector<16x16xf32>
    %371 = vector.extract_strided_slice %196 {offsets = [6, 0], sizes = [16, 16], strides = [1, 1]} : vector<22x16xf32> to vector<16x16xf32>
    %372 = vector.broadcast %44 : f32 to vector<16x16xf32>
    %373 = arith.mulf %372, %371 : vector<16x16xf32>
    %374 = arith.addf %358, %373 : vector<16x16xf32>
    %375 = vector.extract_strided_slice %197 {offsets = [6, 0], sizes = [16, 16], strides = [1, 1]} : vector<22x16xf32> to vector<16x16xf32>
    %376 = vector.broadcast %45 : f32 to vector<16x16xf32>
    %377 = arith.mulf %376, %375 : vector<16x16xf32>
    %378 = arith.addf %362, %377 : vector<16x16xf32>
    %379 = vector.extract_strided_slice %198 {offsets = [6, 0], sizes = [16, 16], strides = [1, 1]} : vector<22x16xf32> to vector<16x16xf32>
    %380 = vector.broadcast %46 : f32 to vector<16x16xf32>
    %381 = arith.mulf %380, %379 : vector<16x16xf32>
    %382 = arith.addf %366, %381 : vector<16x16xf32>
    %383 = vector.extract_strided_slice %199 {offsets = [6, 0], sizes = [16, 16], strides = [1, 1]} : vector<22x16xf32> to vector<16x16xf32>
    %384 = vector.broadcast %47 : f32 to vector<16x16xf32>
    %385 = arith.mulf %384, %383 : vector<16x16xf32>
    %386 = arith.addf %370, %385 : vector<16x16xf32>
    %387 = vector.extract_strided_slice %200 {offsets = [6, 0], sizes = [16, 16], strides = [1, 1]} : vector<22x16xf32> to vector<16x16xf32>
    %388 = vector.broadcast %48 : f32 to vector<16x16xf32>
    %389 = arith.mulf %388, %387 : vector<16x16xf32>
    %390 = arith.addf %374, %389 : vector<16x16xf32>
    %391 = vector.extract_strided_slice %201 {offsets = [6, 0], sizes = [16, 16], strides = [1, 1]} : vector<22x16xf32> to vector<16x16xf32>
    %392 = vector.broadcast %49 : f32 to vector<16x16xf32>
    %393 = arith.mulf %392, %391 : vector<16x16xf32>
    %394 = arith.addf %378, %393 : vector<16x16xf32>
    %395 = vector.extract_strided_slice %202 {offsets = [6, 0], sizes = [16, 16], strides = [1, 1]} : vector<22x16xf32> to vector<16x16xf32>
    %396 = vector.broadcast %50 : f32 to vector<16x16xf32>
    %397 = arith.mulf %396, %395 : vector<16x16xf32>
    %398 = arith.addf %382, %397 : vector<16x16xf32>
    %399 = vector.extract_strided_slice %191 {offsets = [0, 0], sizes = [22, 16], strides = [1, 1]} : vector<22x22xf32> to vector<22x16xf32>
    %400 = vector.extract_strided_slice %191 {offsets = [0, 1], sizes = [22, 16], strides = [1, 1]} : vector<22x22xf32> to vector<22x16xf32>
    %401 = vector.extract_strided_slice %191 {offsets = [0, 2], sizes = [22, 16], strides = [1, 1]} : vector<22x22xf32> to vector<22x16xf32>
    %402 = vector.extract_strided_slice %191 {offsets = [0, 3], sizes = [22, 16], strides = [1, 1]} : vector<22x22xf32> to vector<22x16xf32>
    %403 = vector.extract_strided_slice %191 {offsets = [0, 4], sizes = [22, 16], strides = [1, 1]} : vector<22x22xf32> to vector<22x16xf32>
    %404 = vector.extract_strided_slice %191 {offsets = [0, 5], sizes = [22, 16], strides = [1, 1]} : vector<22x22xf32> to vector<22x16xf32>
    %405 = vector.extract_strided_slice %191 {offsets = [0, 6], sizes = [22, 16], strides = [1, 1]} : vector<22x22xf32> to vector<22x16xf32>
    %406 = vector.extract_strided_slice %399 {offsets = [0, 0], sizes = [16, 16], strides = [1, 1]} : vector<22x16xf32> to vector<16x16xf32>
    %407 = vector.broadcast %51 : f32 to vector<16x16xf32>
    %408 = arith.mulf %407, %406 : vector<16x16xf32>
    %409 = arith.addf %386, %408 : vector<16x16xf32>
    %410 = vector.extract_strided_slice %400 {offsets = [0, 0], sizes = [16, 16], strides = [1, 1]} : vector<22x16xf32> to vector<16x16xf32>
    %411 = vector.broadcast %52 : f32 to vector<16x16xf32>
    %412 = arith.mulf %411, %410 : vector<16x16xf32>
    %413 = arith.addf %390, %412 : vector<16x16xf32>
    %414 = vector.extract_strided_slice %401 {offsets = [0, 0], sizes = [16, 16], strides = [1, 1]} : vector<22x16xf32> to vector<16x16xf32>
    %415 = vector.broadcast %53 : f32 to vector<16x16xf32>
    %416 = arith.mulf %415, %414 : vector<16x16xf32>
    %417 = arith.addf %394, %416 : vector<16x16xf32>
    %418 = vector.extract_strided_slice %402 {offsets = [0, 0], sizes = [16, 16], strides = [1, 1]} : vector<22x16xf32> to vector<16x16xf32>
    %419 = vector.broadcast %54 : f32 to vector<16x16xf32>
    %420 = arith.mulf %419, %418 : vector<16x16xf32>
    %421 = arith.addf %398, %420 : vector<16x16xf32>
    %422 = vector.extract_strided_slice %403 {offsets = [0, 0], sizes = [16, 16], strides = [1, 1]} : vector<22x16xf32> to vector<16x16xf32>
    %423 = vector.broadcast %55 : f32 to vector<16x16xf32>
    %424 = arith.mulf %423, %422 : vector<16x16xf32>
    %425 = arith.addf %409, %424 : vector<16x16xf32>
    %426 = vector.extract_strided_slice %404 {offsets = [0, 0], sizes = [16, 16], strides = [1, 1]} : vector<22x16xf32> to vector<16x16xf32>
    %427 = vector.broadcast %56 : f32 to vector<16x16xf32>
    %428 = arith.mulf %427, %426 : vector<16x16xf32>
    %429 = arith.addf %413, %428 : vector<16x16xf32>
    %430 = vector.extract_strided_slice %405 {offsets = [0, 0], sizes = [16, 16], strides = [1, 1]} : vector<22x16xf32> to vector<16x16xf32>
    %431 = vector.broadcast %57 : f32 to vector<16x16xf32>
    %432 = arith.mulf %431, %430 : vector<16x16xf32>
    %433 = arith.addf %417, %432 : vector<16x16xf32>
    %434 = vector.extract_strided_slice %399 {offsets = [1, 0], sizes = [16, 16], strides = [1, 1]} : vector<22x16xf32> to vector<16x16xf32>
    %435 = vector.broadcast %58 : f32 to vector<16x16xf32>
    %436 = arith.mulf %435, %434 : vector<16x16xf32>
    %437 = arith.addf %421, %436 : vector<16x16xf32>
    %438 = vector.extract_strided_slice %400 {offsets = [1, 0], sizes = [16, 16], strides = [1, 1]} : vector<22x16xf32> to vector<16x16xf32>
    %439 = vector.broadcast %59 : f32 to vector<16x16xf32>
    %440 = arith.mulf %439, %438 : vector<16x16xf32>
    %441 = arith.addf %425, %440 : vector<16x16xf32>
    %442 = vector.extract_strided_slice %401 {offsets = [1, 0], sizes = [16, 16], strides = [1, 1]} : vector<22x16xf32> to vector<16x16xf32>
    %443 = vector.broadcast %60 : f32 to vector<16x16xf32>
    %444 = arith.mulf %443, %442 : vector<16x16xf32>
    %445 = arith.addf %429, %444 : vector<16x16xf32>
    %446 = vector.extract_strided_slice %402 {offsets = [1, 0], sizes = [16, 16], strides = [1, 1]} : vector<22x16xf32> to vector<16x16xf32>
    %447 = vector.broadcast %61 : f32 to vector<16x16xf32>
    %448 = arith.mulf %447, %446 : vector<16x16xf32>
    %449 = arith.addf %433, %448 : vector<16x16xf32>
    %450 = vector.extract_strided_slice %403 {offsets = [1, 0], sizes = [16, 16], strides = [1, 1]} : vector<22x16xf32> to vector<16x16xf32>
    %451 = vector.broadcast %62 : f32 to vector<16x16xf32>
    %452 = arith.mulf %451, %450 : vector<16x16xf32>
    %453 = arith.addf %437, %452 : vector<16x16xf32>
    %454 = vector.extract_strided_slice %404 {offsets = [1, 0], sizes = [16, 16], strides = [1, 1]} : vector<22x16xf32> to vector<16x16xf32>
    %455 = vector.broadcast %63 : f32 to vector<16x16xf32>
    %456 = arith.mulf %455, %454 : vector<16x16xf32>
    %457 = arith.addf %441, %456 : vector<16x16xf32>
    %458 = vector.extract_strided_slice %405 {offsets = [1, 0], sizes = [16, 16], strides = [1, 1]} : vector<22x16xf32> to vector<16x16xf32>
    %459 = vector.broadcast %64 : f32 to vector<16x16xf32>
    %460 = arith.mulf %459, %458 : vector<16x16xf32>
    %461 = arith.addf %445, %460 : vector<16x16xf32>
    %462 = vector.extract_strided_slice %399 {offsets = [2, 0], sizes = [16, 16], strides = [1, 1]} : vector<22x16xf32> to vector<16x16xf32>
    %463 = vector.broadcast %65 : f32 to vector<16x16xf32>
    %464 = arith.mulf %463, %462 : vector<16x16xf32>
    %465 = arith.addf %449, %464 : vector<16x16xf32>
    %466 = vector.extract_strided_slice %400 {offsets = [2, 0], sizes = [16, 16], strides = [1, 1]} : vector<22x16xf32> to vector<16x16xf32>
    %467 = vector.broadcast %66 : f32 to vector<16x16xf32>
    %468 = arith.mulf %467, %466 : vector<16x16xf32>
    %469 = arith.addf %453, %468 : vector<16x16xf32>
    %470 = vector.extract_strided_slice %401 {offsets = [2, 0], sizes = [16, 16], strides = [1, 1]} : vector<22x16xf32> to vector<16x16xf32>
    %471 = vector.broadcast %67 : f32 to vector<16x16xf32>
    %472 = arith.mulf %471, %470 : vector<16x16xf32>
    %473 = arith.addf %457, %472 : vector<16x16xf32>
    %474 = vector.extract_strided_slice %402 {offsets = [2, 0], sizes = [16, 16], strides = [1, 1]} : vector<22x16xf32> to vector<16x16xf32>
    %475 = vector.broadcast %68 : f32 to vector<16x16xf32>
    %476 = arith.mulf %475, %474 : vector<16x16xf32>
    %477 = arith.addf %461, %476 : vector<16x16xf32>
    %478 = vector.extract_strided_slice %403 {offsets = [2, 0], sizes = [16, 16], strides = [1, 1]} : vector<22x16xf32> to vector<16x16xf32>
    %479 = vector.broadcast %69 : f32 to vector<16x16xf32>
    %480 = arith.mulf %479, %478 : vector<16x16xf32>
    %481 = arith.addf %465, %480 : vector<16x16xf32>
    %482 = vector.extract_strided_slice %404 {offsets = [2, 0], sizes = [16, 16], strides = [1, 1]} : vector<22x16xf32> to vector<16x16xf32>
    %483 = vector.broadcast %70 : f32 to vector<16x16xf32>
    %484 = arith.mulf %483, %482 : vector<16x16xf32>
    %485 = arith.addf %469, %484 : vector<16x16xf32>
    %486 = vector.extract_strided_slice %405 {offsets = [2, 0], sizes = [16, 16], strides = [1, 1]} : vector<22x16xf32> to vector<16x16xf32>
    %487 = vector.broadcast %71 : f32 to vector<16x16xf32>
    %488 = arith.mulf %487, %486 : vector<16x16xf32>
    %489 = arith.addf %473, %488 : vector<16x16xf32>
    %490 = vector.extract_strided_slice %399 {offsets = [3, 0], sizes = [16, 16], strides = [1, 1]} : vector<22x16xf32> to vector<16x16xf32>
    %491 = vector.broadcast %72 : f32 to vector<16x16xf32>
    %492 = arith.mulf %491, %490 : vector<16x16xf32>
    %493 = arith.addf %477, %492 : vector<16x16xf32>
    %494 = vector.extract_strided_slice %400 {offsets = [3, 0], sizes = [16, 16], strides = [1, 1]} : vector<22x16xf32> to vector<16x16xf32>
    %495 = vector.broadcast %73 : f32 to vector<16x16xf32>
    %496 = arith.mulf %495, %494 : vector<16x16xf32>
    %497 = arith.addf %481, %496 : vector<16x16xf32>
    %498 = vector.extract_strided_slice %401 {offsets = [3, 0], sizes = [16, 16], strides = [1, 1]} : vector<22x16xf32> to vector<16x16xf32>
    %499 = vector.broadcast %74 : f32 to vector<16x16xf32>
    %500 = arith.mulf %499, %498 : vector<16x16xf32>
    %501 = arith.addf %485, %500 : vector<16x16xf32>
    %502 = vector.extract_strided_slice %402 {offsets = [3, 0], sizes = [16, 16], strides = [1, 1]} : vector<22x16xf32> to vector<16x16xf32>
    %503 = vector.broadcast %75 : f32 to vector<16x16xf32>
    %504 = arith.mulf %503, %502 : vector<16x16xf32>
    %505 = arith.addf %489, %504 : vector<16x16xf32>
    %506 = vector.extract_strided_slice %403 {offsets = [3, 0], sizes = [16, 16], strides = [1, 1]} : vector<22x16xf32> to vector<16x16xf32>
    %507 = vector.broadcast %76 : f32 to vector<16x16xf32>
    %508 = arith.mulf %507, %506 : vector<16x16xf32>
    %509 = arith.addf %493, %508 : vector<16x16xf32>
    %510 = vector.extract_strided_slice %404 {offsets = [3, 0], sizes = [16, 16], strides = [1, 1]} : vector<22x16xf32> to vector<16x16xf32>
    %511 = vector.broadcast %77 : f32 to vector<16x16xf32>
    %512 = arith.mulf %511, %510 : vector<16x16xf32>
    %513 = arith.addf %497, %512 : vector<16x16xf32>
    %514 = vector.extract_strided_slice %405 {offsets = [3, 0], sizes = [16, 16], strides = [1, 1]} : vector<22x16xf32> to vector<16x16xf32>
    %515 = vector.broadcast %78 : f32 to vector<16x16xf32>
    %516 = arith.mulf %515, %514 : vector<16x16xf32>
    %517 = arith.addf %501, %516 : vector<16x16xf32>
    %518 = vector.extract_strided_slice %399 {offsets = [4, 0], sizes = [16, 16], strides = [1, 1]} : vector<22x16xf32> to vector<16x16xf32>
    %519 = vector.broadcast %79 : f32 to vector<16x16xf32>
    %520 = arith.mulf %519, %518 : vector<16x16xf32>
    %521 = arith.addf %505, %520 : vector<16x16xf32>
    %522 = vector.extract_strided_slice %400 {offsets = [4, 0], sizes = [16, 16], strides = [1, 1]} : vector<22x16xf32> to vector<16x16xf32>
    %523 = vector.broadcast %80 : f32 to vector<16x16xf32>
    %524 = arith.mulf %523, %522 : vector<16x16xf32>
    %525 = arith.addf %509, %524 : vector<16x16xf32>
    %526 = vector.extract_strided_slice %401 {offsets = [4, 0], sizes = [16, 16], strides = [1, 1]} : vector<22x16xf32> to vector<16x16xf32>
    %527 = vector.broadcast %81 : f32 to vector<16x16xf32>
    %528 = arith.mulf %527, %526 : vector<16x16xf32>
    %529 = arith.addf %513, %528 : vector<16x16xf32>
    %530 = vector.extract_strided_slice %402 {offsets = [4, 0], sizes = [16, 16], strides = [1, 1]} : vector<22x16xf32> to vector<16x16xf32>
    %531 = vector.broadcast %82 : f32 to vector<16x16xf32>
    %532 = arith.mulf %531, %530 : vector<16x16xf32>
    %533 = arith.addf %517, %532 : vector<16x16xf32>
    %534 = vector.extract_strided_slice %403 {offsets = [4, 0], sizes = [16, 16], strides = [1, 1]} : vector<22x16xf32> to vector<16x16xf32>
    %535 = vector.broadcast %83 : f32 to vector<16x16xf32>
    %536 = arith.mulf %535, %534 : vector<16x16xf32>
    %537 = arith.addf %521, %536 : vector<16x16xf32>
    %538 = vector.extract_strided_slice %404 {offsets = [4, 0], sizes = [16, 16], strides = [1, 1]} : vector<22x16xf32> to vector<16x16xf32>
    %539 = vector.broadcast %84 : f32 to vector<16x16xf32>
    %540 = arith.mulf %539, %538 : vector<16x16xf32>
    %541 = arith.addf %525, %540 : vector<16x16xf32>
    %542 = vector.extract_strided_slice %405 {offsets = [4, 0], sizes = [16, 16], strides = [1, 1]} : vector<22x16xf32> to vector<16x16xf32>
    %543 = vector.broadcast %85 : f32 to vector<16x16xf32>
    %544 = arith.mulf %543, %542 : vector<16x16xf32>
    %545 = arith.addf %529, %544 : vector<16x16xf32>
    %546 = vector.extract_strided_slice %399 {offsets = [5, 0], sizes = [16, 16], strides = [1, 1]} : vector<22x16xf32> to vector<16x16xf32>
    %547 = vector.broadcast %86 : f32 to vector<16x16xf32>
    %548 = arith.mulf %547, %546 : vector<16x16xf32>
    %549 = arith.addf %533, %548 : vector<16x16xf32>
    %550 = vector.extract_strided_slice %400 {offsets = [5, 0], sizes = [16, 16], strides = [1, 1]} : vector<22x16xf32> to vector<16x16xf32>
    %551 = vector.broadcast %87 : f32 to vector<16x16xf32>
    %552 = arith.mulf %551, %550 : vector<16x16xf32>
    %553 = arith.addf %537, %552 : vector<16x16xf32>
    %554 = vector.extract_strided_slice %401 {offsets = [5, 0], sizes = [16, 16], strides = [1, 1]} : vector<22x16xf32> to vector<16x16xf32>
    %555 = vector.broadcast %88 : f32 to vector<16x16xf32>
    %556 = arith.mulf %555, %554 : vector<16x16xf32>
    %557 = arith.addf %541, %556 : vector<16x16xf32>
    %558 = vector.extract_strided_slice %402 {offsets = [5, 0], sizes = [16, 16], strides = [1, 1]} : vector<22x16xf32> to vector<16x16xf32>
    %559 = vector.broadcast %89 : f32 to vector<16x16xf32>
    %560 = arith.mulf %559, %558 : vector<16x16xf32>
    %561 = arith.addf %545, %560 : vector<16x16xf32>
    %562 = vector.extract_strided_slice %403 {offsets = [5, 0], sizes = [16, 16], strides = [1, 1]} : vector<22x16xf32> to vector<16x16xf32>
    %563 = vector.broadcast %90 : f32 to vector<16x16xf32>
    %564 = arith.mulf %563, %562 : vector<16x16xf32>
    %565 = arith.addf %549, %564 : vector<16x16xf32>
    %566 = vector.extract_strided_slice %404 {offsets = [5, 0], sizes = [16, 16], strides = [1, 1]} : vector<22x16xf32> to vector<16x16xf32>
    %567 = vector.broadcast %91 : f32 to vector<16x16xf32>
    %568 = arith.mulf %567, %566 : vector<16x16xf32>
    %569 = arith.addf %553, %568 : vector<16x16xf32>
    %570 = vector.extract_strided_slice %405 {offsets = [5, 0], sizes = [16, 16], strides = [1, 1]} : vector<22x16xf32> to vector<16x16xf32>
    %571 = vector.broadcast %92 : f32 to vector<16x16xf32>
    %572 = arith.mulf %571, %570 : vector<16x16xf32>
    %573 = arith.addf %557, %572 : vector<16x16xf32>
    %574 = vector.extract_strided_slice %399 {offsets = [6, 0], sizes = [16, 16], strides = [1, 1]} : vector<22x16xf32> to vector<16x16xf32>
    %575 = vector.broadcast %93 : f32 to vector<16x16xf32>
    %576 = arith.mulf %575, %574 : vector<16x16xf32>
    %577 = arith.addf %561, %576 : vector<16x16xf32>
    %578 = vector.extract_strided_slice %400 {offsets = [6, 0], sizes = [16, 16], strides = [1, 1]} : vector<22x16xf32> to vector<16x16xf32>
    %579 = vector.broadcast %94 : f32 to vector<16x16xf32>
    %580 = arith.mulf %579, %578 : vector<16x16xf32>
    %581 = arith.addf %565, %580 : vector<16x16xf32>
    %582 = vector.extract_strided_slice %401 {offsets = [6, 0], sizes = [16, 16], strides = [1, 1]} : vector<22x16xf32> to vector<16x16xf32>
    %583 = vector.broadcast %95 : f32 to vector<16x16xf32>
    %584 = arith.mulf %583, %582 : vector<16x16xf32>
    %585 = arith.addf %569, %584 : vector<16x16xf32>
    %586 = vector.extract_strided_slice %402 {offsets = [6, 0], sizes = [16, 16], strides = [1, 1]} : vector<22x16xf32> to vector<16x16xf32>
    %587 = vector.broadcast %96 : f32 to vector<16x16xf32>
    %588 = arith.mulf %587, %586 : vector<16x16xf32>
    %589 = arith.addf %573, %588 : vector<16x16xf32>
    %590 = vector.extract_strided_slice %403 {offsets = [6, 0], sizes = [16, 16], strides = [1, 1]} : vector<22x16xf32> to vector<16x16xf32>
    %591 = vector.broadcast %97 : f32 to vector<16x16xf32>
    %592 = arith.mulf %591, %590 : vector<16x16xf32>
    %593 = arith.addf %577, %592 : vector<16x16xf32>
    %594 = vector.extract_strided_slice %404 {offsets = [6, 0], sizes = [16, 16], strides = [1, 1]} : vector<22x16xf32> to vector<16x16xf32>
    %595 = vector.broadcast %98 : f32 to vector<16x16xf32>
    %596 = arith.mulf %595, %594 : vector<16x16xf32>
    %597 = arith.addf %581, %596 : vector<16x16xf32>
    %598 = vector.extract_strided_slice %405 {offsets = [6, 0], sizes = [16, 16], strides = [1, 1]} : vector<22x16xf32> to vector<16x16xf32>
    %599 = vector.broadcast %99 : f32 to vector<16x16xf32>
    %600 = arith.mulf %599, %598 : vector<16x16xf32>
    %601 = arith.addf %585, %600 : vector<16x16xf32>
    %602 = arith.addf %597, %601 : vector<16x16xf32>
    %603 = arith.addf %589, %593 : vector<16x16xf32>
    %604 = arith.addf %602, %603 : vector<16x16xf32>
    %605 = vector.broadcast %100 : f32 to vector<16x16xf32>
    %606 = arith.addf %604, %605 : vector<16x16xf32>
    %607 = arith.negf %606 : vector<16x16xf32>
    %608 = math.exp %607 : vector<16x16xf32>
    %cst_23 = arith.constant 1.000000e+00 : f32
    %609 = vector.broadcast %cst_23 : f32 to vector<16x16xf32>
    %610 = arith.addf %609, %608 : vector<16x16xf32>
    %611 = arith.divf %609, %610 : vector<16x16xf32>
    %612 = vector.extract_strided_slice %611 {offsets = [0, 0], sizes = [1, 16], strides = [1, 1]} : vector<16x16xf32> to vector<1x16xf32>
    %613 = vector.extract_strided_slice %611 {offsets = [1, 0], sizes = [1, 16], strides = [1, 1]} : vector<16x16xf32> to vector<1x16xf32>
    %614 = vector.extract_strided_slice %611 {offsets = [2, 0], sizes = [1, 16], strides = [1, 1]} : vector<16x16xf32> to vector<1x16xf32>
    %615 = vector.extract_strided_slice %611 {offsets = [3, 0], sizes = [1, 16], strides = [1, 1]} : vector<16x16xf32> to vector<1x16xf32>
    %616 = vector.extract_strided_slice %611 {offsets = [4, 0], sizes = [1, 16], strides = [1, 1]} : vector<16x16xf32> to vector<1x16xf32>
    %617 = vector.extract_strided_slice %611 {offsets = [5, 0], sizes = [1, 16], strides = [1, 1]} : vector<16x16xf32> to vector<1x16xf32>
    %618 = vector.extract_strided_slice %611 {offsets = [6, 0], sizes = [1, 16], strides = [1, 1]} : vector<16x16xf32> to vector<1x16xf32>
    %619 = vector.extract_strided_slice %611 {offsets = [7, 0], sizes = [1, 16], strides = [1, 1]} : vector<16x16xf32> to vector<1x16xf32>
    %620 = vector.extract_strided_slice %611 {offsets = [8, 0], sizes = [1, 16], strides = [1, 1]} : vector<16x16xf32> to vector<1x16xf32>
    %621 = vector.extract_strided_slice %611 {offsets = [9, 0], sizes = [1, 16], strides = [1, 1]} : vector<16x16xf32> to vector<1x16xf32>
    %622 = vector.extract_strided_slice %611 {offsets = [10, 0], sizes = [1, 16], strides = [1, 1]} : vector<16x16xf32> to vector<1x16xf32>
    %623 = vector.extract_strided_slice %611 {offsets = [11, 0], sizes = [1, 16], strides = [1, 1]} : vector<16x16xf32> to vector<1x16xf32>
    %624 = vector.extract_strided_slice %611 {offsets = [12, 0], sizes = [1, 16], strides = [1, 1]} : vector<16x16xf32> to vector<1x16xf32>
    %625 = vector.extract_strided_slice %611 {offsets = [13, 0], sizes = [1, 16], strides = [1, 1]} : vector<16x16xf32> to vector<1x16xf32>
    %626 = vector.extract_strided_slice %611 {offsets = [14, 0], sizes = [1, 16], strides = [1, 1]} : vector<16x16xf32> to vector<1x16xf32>
    %627 = vector.extract_strided_slice %611 {offsets = [15, 0], sizes = [1, 16], strides = [1, 1]} : vector<16x16xf32> to vector<1x16xf32>
    %628 = tpu.concatenate %612, %613, %614, %615, %616, %617, %618, %619, %620, %621, %622, %623, %624, %625, %626, %627 in 1 : vector<1x16xf32>, vector<1x16xf32>, vector<1x16xf32>, vector<1x16xf32>, vector<1x16xf32>, vector<1x16xf32>, vector<1x16xf32>, vector<1x16xf32>, vector<1x16xf32>, vector<1x16xf32>, vector<1x16xf32>, vector<1x16xf32>, vector<1x16xf32>, vector<1x16xf32>, vector<1x16xf32>, vector<1x16xf32> -> vector<1x256xf32>
    %629 = vector.broadcast %628 : vector<1x256xf32> to vector<32x256xf32>
    %630 = arith.mulf %145, %629 : vector<32x256xf32>
    %c0_24 = arith.constant 0 : index
    %c0_25 = arith.constant 0 : index
    %c0_26 = arith.constant 0 : index
    %631 = vector.load %arg6[%c0_24, %c0_25, %c0_26] : memref<1x32x256xf32, #tpu.memory_space<vmem>>, vector<1x32x256xf32>
    %632 = vector.shape_cast %631 : vector<1x32x256xf32> to vector<32x256xf32>
    %633 = vector.shape_cast %630 : vector<32x256xf32> to vector<1x32x256xf32>
    tpu.vector_store %arg6[%c0_24, %c0_25, %c0_26], %633 {strides = array<i32>} : memref<1x32x256xf32, #tpu.memory_space<vmem>>, vector<1x32x256xf32>,
    return
  }
  func.func @transform_0(%arg0: i32) -> (i32, i32, i32) {
    %c0_i32 = arith.constant 0 : i32
    %c0_i32_0 = arith.constant 0 : i32
    %c0_i32_1 = arith.constant 0 : i32
    return %arg0, %c0_i32, %c0_i32_0 : i32, i32, i32
  }
  func.func @transform_1(%arg0: i32) -> (i32, i32) {
    %c0_i32 = arith.constant 0 : i32
    %c0_i32_0 = arith.constant 0 : i32
    %c0_i32_1 = arith.constant 0 : i32
    return %c0_i32, %c0_i32_0 : i32, i32
  }
  func.func @transform_2(%arg0: i32) -> (i32, i32) {
    %c0_i32 = arith.constant 0 : i32
    %c0_i32_0 = arith.constant 0 : i32
    %c0_i32_1 = arith.constant 0 : i32
    return %c0_i32, %c0_i32_0 : i32, i32
  }
  func.func @transform_3(%arg0: i32) -> i32 {
    %c0_i32 = arith.constant 0 : i32
    %c0_i32_0 = arith.constant 0 : i32
    return %c0_i32 : i32
  }
  func.func @transform_4(%arg0: i32) -> i32 {
    %c0_i32 = arith.constant 0 : i32
    %c0_i32_0 = arith.constant 0 : i32
    return %c0_i32 : i32
  }
  func.func @transform_5(%arg0: i32) -> (i32, i32, i32) {
    %c0_i32 = arith.constant 0 : i32
    %c0_i32_0 = arith.constant 0 : i32
    %c0_i32_1 = arith.constant 0 : i32
    return %arg0, %c0_i32, %c0_i32_0 : i32, i32, i32
  }
}

</mosaic_0001>

<llo_original>
// kernel: tpu_custom_call.1
$region0: #{tpu_custom_call.1}
  #allocation0 [shape = 'u32[]', space=smem, size = 0x4, offset = 0x4, fixed_abs, tag = 'smem constant byte address 0x4 - core index']
  #allocation1 [shape = 'u32[72,128]{1,0:T(1,128)}', space=vmem, size = 0x9000, scoped, tag = 'internal scratch']
  #allocation2 [shape = 'f32[1]{0:T(128)S(6)}', space=smem, size = 0x200, scoped, tag = 'scoped memory for tpu_custom_call.1']
  %s0 = inlined_call_operand.hbm [shape: f32[2,32,256], index: 0, kind: input, shape index: {}]
  %s1 = inlined_call_operand.vmem [shape: f32[32,2], index: 1, kind: input, shape index: {}]
  %s2 = inlined_call_operand.vmem [shape: f32[32,2], index: 2, kind: input, shape index: {}]
  %s3 = inlined_call_operand.vmem [shape: f32[98], index: 3, kind: input, shape index: {}]
  %s4 = inlined_call_operand.<no memory space> [shape: f32[1], index: 4, kind: input, shape index: {}]
  %s5 = inlined_call_operand.hbm [shape: f32[2,32,256], index: 5, kind: output, shape index: {}]
  %s6 = sld [smem:[#allocation0]]
  $region61: #{tpu_custom_call.1} parent=0
    _
  %s8 = ssub.s32 1, %s6
  %s9 = scalar_select 0, %s8, %s6
  %10 = sst [smem:[#allocation2]] %s4
  $region1: #{tpu_custom_call.1} parent=0
    #allocation3 [shape = 'u8[65536]{0}', space=vmem, size = 0x10000, scoped, tag = 'input window, operand 0']
    #allocation4 [shape = 's32[2]{0}', space=sflag, size = 0x8, scoped, tag = 'scoped memory for tpu_custom_call.1']
    #allocation5 [shape = 's32[2]{0}', space=sflag, size = 0x8, scoped, tag = 'scoped memory for tpu_custom_call.1']
    #allocation6 [shape = 's32[2]{0}', space=sflag, size = 0x8, scoped, tag = 'scoped memory for tpu_custom_call.1']
    #allocation7 [shape = 'u8[512]{0}', space=smem, size = 0x200, scoped, tag = 'input window, operand 3, single buffered']
    #allocation8 [shape = 'u8[65536]{0}', space=vmem, size = 0x10000, scoped, tag = 'output window, operand 0']
    %11 = vsyncpa [#allocation4], 0
    %s12 = scalar_lea.sflag [#allocation4], 1
    %13 = vsyncpa %s12, 0
    %14 = vsyncpa [#allocation6], 0
    %15 = vsyncpa [#allocation5], 0
    %s16 = scalar_lea.sflag [#allocation5], 1
    %17 = vsyncpa %s16, 0
    loop: start=0, step=1, limit=4
    $region2: #{tpu_custom_call.1} parent=1 // loop_pre_header
      _
    $region3: #{tpu_custom_call.1} parent=1 // loop_header
      %s19 = sphi 0, %s23
      %p20 = scmp.ge.s32.totalorder %s19, 4
      %s29 = sphi 0, %s31
      %s32 = sphi 0, %s29
      %s33 = sphi 0, %s32
      %s49 = sphi 0, %s33
      %s53 = sphi 0, %s53
      %s55 = sphi 0, %s53
      %s56 = sphi 0, %s55
      %s70 = sphi 0, %s56
      %s74 = sphi 0, %s74
      %s76 = sphi 0, %s74
      %s77 = sphi 0, %s76
      %s91 = sphi 0, %s77
      %s95 = sphi 0, %s95
      %s97 = sphi 0, %s95
      %s98 = sphi 0, %s97
      %s112 = sphi 0, %s98
      %s116 = sphi 0, %s116
      %s118 = sphi 0, %s116
      %s119 = sphi 0, %s118
      %s133 = sphi 0, %s119
      %s139 = sphi 0, %s141
      %s142 = sphi 0, %s139
      %s143 = sphi 0, %s142
      %s159 = sphi 0, %s143
    $region4: #{tpu_custom_call.1} parent=1 // loop_header_branch
      %22 = sbr.rel (%p20) target = $region8
    $region5: #{tpu_custom_call.1} parent=1 // loop_body
      %s24 = ssub.s32 %s19, 1
      %s25 = ssub.s32 %s19, 2
      %s26 = sadd.s32 %s19, 1
      %s27 = ssub.s32 %s19, %s26
      %p28 = scmp.eq.s32.totalorder %s27, 0
      %s30 = sadd.s32 %s29, 1
      %s31 = scalar_select %p28, %s29, %s30
      %p34 = pneg %p28
      %p35 = scmp.eq.s32.totalorder %s19, 1
      %p36 = por %p34, %p35
      %p37 = scmp.ne.s32.totalorder %s29, %s32
      %p38 = scmp.eq.s32.totalorder %s19, 0
      %p39 = por %p37, %p38
      %p40 = scmp.ne.s32.totalorder %s29, %s32
      %p41 = scmp.eq.s32.totalorder %s24, 1
      %p42 = por %p40, %p41
      %p43 = scmp.ne.s32.totalorder %s32, %s33
      %p44 = scmp.eq.s32.totalorder %s24, 0
      %p45 = por %p43, %p44
      %p46 = scmp.ne.s32.totalorder %s32, %s33
      %p47 = scmp.eq.s32.totalorder %s25, 1
      %p48 = por %p46, %p47
      %p50 = scmp.ne.s32.totalorder %s33, %s49
      %p51 = scmp.eq.s32.totalorder %s25, 0
      %p52 = por %p50, %p51
      %s54 = sadd.s32 %s53, 1
      %p57 = scmp.eq.s32.totalorder %s19, 1
      %p58 = scmp.ne.s32.totalorder %s53, %s55
      %p59 = scmp.eq.s32.totalorder %s19, 0
      %p60 = por %p58, %p59
      %p61 = scmp.ne.s32.totalorder %s53, %s55
      %p62 = scmp.eq.s32.totalorder %s24, 1
      %p63 = por %p61, %p62
      %p64 = scmp.ne.s32.totalorder %s55, %s56
      %p65 = scmp.eq.s32.totalorder %s24, 0
      %p66 = por %p64, %p65
      %p67 = scmp.ne.s32.totalorder %s55, %s56
      %p68 = scmp.eq.s32.totalorder %s25, 1
      %p69 = por %p67, %p68
      %p71 = scmp.ne.s32.totalorder %s56, %s70
      %p72 = scmp.eq.s32.totalorder %s25, 0
      %p73 = por %p71, %p72
      %s75 = sadd.s32 %s74, 1
      %p78 = scmp.eq.s32.totalorder %s19, 1
      %p79 = scmp.ne.s32.totalorder %s74, %s76
      %p80 = scmp.eq.s32.totalorder %s19, 0
      %p81 = por %p79, %p80
      %p82 = scmp.ne.s32.totalorder %s74, %s76
      %p83 = scmp.eq.s32.totalorder %s24, 1
      %p84 = por %p82, %p83
      %p85 = scmp.ne.s32.totalorder %s76, %s77
      %p86 = scmp.eq.s32.totalorder %s24, 0
      %p87 = por %p85, %p86
      %p88 = scmp.ne.s32.totalorder %s76, %s77
      %p89 = scmp.eq.s32.totalorder %s25, 1
      %p90 = por %p88, %p89
      %p92 = scmp.ne.s32.totalorder %s77, %s91
      %p93 = scmp.eq.s32.totalorder %s25, 0
      %p94 = por %p92, %p93
      %s96 = sadd.s32 %s95, 1
      %p99 = scmp.eq.s32.totalorder %s19, 1
      %p100 = scmp.ne.s32.totalorder %s95, %s97
      %p101 = scmp.eq.s32.totalorder %s19, 0
      %p102 = por %p100, %p101
      %p103 = scmp.ne.s32.totalorder %s95, %s97
      %p104 = scmp.eq.s32.totalorder %s24, 1
      %p105 = por %p103, %p104
      %p106 = scmp.ne.s32.totalorder %s97, %s98
      %p107 = scmp.eq.s32.totalorder %s24, 0
      %p108 = por %p106, %p107
      %p109 = scmp.ne.s32.totalorder %s97, %s98
      %p110 = scmp.eq.s32.totalorder %s25, 1
      %p111 = por %p109, %p110
      %p113 = scmp.ne.s32.totalorder %s98, %s112
      %p114 = scmp.eq.s32.totalorder %s25, 0
      %p115 = por %p113, %p114
      %s117 = sadd.s32 %s116, 1
      %p120 = scmp.eq.s32.totalorder %s19, 1
      %p121 = scmp.ne.s32.totalorder %s116, %s118
      %p122 = scmp.eq.s32.totalorder %s19, 0
      %p123 = por %p121, %p122
      %p124 = scmp.ne.s32.totalorder %s116, %s118
      %p125 = scmp.eq.s32.totalorder %s24, 1
      %p126 = por %p124, %p125
      %p127 = scmp.ne.s32.totalorder %s118, %s119
      %p128 = scmp.eq.s32.totalorder %s24, 0
      %p129 = por %p127, %p128
      %p130 = scmp.ne.s32.totalorder %s118, %s119
      %p131 = scmp.eq.s32.totalorder %s25, 1
      %p132 = por %p130, %p131
      %p134 = scmp.ne.s32.totalorder %s119, %s133
      %p135 = scmp.eq.s32.totalorder %s25, 0
      %p136 = por %p134, %p135
      %s137 = ssub.s32 %s19, %s26
      %p138 = scmp.eq.s32.totalorder %s137, 0
      %s140 = sadd.s32 %s139, 1
      %s141 = scalar_select %p138, %s139, %s140
      %p144 = pneg %p138
      %p145 = scmp.eq.s32.totalorder %s19, 1
      %p146 = por %p144, %p145
      %p147 = scmp.ne.s32.totalorder %s139, %s142
      %p148 = scmp.eq.s32.totalorder %s19, 0
      %p149 = por %p147, %p148
      %p150 = scmp.ne.s32.totalorder %s139, %s142
      %p151 = scmp.eq.s32.totalorder %s24, 1
      %p152 = por %p150, %p151
      %p153 = scmp.ne.s32.totalorder %s142, %s143
      %p154 = scmp.eq.s32.totalorder %s24, 0
      %p155 = por %p153, %p154
      %p156 = scmp.ne.s32.totalorder %s142, %s143
      %p157 = scmp.eq.s32.totalorder %s25, 1
      %p158 = por %p156, %p157
      %p160 = scmp.ne.s32.totalorder %s143, %s159
      %p161 = scmp.eq.s32.totalorder %s25, 0
      %p162 = por %p160, %p161
      %p163 = scmp.le.s32.totalorder 1, %s19
      %p164 = scmp.lt.s32.totalorder %s19, 3
      %p165 = pnand %p163, %p164
      %p166 = pneg %p165
      // Predicated region
      $region9: #{tpu_custom_call.1} parent=5 // pred_check
        _
      $region10: #{tpu_custom_call.1} parent=5 // pred_check_branch
        %168 = sbr.rel (%p165) target = $region12
      $region11: #{tpu_custom_call.1} parent=5 // pred_region
        %s169 = ssub.s32 %s19, 1
        // Predicated region
        $region13: #{tpu_custom_call.1} parent=11 // pred_check
          %p170 = pneg %p66
        $region14: #{tpu_custom_call.1} parent=11 // pred_check_branch
          %172 = sbr.rel (%p170) target = $region16
        $region15: #{tpu_custom_call.1} parent=11 // pred_region
          _
        $region16: #{tpu_custom_call.1} parent=11 // pred_fallthru
          _
        // Predicated region
        $region17: #{tpu_custom_call.1} parent=11 // pred_check
          %p173 = pneg %p87
        $region18: #{tpu_custom_call.1} parent=11 // pred_check_branch
          %175 = sbr.rel (%p173) target = $region20
        $region19: #{tpu_custom_call.1} parent=11 // pred_region
          _
        $region20: #{tpu_custom_call.1} parent=11 // pred_fallthru
          _
        // Predicated region
        $region21: #{tpu_custom_call.1} parent=11 // pred_check
          %p176 = pneg %p108
        $region22: #{tpu_custom_call.1} parent=11 // pred_check_branch
          %178 = sbr.rel (%p176) target = $region24
        $region23: #{tpu_custom_call.1} parent=11 // pred_region
          %180 = vsyncadd [#allocation6], 0
          %s182 = sshll.u32 %s3, 4
          %s183 = int_to_ptr.vmem [resolvable:$true] %s182
          %185 = dma.vmem_to_smem %s183, 16, [#allocation7], [#allocation6]
        $region24: #{tpu_custom_call.1} parent=11 // pred_fallthru
          _
        // Predicated region
        $region25: #{tpu_custom_call.1} parent=11 // pred_check
          %p186 = pneg %p129
        $region26: #{tpu_custom_call.1} parent=11 // pred_check_branch
          %188 = sbr.rel (%p186) target = $region28
        $region27: #{tpu_custom_call.1} parent=11 // pred_region
          _
        $region28: #{tpu_custom_call.1} parent=11 // pred_fallthru
          _
      $region12: #{tpu_custom_call.1} parent=5 // pred_fallthru
        _
      %p189 = scmp.lt.s32.totalorder %s19, 2
      // Predicated region
      $region29: #{tpu_custom_call.1} parent=5 // pred_check
        %p190 = pneg %p189
      $region30: #{tpu_custom_call.1} parent=5 // pred_check_branch
        %192 = sbr.rel (%p190) target = $region32
      $region31: #{tpu_custom_call.1} parent=5 // pred_region
        // Predicated region
        $region33: #{tpu_custom_call.1} parent=31 // pred_check
          %p193 = pneg %p39
        $region34: #{tpu_custom_call.1} parent=31 // pred_check_branch
          %195 = sbr.rel (%p193) target = $region36
        $region35: #{tpu_custom_call.1} parent=31 // pred_region
          %s196 = sand.u32 %s29, 1
          %s197 = scalar_lea.sflag [#allocation4], %s196
          %s198 = sand.u32 %s29, 1
          %s199 = smul.addr %s198, 64
          %s200 = scalar_lea.vmem [#allocation3], %s199
          %202 = vsyncadd %s197, 0
          %s203 = smul.addr %s19, 8
          %s204 = smul.addr %s203, 8
          %s205 = scalar_lea.hbm %s0, %s204
          %s206 = sshll.u32 %s205, 4
          %s207 = int_to_ptr.hbm [resolvable:$true] %s206
          %s208 = sshll.u32 %s200, 4
          %s209 = int_to_ptr.vmem [resolvable:$true] %s208
          %214 = dma.hbm_to_vmem [thread:$0]  %s207, 1024, %s209, %s197, 256, 256, 16
        $region36: #{tpu_custom_call.1} parent=31 // pred_fallthru
          _
      $region32: #{tpu_custom_call.1} parent=5 // pred_fallthru
        _
      %p215 = scmp.le.s32.totalorder 1, %s19
      %p216 = scmp.lt.s32.totalorder %s19, 3
      %p217 = pnand %p215, %p216
      %p218 = pneg %p217
      // Predicated region
      $region37: #{tpu_custom_call.1} parent=5 // pred_check
        _
      $region38: #{tpu_custom_call.1} parent=5 // pred_check_branch
        %220 = sbr.rel (%p217) target = $region40
      $region39: #{tpu_custom_call.1} parent=5 // pred_region
        %s221 = ssub.s32 %s19, 1
        %s222 = sand.u32 %s32, 1
        %s223 = scalar_lea.sflag [#allocation4], %s222
        %s224 = sand.u32 %s32, 1
        %s225 = smul.addr %s224, 64
        %s226 = scalar_lea.vmem [#allocation3], %s225
        // Predicated region
        $region41: #{tpu_custom_call.1} parent=39 // pred_check
          %p227 = pneg %p45
        $region42: #{tpu_custom_call.1} parent=39 // pred_check_branch
          %229 = sbr.rel (%p227) target = $region44
        $region43: #{tpu_custom_call.1} parent=39 // pred_region
          %231 = dma.done %s223, 1024
        $region44: #{tpu_custom_call.1} parent=39 // pred_fallthru
          _
        // Predicated region
        $region45: #{tpu_custom_call.1} parent=39 // pred_check
          %p232 = pneg %p108
        $region46: #{tpu_custom_call.1} parent=39 // pred_check_branch
          %234 = sbr.rel (%p232) target = $region48
        $region47: #{tpu_custom_call.1} parent=39 // pred_region
          %236 = dma.done [#allocation6], 16
        $region48: #{tpu_custom_call.1} parent=39 // pred_fallthru
          _
        %237 = sfence
        %s238 = sand.u32 %s32, 1
        %s239 = scalar_lea.sflag [#allocation4], %s238
        %s240 = sand.u32 %s32, 1
        %s241 = smul.addr %s240, 64
        %s242 = scalar_lea.vmem [#allocation3], %s241
        %p243 = pneg %p45
        %p244 = pneg %p42
        %p245 = pneg %p66
        %p246 = pneg %p63
        %p247 = pneg %p87
        %p248 = pneg %p84
        %p249 = pneg %p108
        %p250 = pneg %p105
        %p251 = pneg %p129
        %p252 = pneg %p126
        %p253 = pneg %p155
        %p254 = pneg %p152
        %s255 = sand.u32 %s142, 1
        %s256 = scalar_lea.sflag [#allocation5], %s255
        %s257 = sand.u32 %s142, 1
        %s258 = smul.addr %s257, 64
        %s259 = scalar_lea.vmem [#allocation8], %s258
        %v260 = vld [vmem:[%s1] sm:$0xff]
        %v261 = vld [vmem:[%s1 + $0x8] sm:$0xff]
        %v262 = vld [vmem:[%s1 + $0x10] sm:$0xff]
        %v263 = vld [vmem:[%s1 + $0x18] sm:$0xff]
        %v264 = vld [vmem:[%s2] sm:$0xff]
        %v265 = vld [vmem:[%s2 + $0x8] sm:$0xff]
        %v266 = vld [vmem:[%s2 + $0x10] sm:$0xff]
        %v267 = vld [vmem:[%s2 + $0x18] sm:$0xff]
        %s268 = sld [smem:[#allocation7]]
        %s269 = sld [smem:[#allocation7 + $0x1]]
        %s270 = sld [smem:[#allocation7 + $0x2]]
        %s271 = sld [smem:[#allocation7 + $0x3]]
        %s272 = sld [smem:[#allocation7 + $0x4]]
        %s273 = sld [smem:[#allocation7 + $0x5]]
        %s274 = sld [smem:[#allocation7 + $0x6]]
        %s275 = sld [smem:[#allocation7 + $0x7]]
        %s276 = sld [smem:[#allocation7 + $0x8]]
        %s277 = sld [smem:[#allocation7 + $0x9]]
        %s278 = sld [smem:[#allocation7 + $0xa]]
        %s279 = sld [smem:[#allocation7 + $0xb]]
        %s280 = sld [smem:[#allocation7 + $0xc]]
        %s281 = sld [smem:[#allocation7 + $0xd]]
        %s282 = sld [smem:[#allocation7 + $0xe]]
        %s283 = sld [smem:[#allocation7 + $0xf]]
        %s284 = sld [smem:[#allocation7 + $0x10]]
        %s285 = sld [smem:[#allocation7 + $0x11]]
        %s286 = sld [smem:[#allocation7 + $0x12]]
        %s287 = sld [smem:[#allocation7 + $0x13]]
        %s288 = sld [smem:[#allocation7 + $0x14]]
        %s289 = sld [smem:[#allocation7 + $0x15]]
        %s290 = sld [smem:[#allocation7 + $0x16]]
        %s291 = sld [smem:[#allocation7 + $0x17]]
        %s292 = sld [smem:[#allocation7 + $0x18]]
        %s293 = sld [smem:[#allocation7 + $0x19]]
        %s294 = sld [smem:[#allocation7 + $0x1a]]
        %s295 = sld [smem:[#allocation7 + $0x1b]]
        %s296 = sld [smem:[#allocation7 + $0x1c]]
        %s297 = sld [smem:[#allocation7 + $0x1d]]
        %s298 = sld [smem:[#allocation7 + $0x1e]]
        %s299 = sld [smem:[#allocation7 + $0x1f]]
        %s300 = sld [smem:[#allocation7 + $0x20]]
        %s301 = sld [smem:[#allocation7 + $0x21]]
        %s302 = sld [smem:[#allocation7 + $0x22]]
        %s303 = sld [smem:[#allocation7 + $0x23]]
        %s304 = sld [smem:[#allocation7 + $0x24]]
        %s305 = sld [smem:[#allocation7 + $0x25]]
        %s306 = sld [smem:[#allocation7 + $0x26]]
        %s307 = sld [smem:[#allocation7 + $0x27]]
        %s308 = sld [smem:[#allocation7 + $0x28]]
        %s309 = sld [smem:[#allocation7 + $0x29]]
        %s310 = sld [smem:[#allocation7 + $0x2a]]
        %s311 = sld [smem:[#allocation7 + $0x2b]]
        %s312 = sld [smem:[#allocation7 + $0x2c]]
        %s313 = sld [smem:[#allocation7 + $0x2d]]
        %s314 = sld [smem:[#allocation7 + $0x2e]]
        %s315 = sld [smem:[#allocation7 + $0x2f]]
        %s316 = sld [smem:[#allocation7 + $0x30]]
        %s317 = sld [smem:[#allocation7 + $0x31]]
        %s318 = sld [smem:[#allocation7 + $0x32]]
        %s319 = sld [smem:[#allocation7 + $0x33]]
        %s320 = sld [smem:[#allocation7 + $0x34]]
        %s321 = sld [smem:[#allocation7 + $0x35]]
        %s322 = sld [smem:[#allocation7 + $0x36]]
        %s323 = sld [smem:[#allocation7 + $0x37]]
        %s324 = sld [smem:[#allocation7 + $0x38]]
        %s325 = sld [smem:[#allocation7 + $0x39]]
        %s326 = sld [smem:[#allocation7 + $0x3a]]
        %s327 = sld [smem:[#allocation7 + $0x3b]]
        %s328 = sld [smem:[#allocation7 + $0x3c]]
        %s329 = sld [smem:[#allocation7 + $0x3d]]
        %s330 = sld [smem:[#allocation7 + $0x3e]]
        %s331 = sld [smem:[#allocation7 + $0x3f]]
        %s332 = sld [smem:[#allocation7 + $0x40]]
        %s333 = sld [smem:[#allocation7 + $0x41]]
        %s334 = sld [smem:[#allocation7 + $0x42]]
        %s335 = sld [smem:[#allocation7 + $0x43]]
        %s336 = sld [smem:[#allocation7 + $0x44]]
        %s337 = sld [smem:[#allocation7 + $0x45]]
        %s338 = sld [smem:[#allocation7 + $0x46]]
        %s339 = sld [smem:[#allocation7 + $0x47]]
        %s340 = sld [smem:[#allocation7 + $0x48]]
        %s341 = sld [smem:[#allocation7 + $0x49]]
        %s342 = sld [smem:[#allocation7 + $0x4a]]
        %s343 = sld [smem:[#allocation7 + $0x4b]]
        %s344 = sld [smem:[#allocation7 + $0x4c]]
        %s345 = sld [smem:[#allocation7 + $0x4d]]
        %s346 = sld [smem:[#allocation7 + $0x4e]]
        %s347 = sld [smem:[#allocation7 + $0x4f]]
        %s348 = sld [smem:[#allocation7 + $0x50]]
        %s349 = sld [smem:[#allocation7 + $0x51]]
        %s350 = sld [smem:[#allocation7 + $0x52]]
        %s351 = sld [smem:[#allocation7 + $0x53]]
        %s352 = sld [smem:[#allocation7 + $0x54]]
        %s353 = sld [smem:[#allocation7 + $0x55]]
        %s354 = sld [smem:[#allocation7 + $0x56]]
        %s355 = sld [smem:[#allocation7 + $0x57]]
        %s356 = sld [smem:[#allocation7 + $0x58]]
        %s357 = sld [smem:[#allocation7 + $0x59]]
        %s358 = sld [smem:[#allocation7 + $0x5a]]
        %s359 = sld [smem:[#allocation7 + $0x5b]]
        %s360 = sld [smem:[#allocation7 + $0x5c]]
        %s361 = sld [smem:[#allocation7 + $0x5d]]
        %s362 = sld [smem:[#allocation7 + $0x5e]]
        %s363 = sld [smem:[#allocation7 + $0x5f]]
        %s364 = sld [smem:[#allocation7 + $0x60]]
        %s365 = sld [smem:[#allocation7 + $0x61]]
        %s366 = sld [smem:[#allocation2]]
        %v367 = vld [vmem:[%s226] sm:$0xff]
        %v368 = vld [vmem:[%s226 + $0x8] sm:$0xff]
        %v369 = vld [vmem:[%s226 + $0x10] sm:$0xff]
        %v370 = vld [vmem:[%s226 + $0x18] sm:$0xff]
        %v371 = vld [vmem:[%s226 + $0x20] sm:$0xff]
        %v372 = vld [vmem:[%s226 + $0x28] sm:$0xff]
        %v373 = vld [vmem:[%s226 + $0x30] sm:$0xff]
        %v374 = vld [vmem:[%s226 + $0x38] sm:$0xff]
        %v375 = vadd.f32 %v367, %v368
        %376 = vadd.xlane.f32.xlu0 %v375
        %v377 = vpop.xlane.xlu0 %376
        %v378 = vadd.f32 %v369, %v370
        %379 = vadd.xlane.f32.xlu0 %v378
        %v380 = vpop.xlane.xlu0 %379
        %v381 = vadd.f32 %v371, %v372
        %382 = vadd.xlane.f32.xlu0 %v381
        %v383 = vpop.xlane.xlu0 %382
        %v384 = vadd.f32 %v373, %v374
        %385 = vadd.xlane.f32.xlu0 %v384
        %v386 = vpop.xlane.xlu0 %385
        %v387 = vrcp.pop 256.0
        %v388 = vmul.f32 256.0, %v387
        %v389 = vsub.f32 1.0, %v388
        %v390 = vmul.f32 %v387, %v389
        %v391 = vadd.f32 %v387, %v390
        %vm392 = vweird.f32 %v387
        %v393 = vsel %vm392, %v387, %v391
        %v394 = vmul.f32 %v377, %v393
        %v395 = vmul.f32 %v380, %v393
        %v396 = vmul.f32 %v383, %v393
        %v397 = vmul.f32 %v386, %v393
        %v398 = vmax.f32 %v367, %v368
        %399 = vmax.xlane.f32.xlu0 %v398
        %v400 = vpop.xlane.xlu0 %399
        %v401 = vmax.f32 %v369, %v370
        %402 = vmax.xlane.f32.xlu0 %v401
        %v403 = vpop.xlane.xlu0 %402
        %v404 = vmax.f32 %v371, %v372
        %405 = vmax.xlane.f32.xlu0 %v404
        %v406 = vpop.xlane.xlu0 %405
        %v407 = vmax.f32 %v373, %v374
        %408 = vmax.xlane.f32.xlu0 %v407
        %v409 = vpop.xlane.xlu0 %408
        %vm410 = vcmask 7168
        %v411 = vsel %vm410, %v394, %v400
        %v412 = vsel %vm410, %v395, %v403
        %v413 = vsel %vm410, %v396, %v406
        %v414 = vsel %vm410, %v397, %v409
        %416 = vset.pattern.permute.xlu0 0
        %417 = vperm.xlu0 %416, %v260
        %v418 = vpop.permute.xlu0 %417
        %421 = vset.pattern.permute.xlu0 0
        %422 = vperm.xlu0 %421, %v261
        %v423 = vpop.permute.xlu0 %422
        %426 = vset.pattern.permute.xlu0 0
        %427 = vperm.xlu0 %426, %v262
        %v428 = vpop.permute.xlu0 %427
        %431 = vset.pattern.permute.xlu0 0
        %432 = vperm.xlu0 %431, %v263
        %v433 = vpop.permute.xlu0 %432
        %v435 = vmul.f32 %v418, %v411
        %v436 = vmul.f32 %v423, %v412
        %v437 = vmul.f32 %v428, %v413
        %v438 = vmul.f32 %v433, %v414
        %vm439 = vcmask 15360
        %v440 = vsel %vm439, %v435, 0.0
        %v441 = vsel %vm439, %v436, 0.0
        %v442 = vadd.f32 %v440, %v441
        %v443 = vsel %vm439, %v437, 0.0
        %v444 = vadd.f32 %v442, %v443
        %v445 = vsel %vm439, %v438, 0.0
        %v446 = vadd.f32 %v444, %v445
        %v447 = vrot.slane %v446, 4
        %v448 = vadd.f32 %v446, %v447
        %v449 = vrot.slane %v448, 2
        %v450 = vadd.f32 %v448, %v449
        %v451 = vrot.slane %v450, 1
        %v452 = vadd.f32 %v450, %v451
        %453 = vset.pattern.permute.xlu0 1
        %454 = vperm.xlu0 %453, %v260
        %v455 = vpop.permute.xlu0 %454
        %457 = vset.pattern.permute.xlu0 1
        %458 = vperm.xlu0 %457, %v261
        %v459 = vpop.permute.xlu0 %458
        %461 = vset.pattern.permute.xlu0 1
        %462 = vperm.xlu0 %461, %v262
        %v463 = vpop.permute.xlu0 %462
        %465 = vset.pattern.permute.xlu0 1
        %466 = vperm.xlu0 %465, %v263
        %v467 = vpop.permute.xlu0 %466
        %v469 = vmul.f32 %v455, %v411
        %v470 = vmul.f32 %v459, %v412
        %v471 = vmul.f32 %v463, %v413
        %v472 = vmul.f32 %v467, %v414
        %v473 = vsel %vm439, %v469, 0.0
        %v474 = vsel %vm439, %v470, 0.0
        %v475 = vadd.f32 %v473, %v474
        %v476 = vsel %vm439, %v471, 0.0
        %v477 = vadd.f32 %v475, %v476
        %v478 = vsel %vm439, %v472, 0.0
        %v479 = vadd.f32 %v477, %v478
        %v480 = vrot.slane %v479, 4
        %v481 = vadd.f32 %v479, %v480
        %v482 = vrot.slane %v481, 2
        %v483 = vadd.f32 %v481, %v482
        %v484 = vrot.slane %v483, 1
        %v485 = vadd.f32 %v483, %v484
        %vm486 = vcmask 1040384
        %v487 = vsel %vm486, %v452, %v485
        %v488 = vmax.f32 %v487, 0.0
        %490 = vset.pattern.permute.xlu0 0
        %491 = vperm.xlu0 %490, %v264
        %v492 = vpop.permute.xlu0 %491
        %495 = vset.pattern.permute.xlu0 0
        %496 = vperm.xlu0 %495, %v265
        %v497 = vpop.permute.xlu0 %496
        %500 = vset.pattern.permute.xlu0 0
        %501 = vperm.xlu0 %500, %v266
        %v502 = vpop.permute.xlu0 %501
        %505 = vset.pattern.permute.xlu0 0
        %506 = vperm.xlu0 %505, %v267
        %v507 = vpop.permute.xlu0 %506
        %v509 = vperm.slane %v488, 0
        %v510 = vmul.f32 %v492, %v509
        %v511 = vmul.f32 %v497, %v509
        %v512 = vmul.f32 %v502, %v509
        %v513 = vmul.f32 %v507, %v509
        %514 = vset.pattern.permute.xlu0 1
        %515 = vperm.xlu0 %514, %v264
        %v516 = vpop.permute.xlu0 %515
        %518 = vset.pattern.permute.xlu0 1
        %519 = vperm.xlu0 %518, %v265
        %v520 = vpop.permute.xlu0 %519
        %522 = vset.pattern.permute.xlu0 1
        %523 = vperm.xlu0 %522, %v266
        %v524 = vpop.permute.xlu0 %523
        %526 = vset.pattern.permute.xlu0 1
        %527 = vperm.xlu0 %526, %v267
        %v528 = vpop.permute.xlu0 %527
        %v530 = vperm.slane %v488, 1
        %v531 = vmul.f32 %v516, %v530
        %v532 = vmul.f32 %v520, %v530
        %v533 = vmul.f32 %v524, %v530
        %v534 = vmul.f32 %v528, %v530
        %v535 = vadd.f32 %v510, %v531
        %v536 = vadd.f32 %v511, %v532
        %v537 = vadd.f32 %v512, %v533
        %v538 = vadd.f32 %v513, %v534
        %543 = vrot.lane.b32.xlu0 %v535, 127
        %v544 = vpop.permute.xlu0 %543
        %545 = vrot.lane.b32.xlu0 %v536, 127
        %v546 = vpop.permute.xlu0 %545
        %547 = vrot.lane.b32.xlu0 %v537, 127
        %v548 = vpop.permute.xlu0 %547
        %549 = vrot.lane.b32.xlu0 %v538, 127
        %v550 = vpop.permute.xlu0 %549
        %v555 = vadd.f32 %v535, %v544
        %v556 = vadd.f32 %v536, %v546
        %v557 = vadd.f32 %v537, %v548
        %v558 = vadd.f32 %v538, %v550
        %v559 = vxor.u32 %v555, 2147483648
        %v560 = vxor.u32 %v556, 2147483648
        %v561 = vxor.u32 %v557, 2147483648
        %v562 = vxor.u32 %v558, 2147483648
        %v563 = vmul.f32 %v559, 1.442695
        %v564 = vpow.pop %v563
        %v565 = vmul.f32 %v560, 1.442695
        %v566 = vpow.pop %v565
        %v567 = vmul.f32 %v561, 1.442695
        %v568 = vpow.pop %v567
        %v569 = vmul.f32 %v562, 1.442695
        %v570 = vpow.pop %v569
        %v571 = vadd.f32 %v564, 1.0
        %v572 = vadd.f32 %v566, 1.0
        %v573 = vadd.f32 %v568, 1.0
        %v574 = vadd.f32 %v570, 1.0
        %v575 = vrcp.pop %v571
        %v576 = vmul.f32 %v571, %v575
        %v577 = vsub.f32 1.0, %v576
        %v578 = vmul.f32 %v575, %v577
        %v579 = vadd.f32 %v575, %v578
        %vm580 = vweird.f32 %v571
        %vm581 = vweird.f32 %v575
        %vm582 = vmor %vm580, %vm581
        %v583 = vsel %vm582, %v575, %v579
        %v584 = vand.u32 2147483647, %v571
        %vm585 = vcmp.eq.f32.partialorder %v584, 8.507059e+37
        %v586 = vand.u32 %v571, 2147483648
        %v587 = vor.u32 1.1754944e-38, %v586
        %v588 = vsel %vm585, %v587, %v583
        %v589 = vmul.f32 1.0, %v588
        %v590 = vrcp.pop %v572
        %v591 = vmul.f32 %v572, %v590
        %v592 = vsub.f32 1.0, %v591
        %v593 = vmul.f32 %v590, %v592
        %v594 = vadd.f32 %v590, %v593
        %vm595 = vweird.f32 %v572
        %vm596 = vweird.f32 %v590
        %vm597 = vmor %vm595, %vm596
        %v598 = vsel %vm597, %v590, %v594
        %v599 = vand.u32 2147483647, %v572
        %vm600 = vcmp.eq.f32.partialorder %v599, 8.507059e+37
        %v601 = vand.u32 %v572, 2147483648
        %v602 = vor.u32 1.1754944e-38, %v601
        %v603 = vsel %vm600, %v602, %v598
        %v604 = vmul.f32 1.0, %v603
        %v605 = vrcp.pop %v573
        %v606 = vmul.f32 %v573, %v605
        %v607 = vsub.f32 1.0, %v606
        %v608 = vmul.f32 %v605, %v607
        %v609 = vadd.f32 %v605, %v608
        %vm610 = vweird.f32 %v573
        %vm611 = vweird.f32 %v605
        %vm612 = vmor %vm610, %vm611
        %v613 = vsel %vm612, %v605, %v609
        %v614 = vand.u32 2147483647, %v573
        %vm615 = vcmp.eq.f32.partialorder %v614, 8.507059e+37
        %v616 = vand.u32 %v573, 2147483648
        %v617 = vor.u32 1.1754944e-38, %v616
        %v618 = vsel %vm615, %v617, %v613
        %v619 = vmul.f32 1.0, %v618
        %v620 = vrcp.pop %v574
        %v621 = vmul.f32 %v574, %v620
        %v622 = vsub.f32 1.0, %v621
        %v623 = vmul.f32 %v620, %v622
        %v624 = vadd.f32 %v620, %v623
        %vm625 = vweird.f32 %v574
        %vm626 = vweird.f32 %v620
        %vm627 = vmor %vm625, %vm626
        %v628 = vsel %vm627, %v620, %v624
        %v629 = vand.u32 2147483647, %v574
        %vm630 = vcmp.eq.f32.partialorder %v629, 8.507059e+37
        %v631 = vand.u32 %v574, 2147483648
        %v632 = vor.u32 1.1754944e-38, %v631
        %v633 = vsel %vm630, %v632, %v628
        %v634 = vmul.f32 1.0, %v633
        %636 = vset.pattern.permute.xlu0 0
        %637 = vperm.xlu0 %636, %v589
        %v638 = vpop.permute.xlu0 %637
        %641 = vset.pattern.permute.xlu0 0
        %642 = vperm.xlu0 %641, %v604
        %v643 = vpop.permute.xlu0 %642
        %646 = vset.pattern.permute.xlu0 0
        %647 = vperm.xlu0 %646, %v619
        %v648 = vpop.permute.xlu0 %647
        %651 = vset.pattern.permute.xlu0 0
        %652 = vperm.xlu0 %651, %v634
        %v653 = vpop.permute.xlu0 %652
        %v655 = vmul.f32 %v367, %v638
        %v656 = vmul.f32 %v368, %v638
        %v657 = vmul.f32 %v369, %v643
        %v658 = vmul.f32 %v370, %v643
        %v659 = vmul.f32 %v371, %v648
        %v660 = vmul.f32 %v372, %v648
        %v661 = vmul.f32 %v373, %v653
        %v662 = vmul.f32 %v374, %v653
        %v663 = vadd.f32 %v655, %v657
        %v664 = vadd.f32 %v663, %v659
        %v665 = vadd.f32 %v664, %v661
        %v666 = vrot.slane %v665, 4
        %v667 = vadd.f32 %v665, %v666
        %v668 = vrot.slane %v667, 2
        %v669 = vadd.f32 %v667, %v668
        %v670 = vrot.slane %v669, 1
        %v671 = vadd.f32 %v669, %v670
        %v672 = vadd.f32 %v656, %v658
        %v673 = vadd.f32 %v672, %v660
        %v674 = vadd.f32 %v673, %v662
        %v675 = vrot.slane %v674, 4
        %v676 = vadd.f32 %v674, %v675
        %v677 = vrot.slane %v676, 2
        %v678 = vadd.f32 %v676, %v677
        %v679 = vrot.slane %v678, 1
        %v680 = vadd.f32 %v678, %v679
        %v681 = vrcp.pop 32.0
        %v682 = vmul.f32 32.0, %v681
        %v683 = vsub.f32 1.0, %v682
        %v684 = vmul.f32 %v681, %v683
        %v685 = vadd.f32 %v681, %v684
        %vm686 = vweird.f32 %v681
        %v687 = vsel %vm686, %v681, %v685
        %v688 = vmul.f32 %v671, %v687
        %v689 = vmul.f32 %v680, %v687
        %v690 = vmax.f32 %v655, %v659
        %v691 = vmax.f32 %v657, %v661
        %v692 = vmax.f32 %v690, %v691
        %v693 = vrot.slane %v692, 4
        %v694 = vmax.f32 %v692, %v693
        %v695 = vrot.slane %v694, 2
        %v696 = vmax.f32 %v694, %v695
        %v697 = vrot.slane %v696, 1
        %v698 = vmax.f32 %v696, %v697
        %v699 = vmax.f32 %v656, %v660
        %v700 = vmax.f32 %v658, %v662
        %v701 = vmax.f32 %v699, %v700
        %v702 = vrot.slane %v701, 4
        %v703 = vmax.f32 %v701, %v702
        %v704 = vrot.slane %v703, 2
        %v705 = vmax.f32 %v703, %v704
        %v706 = vrot.slane %v705, 1
        %v707 = vmax.f32 %v705, %v706
        %709 = vrot.lane.b32.xlu0 %v688, 112
        %v710 = vpop.permute.xlu0 %709
        %712 = vrot.lane.b32.xlu0 %v688, 96
        %v713 = vpop.permute.xlu0 %712
        %715 = vrot.lane.b32.xlu0 %v688, 80
        %v716 = vpop.permute.xlu0 %715
        %718 = vrot.lane.b32.xlu0 %v688, 64
        %v719 = vpop.permute.xlu0 %718
        %721 = vrot.lane.b32.xlu0 %v688, 48
        %v722 = vpop.permute.xlu0 %721
        %724 = vrot.lane.b32.xlu0 %v688, 32
        %v725 = vpop.permute.xlu0 %724
        %727 = vrot.lane.b32.xlu0 %v688, 16
        %v728 = vpop.permute.xlu0 %727
        %731 = vrot.lane.b32.xlu0 %v689, 112
        %v732 = vpop.permute.xlu0 %731
        %734 = vrot.lane.b32.xlu0 %v689, 96
        %v735 = vpop.permute.xlu0 %734
        %737 = vrot.lane.b32.xlu0 %v689, 80
        %v738 = vpop.permute.xlu0 %737
        %740 = vrot.lane.b32.xlu0 %v689, 64
        %v741 = vpop.permute.xlu0 %740
        %vm743 = vcmask 1042432
        %v744 = vsel %vm743, 0.0, %v688
        %vm745 = vcmask 1043456
        %v746 = vsel %vm745, %v744, %v710
        %vm747 = vcmask 1044480
        %v748 = vsel %vm747, %v746, %v713
        %vm749 = vcmask 1045504
        %v750 = vsel %vm749, %v748, %v716
        %vm751 = vcmask 1046528
        %v752 = vsel %vm751, %v750, %v719
        %v753 = vsel %vm486, %v722, %v725
        %vm754 = vcmask 1041408
        %v755 = vsel %vm754, %v753, %v728
        %v756 = vsel %vm743, %v755, %v689
        %v757 = vsel %vm745, %v756, %v732
        %v758 = vsel %vm747, %v757, %v735
        %v759 = vsel %vm749, %v758, %v738
        %v760 = vsel %vm751, %v759, %v741
        %v761 = vsel %vm486, %v689, %v732
        %v762 = vsel %vm754, %v761, %v735
        %v763 = vsel %vm743, %v762, 0.0
        %v764 = vsel %vm745, %v763, 0.0
        %v765 = vsel %vm747, %v764, 0.0
        %767 = vrot.lane.b32.xlu0 %v765, 48
        %v768 = vpop.permute.xlu0 %767
        %771 = vrot.lane.b32.xlu0 %v752, 3
        %v772 = vpop.permute.xlu0 %771
        %773 = vrot.lane.b32.xlu0 %v760, 3
        %v774 = vpop.permute.xlu0 %773
        %775 = vrot.lane.b32.xlu0 %v768, 3
        %v776 = vpop.permute.xlu0 %775
        %vm780 = vcmask 23552
        %v781 = vsel %vm780, 0.0, %v772
        %v782 = vsel %vm780, 0.0, %v774
        %v783 = vsel %vm780, 0.0, %v776
        %vm784 = vcmask 154624
        %v785 = vsel %vm784, %v781, 0.0
        %v786 = vsel %vm784, %v782, 0.0
        %v787 = vsel %vm784, %v783, 0.0
        %789 = vrot.lane.b32.xlu0 %v698, 112
        %v790 = vpop.permute.xlu0 %789
        %792 = vrot.lane.b32.xlu0 %v698, 96
        %v793 = vpop.permute.xlu0 %792
        %795 = vrot.lane.b32.xlu0 %v698, 80
        %v796 = vpop.permute.xlu0 %795
        %798 = vrot.lane.b32.xlu0 %v698, 64
        %v799 = vpop.permute.xlu0 %798
        %801 = vrot.lane.b32.xlu0 %v698, 48
        %v802 = vpop.permute.xlu0 %801
        %804 = vrot.lane.b32.xlu0 %v698, 32
        %v805 = vpop.permute.xlu0 %804
        %807 = vrot.lane.b32.xlu0 %v698, 16
        %v808 = vpop.permute.xlu0 %807
        %811 = vrot.lane.b32.xlu0 %v707, 112
        %v812 = vpop.permute.xlu0 %811
        %814 = vrot.lane.b32.xlu0 %v707, 96
        %v815 = vpop.permute.xlu0 %814
        %817 = vrot.lane.b32.xlu0 %v707, 80
        %v818 = vpop.permute.xlu0 %817
        %820 = vrot.lane.b32.xlu0 %v707, 64
        %v821 = vpop.permute.xlu0 %820
        %v823 = vsel %vm743, 0.0, %v698
        %v824 = vsel %vm745, %v823, %v790
        %v825 = vsel %vm747, %v824, %v793
        %v826 = vsel %vm749, %v825, %v796
        %v827 = vsel %vm751, %v826, %v799
        %v828 = vsel %vm486, %v802, %v805
        %v829 = vsel %vm754, %v828, %v808
        %v830 = vsel %vm743, %v829, %v707
        %v831 = vsel %vm745, %v830, %v812
        %v832 = vsel %vm747, %v831, %v815
        %v833 = vsel %vm749, %v832, %v818
        %v834 = vsel %vm751, %v833, %v821
        %v835 = vsel %vm486, %v707, %v812
        %v836 = vsel %vm754, %v835, %v815
        %v837 = vsel %vm743, %v836, 0.0
        %v838 = vsel %vm745, %v837, 0.0
        %v839 = vsel %vm747, %v838, 0.0
        %841 = vrot.lane.b32.xlu0 %v839, 48
        %v842 = vpop.permute.xlu0 %841
        %845 = vrot.lane.b32.xlu0 %v827, 3
        %v846 = vpop.permute.xlu0 %845
        %847 = vrot.lane.b32.xlu0 %v834, 3
        %v848 = vpop.permute.xlu0 %847
        %849 = vrot.lane.b32.xlu0 %v842, 3
        %v850 = vpop.permute.xlu0 %849
        %v854 = vsel %vm780, 0.0, %v846
        %v855 = vsel %vm780, 0.0, %v848
        %v856 = vsel %vm780, 0.0, %v850
        %v857 = vsel %vm784, %v854, 0.0
        %v858 = vsel %vm784, %v855, 0.0
        %v859 = vsel %vm784, %v856, 0.0
        %v860 = vstv %s268
        %v861 = vmul.f32 %v860, %v785
        %v862 = vmul.f32 %v860, %v786
        %v863 = vadd.f32 %v861, 0.0
        %v864 = vadd.f32 %v862, 0.0
        %v865 = vstv %s269
        %v866 = vmul.f32 %v865, %v785
        %v867 = vmul.f32 %v865, %v786
        %v868 = vadd.f32 %v866, 0.0
        %v869 = vadd.f32 %v867, 0.0
        %v870 = vstv %s270
        %v871 = vmul.f32 %v870, %v785
        %v872 = vmul.f32 %v870, %v786
        %v873 = vadd.f32 %v871, 0.0
        %v874 = vadd.f32 %v872, 0.0
        %v875 = vstv %s271
        %v876 = vmul.f32 %v875, %v785
        %v877 = vmul.f32 %v875, %v786
        %v878 = vadd.f32 %v876, 0.0
        %v879 = vadd.f32 %v877, 0.0
        %v880 = vstv %s272
        %v881 = vmul.f32 %v880, %v785
        %v882 = vmul.f32 %v880, %v786
        %885 = vrot.lane.b32.xlu0 %v881, 124
        %v886 = vpop.permute.xlu0 %885
        %887 = vrot.lane.b32.xlu0 %v882, 124
        %v888 = vpop.permute.xlu0 %887
        %v891 = vadd.f32 %v863, %v886
        %v892 = vadd.f32 %v864, %v888
        %v893 = vstv %s273
        %v894 = vmul.f32 %v893, %v785
        %v895 = vmul.f32 %v893, %v786
        %898 = vrot.lane.b32.xlu0 %v894, 124
        %v899 = vpop.permute.xlu0 %898
        %900 = vrot.lane.b32.xlu0 %v895, 124
        %v901 = vpop.permute.xlu0 %900
        %v904 = vadd.f32 %v868, %v899
        %v905 = vadd.f32 %v869, %v901
        %v906 = vstv %s274
        %v907 = vmul.f32 %v906, %v785
        %v908 = vmul.f32 %v906, %v786
        %911 = vrot.lane.b32.xlu0 %v907, 124
        %v912 = vpop.permute.xlu0 %911
        %913 = vrot.lane.b32.xlu0 %v908, 124
        %v914 = vpop.permute.xlu0 %913
        %v917 = vadd.f32 %v873, %v912
        %v918 = vadd.f32 %v874, %v914
        %v919 = vstv %s275
        %v920 = vmul.f32 %v919, %v785
        %v921 = vmul.f32 %v919, %v786
        %v922 = vmul.f32 %v919, %v787
        %v926 = vrot.slane %v920, 1
        %v927 = vrot.slane %v921, 1
        %v928 = vsel %vm751, %v926, %v927
        %v929 = vrot.slane %v922, 1
        %v930 = vsel %vm751, %v927, %v929
        %931 = vrot.lane.b32.xlu0 %v928, 3
        %v932 = vpop.permute.xlu0 %931
        %933 = vrot.lane.b32.xlu0 %v930, 3
        %v934 = vpop.permute.xlu0 %933
        %v937 = vadd.f32 %v878, %v932
        %v938 = vadd.f32 %v879, %v934
        %v939 = vstv %s276
        %v940 = vmul.f32 %v939, %v785
        %v941 = vmul.f32 %v939, %v786
        %v942 = vmul.f32 %v939, %v787
        %v946 = vrot.slane %v940, 1
        %v947 = vrot.slane %v941, 1
        %v948 = vsel %vm751, %v946, %v947
        %v949 = vrot.slane %v942, 1
        %v950 = vsel %vm751, %v947, %v949
        %951 = vrot.lane.b32.xlu0 %v948, 127
        %v952 = vpop.permute.xlu0 %951
        %953 = vrot.lane.b32.xlu0 %v950, 127
        %v954 = vpop.permute.xlu0 %953
        %v957 = vadd.f32 %v891, %v952
        %v958 = vadd.f32 %v892, %v954
        %v959 = vstv %s277
        %v960 = vmul.f32 %v959, %v785
        %v961 = vmul.f32 %v959, %v786
        %v962 = vmul.f32 %v959, %v787
        %v966 = vrot.slane %v960, 1
        %v967 = vrot.slane %v961, 1
        %v968 = vsel %vm751, %v966, %v967
        %v969 = vrot.slane %v962, 1
        %v970 = vsel %vm751, %v967, %v969
        %971 = vrot.lane.b32.xlu0 %v968, 127
        %v972 = vpop.permute.xlu0 %971
        %973 = vrot.lane.b32.xlu0 %v970, 127
        %v974 = vpop.permute.xlu0 %973
        %v977 = vadd.f32 %v904, %v972
        %v978 = vadd.f32 %v905, %v974
        %v979 = vstv %s278
        %v980 = vmul.f32 %v979, %v785
        %v981 = vmul.f32 %v979, %v786
        %v982 = vmul.f32 %v979, %v787
        %v986 = vrot.slane %v980, 1
        %v987 = vrot.slane %v981, 1
        %v988 = vsel %vm751, %v986, %v987
        %v989 = vrot.slane %v982, 1
        %v990 = vsel %vm751, %v987, %v989
        %991 = vrot.lane.b32.xlu0 %v988, 127
        %v992 = vpop.permute.xlu0 %991
        %993 = vrot.lane.b32.xlu0 %v990, 127
        %v994 = vpop.permute.xlu0 %993
        %v997 = vadd.f32 %v917, %v992
        %v998 = vadd.f32 %v918, %v994
        %v999 = vstv %s279
        %v1000 = vmul.f32 %v999, %v785
        %v1001 = vmul.f32 %v999, %v786
        %v1002 = vmul.f32 %v999, %v787
        %v1006 = vrot.slane %v1000, 1
        %v1007 = vrot.slane %v1001, 1
        %v1008 = vsel %vm751, %v1006, %v1007
        %v1009 = vrot.slane %v1002, 1
        %v1010 = vsel %vm751, %v1007, %v1009
        %1011 = vrot.lane.b32.xlu0 %v1008, 127
        %v1012 = vpop.permute.xlu0 %1011
        %1013 = vrot.lane.b32.xlu0 %v1010, 127
        %v1014 = vpop.permute.xlu0 %1013
        %v1017 = vadd.f32 %v937, %v1012
        %v1018 = vadd.f32 %v938, %v1014
        %v1019 = vstv %s280
        %v1020 = vmul.f32 %v1019, %v785
        %v1021 = vmul.f32 %v1019, %v786
        %v1022 = vmul.f32 %v1019, %v787
        %v1026 = vrot.slane %v1020, 1
        %v1027 = vrot.slane %v1021, 1
        %v1028 = vsel %vm751, %v1026, %v1027
        %v1029 = vrot.slane %v1022, 1
        %v1030 = vsel %vm751, %v1027, %v1029
        %1031 = vrot.lane.b32.xlu0 %v1028, 123
        %v1032 = vpop.permute.xlu0 %1031
        %1033 = vrot.lane.b32.xlu0 %v1030, 123
        %v1034 = vpop.permute.xlu0 %1033
        %v1037 = vadd.f32 %v957, %v1032
        %v1038 = vadd.f32 %v958, %v1034
        %v1039 = vstv %s281
        %v1040 = vmul.f32 %v1039, %v785
        %v1041 = vmul.f32 %v1039, %v786
        %v1042 = vmul.f32 %v1039, %v787
        %v1046 = vrot.slane %v1040, 1
        %v1047 = vrot.slane %v1041, 1
        %v1048 = vsel %vm751, %v1046, %v1047
        %v1049 = vrot.slane %v1042, 1
        %v1050 = vsel %vm751, %v1047, %v1049
        %1051 = vrot.lane.b32.xlu0 %v1048, 123
        %v1052 = vpop.permute.xlu0 %1051
        %1053 = vrot.lane.b32.xlu0 %v1050, 123
        %v1054 = vpop.permute.xlu0 %1053
        %v1057 = vadd.f32 %v977, %v1052
        %v1058 = vadd.f32 %v978, %v1054
        %v1059 = vstv %s282
        %v1060 = vmul.f32 %v1059, %v785
        %v1061 = vmul.f32 %v1059, %v786
        %v1062 = vmul.f32 %v1059, %v787
        %v1066 = vrot.slane %v1060, 2
        %v1067 = vrot.slane %v1061, 2
        %v1068 = vsel %vm749, %v1066, %v1067
        %v1069 = vrot.slane %v1062, 2
        %v1070 = vsel %vm749, %v1067, %v1069
        %1071 = vrot.lane.b32.xlu0 %v1068, 2
        %v1072 = vpop.permute.xlu0 %1071
        %1073 = vrot.lane.b32.xlu0 %v1070, 2
        %v1074 = vpop.permute.xlu0 %1073
        %v1077 = vadd.f32 %v997, %v1072
        %v1078 = vadd.f32 %v998, %v1074
        %v1079 = vstv %s283
        %v1080 = vmul.f32 %v1079, %v785
        %v1081 = vmul.f32 %v1079, %v786
        %v1082 = vmul.f32 %v1079, %v787
        %v1086 = vrot.slane %v1080, 2
        %v1087 = vrot.slane %v1081, 2
        %v1088 = vsel %vm749, %v1086, %v1087
        %v1089 = vrot.slane %v1082, 2
        %v1090 = vsel %vm749, %v1087, %v1089
        %1091 = vrot.lane.b32.xlu0 %v1088, 2
        %v1092 = vpop.permute.xlu0 %1091
        %1093 = vrot.lane.b32.xlu0 %v1090, 2
        %v1094 = vpop.permute.xlu0 %1093
        %v1097 = vadd.f32 %v1017, %v1092
        %v1098 = vadd.f32 %v1018, %v1094
        %v1099 = vstv %s284
        %v1100 = vmul.f32 %v1099, %v785
        %v1101 = vmul.f32 %v1099, %v786
        %v1102 = vmul.f32 %v1099, %v787
        %v1106 = vrot.slane %v1100, 2
        %v1107 = vrot.slane %v1101, 2
        %v1108 = vsel %vm749, %v1106, %v1107
        %v1109 = vrot.slane %v1102, 2
        %v1110 = vsel %vm749, %v1107, %v1109
        %1111 = vrot.lane.b32.xlu0 %v1108, 126
        %v1112 = vpop.permute.xlu0 %1111
        %1113 = vrot.lane.b32.xlu0 %v1110, 126
        %v1114 = vpop.permute.xlu0 %1113
        %v1117 = vadd.f32 %v1037, %v1112
        %v1118 = vadd.f32 %v1038, %v1114
        %v1119 = vstv %s285
        %v1120 = vmul.f32 %v1119, %v785
        %v1121 = vmul.f32 %v1119, %v786
        %v1122 = vmul.f32 %v1119, %v787
        %v1126 = vrot.slane %v1120, 2
        %v1127 = vrot.slane %v1121, 2
        %v1128 = vsel %vm749, %v1126, %v1127
        %v1129 = vrot.slane %v1122, 2
        %v1130 = vsel %vm749, %v1127, %v1129
        %1131 = vrot.lane.b32.xlu0 %v1128, 126
        %v1132 = vpop.permute.xlu0 %1131
        %1133 = vrot.lane.b32.xlu0 %v1130, 126
        %v1134 = vpop.permute.xlu0 %1133
        %v1137 = vadd.f32 %v1057, %v1132
        %v1138 = vadd.f32 %v1058, %v1134
        %v1139 = vstv %s286
        %v1140 = vmul.f32 %v1139, %v785
        %v1141 = vmul.f32 %v1139, %v786
        %v1142 = vmul.f32 %v1139, %v787
        %v1146 = vrot.slane %v1140, 2
        %v1147 = vrot.slane %v1141, 2
        %v1148 = vsel %vm749, %v1146, %v1147
        %v1149 = vrot.slane %v1142, 2
        %v1150 = vsel %vm749, %v1147, %v1149
        %1151 = vrot.lane.b32.xlu0 %v1148, 126
        %v1152 = vpop.permute.xlu0 %1151
        %1153 = vrot.lane.b32.xlu0 %v1150, 126
        %v1154 = vpop.permute.xlu0 %1153
        %v1157 = vadd.f32 %v1077, %v1152
        %v1158 = vadd.f32 %v1078, %v1154
        %v1159 = vstv %s287
        %v1160 = vmul.f32 %v1159, %v785
        %v1161 = vmul.f32 %v1159, %v786
        %v1162 = vmul.f32 %v1159, %v787
        %v1166 = vrot.slane %v1160, 2
        %v1167 = vrot.slane %v1161, 2
        %v1168 = vsel %vm749, %v1166, %v1167
        %v1169 = vrot.slane %v1162, 2
        %v1170 = vsel %vm749, %v1167, %v1169
        %1171 = vrot.lane.b32.xlu0 %v1168, 126
        %v1172 = vpop.permute.xlu0 %1171
        %1173 = vrot.lane.b32.xlu0 %v1170, 126
        %v1174 = vpop.permute.xlu0 %1173
        %v1177 = vadd.f32 %v1097, %v1172
        %v1178 = vadd.f32 %v1098, %v1174
        %v1179 = vstv %s288
        %v1180 = vmul.f32 %v1179, %v785
        %v1181 = vmul.f32 %v1179, %v786
        %v1182 = vmul.f32 %v1179, %v787
        %v1186 = vrot.slane %v1180, 2
        %v1187 = vrot.slane %v1181, 2
        %v1188 = vsel %vm749, %v1186, %v1187
        %v1189 = vrot.slane %v1182, 2
        %v1190 = vsel %vm749, %v1187, %v1189
        %1191 = vrot.lane.b32.xlu0 %v1188, 122
        %v1192 = vpop.permute.xlu0 %1191
        %1193 = vrot.lane.b32.xlu0 %v1190, 122
        %v1194 = vpop.permute.xlu0 %1193
        %v1197 = vadd.f32 %v1117, %v1192
        %v1198 = vadd.f32 %v1118, %v1194
        %v1199 = vstv %s289
        %v1200 = vmul.f32 %v1199, %v785
        %v1201 = vmul.f32 %v1199, %v786
        %v1202 = vmul.f32 %v1199, %v787
        %v1206 = vrot.slane %v1200, 3
        %v1207 = vrot.slane %v1201, 3
        %v1208 = vsel %vm747, %v1206, %v1207
        %v1209 = vrot.slane %v1202, 3
        %v1210 = vsel %vm747, %v1207, %v1209
        %1211 = vrot.lane.b32.xlu0 %v1208, 1
        %v1212 = vpop.permute.xlu0 %1211
        %1213 = vrot.lane.b32.xlu0 %v1210, 1
        %v1214 = vpop.permute.xlu0 %1213
        %v1217 = vadd.f32 %v1137, %v1212
        %v1218 = vadd.f32 %v1138, %v1214
        %v1219 = vstv %s290
        %v1220 = vmul.f32 %v1219, %v785
        %v1221 = vmul.f32 %v1219, %v786
        %v1222 = vmul.f32 %v1219, %v787
        %v1226 = vrot.slane %v1220, 3
        %v1227 = vrot.slane %v1221, 3
        %v1228 = vsel %vm747, %v1226, %v1227
        %v1229 = vrot.slane %v1222, 3
        %v1230 = vsel %vm747, %v1227, %v1229
        %1231 = vrot.lane.b32.xlu0 %v1228, 1
        %v1232 = vpop.permute.xlu0 %1231
        %1233 = vrot.lane.b32.xlu0 %v1230, 1
        %v1234 = vpop.permute.xlu0 %1233
        %v1237 = vadd.f32 %v1157, %v1232
        %v1238 = vadd.f32 %v1158, %v1234
        %v1239 = vstv %s291
        %v1240 = vmul.f32 %v1239, %v785
        %v1241 = vmul.f32 %v1239, %v786
        %v1242 = vmul.f32 %v1239, %v787
        %v1246 = vrot.slane %v1240, 3
        %v1247 = vrot.slane %v1241, 3
        %v1248 = vsel %vm747, %v1246, %v1247
        %v1249 = vrot.slane %v1242, 3
        %v1250 = vsel %vm747, %v1247, %v1249
        %1251 = vrot.lane.b32.xlu0 %v1248, 1
        %v1252 = vpop.permute.xlu0 %1251
        %1253 = vrot.lane.b32.xlu0 %v1250, 1
        %v1254 = vpop.permute.xlu0 %1253
        %v1257 = vadd.f32 %v1177, %v1252
        %v1258 = vadd.f32 %v1178, %v1254
        %v1259 = vstv %s292
        %v1260 = vmul.f32 %v1259, %v785
        %v1261 = vmul.f32 %v1259, %v786
        %v1262 = vmul.f32 %v1259, %v787
        %v1266 = vrot.slane %v1260, 3
        %v1267 = vrot.slane %v1261, 3
        %v1268 = vsel %vm747, %v1266, %v1267
        %v1269 = vrot.slane %v1262, 3
        %v1270 = vsel %vm747, %v1267, %v1269
        %1271 = vrot.lane.b32.xlu0 %v1268, 125
        %v1272 = vpop.permute.xlu0 %1271
        %1273 = vrot.lane.b32.xlu0 %v1270, 125
        %v1274 = vpop.permute.xlu0 %1273
        %v1277 = vadd.f32 %v1197, %v1272
        %v1278 = vadd.f32 %v1198, %v1274
        %v1279 = vstv %s293
        %v1280 = vmul.f32 %v1279, %v785
        %v1281 = vmul.f32 %v1279, %v786
        %v1282 = vmul.f32 %v1279, %v787
        %v1286 = vrot.slane %v1280, 3
        %v1287 = vrot.slane %v1281, 3
        %v1288 = vsel %vm747, %v1286, %v1287
        %v1289 = vrot.slane %v1282, 3
        %v1290 = vsel %vm747, %v1287, %v1289
        %1291 = vrot.lane.b32.xlu0 %v1288, 125
        %v1292 = vpop.permute.xlu0 %1291
        %1293 = vrot.lane.b32.xlu0 %v1290, 125
        %v1294 = vpop.permute.xlu0 %1293
        %v1297 = vadd.f32 %v1217, %v1292
        %v1298 = vadd.f32 %v1218, %v1294
        %v1299 = vstv %s294
        %v1300 = vmul.f32 %v1299, %v785
        %v1301 = vmul.f32 %v1299, %v786
        %v1302 = vmul.f32 %v1299, %v787
        %v1306 = vrot.slane %v1300, 3
        %v1307 = vrot.slane %v1301, 3
        %v1308 = vsel %vm747, %v1306, %v1307
        %v1309 = vrot.slane %v1302, 3
        %v1310 = vsel %vm747, %v1307, %v1309
        %1311 = vrot.lane.b32.xlu0 %v1308, 125
        %v1312 = vpop.permute.xlu0 %1311
        %1313 = vrot.lane.b32.xlu0 %v1310, 125
        %v1314 = vpop.permute.xlu0 %1313
        %v1317 = vadd.f32 %v1237, %v1312
        %v1318 = vadd.f32 %v1238, %v1314
        %v1319 = vstv %s295
        %v1320 = vmul.f32 %v1319, %v785
        %v1321 = vmul.f32 %v1319, %v786
        %v1322 = vmul.f32 %v1319, %v787
        %v1326 = vrot.slane %v1320, 3
        %v1327 = vrot.slane %v1321, 3
        %v1328 = vsel %vm747, %v1326, %v1327
        %v1329 = vrot.slane %v1322, 3
        %v1330 = vsel %vm747, %v1327, %v1329
        %1331 = vrot.lane.b32.xlu0 %v1328, 125
        %v1332 = vpop.permute.xlu0 %1331
        %1333 = vrot.lane.b32.xlu0 %v1330, 125
        %v1334 = vpop.permute.xlu0 %1333
        %v1337 = vadd.f32 %v1257, %v1332
        %v1338 = vadd.f32 %v1258, %v1334
        %v1339 = vstv %s296
        %v1340 = vmul.f32 %v1339, %v785
        %v1341 = vmul.f32 %v1339, %v786
        %v1342 = vmul.f32 %v1339, %v787
        %v1346 = vrot.slane %v1340, 4
        %v1347 = vrot.slane %v1341, 4
        %v1348 = vsel %vm745, %v1346, %v1347
        %v1349 = vrot.slane %v1342, 4
        %v1350 = vsel %vm745, %v1347, %v1349
        %v1353 = vadd.f32 %v1277, %v1348
        %v1354 = vadd.f32 %v1278, %v1350
        %v1355 = vstv %s297
        %v1356 = vmul.f32 %v1355, %v785
        %v1357 = vmul.f32 %v1355, %v786
        %v1358 = vmul.f32 %v1355, %v787
        %v1362 = vrot.slane %v1356, 4
        %v1363 = vrot.slane %v1357, 4
        %v1364 = vsel %vm745, %v1362, %v1363
        %v1365 = vrot.slane %v1358, 4
        %v1366 = vsel %vm745, %v1363, %v1365
        %v1369 = vadd.f32 %v1297, %v1364
        %v1370 = vadd.f32 %v1298, %v1366
        %v1371 = vstv %s298
        %v1372 = vmul.f32 %v1371, %v785
        %v1373 = vmul.f32 %v1371, %v786
        %v1374 = vmul.f32 %v1371, %v787
        %v1378 = vrot.slane %v1372, 4
        %v1379 = vrot.slane %v1373, 4
        %v1380 = vsel %vm745, %v1378, %v1379
        %v1381 = vrot.slane %v1374, 4
        %v1382 = vsel %vm745, %v1379, %v1381
        %v1385 = vadd.f32 %v1317, %v1380
        %v1386 = vadd.f32 %v1318, %v1382
        %v1387 = vstv %s299
        %v1388 = vmul.f32 %v1387, %v785
        %v1389 = vmul.f32 %v1387, %v786
        %v1390 = vmul.f32 %v1387, %v787
        %v1394 = vrot.slane %v1388, 4
        %v1395 = vrot.slane %v1389, 4
        %v1396 = vsel %vm745, %v1394, %v1395
        %v1397 = vrot.slane %v1390, 4
        %v1398 = vsel %vm745, %v1395, %v1397
        %v1401 = vadd.f32 %v1337, %v1396
        %v1402 = vadd.f32 %v1338, %v1398
        %v1403 = vstv %s300
        %v1404 = vmul.f32 %v1403, %v785
        %v1405 = vmul.f32 %v1403, %v786
        %v1406 = vmul.f32 %v1403, %v787
        %v1410 = vrot.slane %v1404, 4
        %v1411 = vrot.slane %v1405, 4
        %v1412 = vsel %vm745, %v1410, %v1411
        %v1413 = vrot.slane %v1406, 4
        %v1414 = vsel %vm745, %v1411, %v1413
        %1415 = vrot.lane.b32.xlu0 %v1412, 124
        %v1416 = vpop.permute.xlu0 %1415
        %1417 = vrot.lane.b32.xlu0 %v1414, 124
        %v1418 = vpop.permute.xlu0 %1417
        %v1421 = vadd.f32 %v1353, %v1416
        %v1422 = vadd.f32 %v1354, %v1418
        %v1423 = vstv %s301
        %v1424 = vmul.f32 %v1423, %v785
        %v1425 = vmul.f32 %v1423, %v786
        %v1426 = vmul.f32 %v1423, %v787
        %v1430 = vrot.slane %v1424, 4
        %v1431 = vrot.slane %v1425, 4
        %v1432 = vsel %vm745, %v1430, %v1431
        %v1433 = vrot.slane %v1426, 4
        %v1434 = vsel %vm745, %v1431, %v1433
        %1435 = vrot.lane.b32.xlu0 %v1432, 124
        %v1436 = vpop.permute.xlu0 %1435
        %1437 = vrot.lane.b32.xlu0 %v1434, 124
        %v1438 = vpop.permute.xlu0 %1437
        %v1441 = vadd.f32 %v1369, %v1436
        %v1442 = vadd.f32 %v1370, %v1438
        %v1443 = vstv %s302
        %v1444 = vmul.f32 %v1443, %v785
        %v1445 = vmul.f32 %v1443, %v786
        %v1446 = vmul.f32 %v1443, %v787
        %v1450 = vrot.slane %v1444, 4
        %v1451 = vrot.slane %v1445, 4
        %v1452 = vsel %vm745, %v1450, %v1451
        %v1453 = vrot.slane %v1446, 4
        %v1454 = vsel %vm745, %v1451, %v1453
        %1455 = vrot.lane.b32.xlu0 %v1452, 124
        %v1456 = vpop.permute.xlu0 %1455
        %1457 = vrot.lane.b32.xlu0 %v1454, 124
        %v1458 = vpop.permute.xlu0 %1457
        %v1461 = vadd.f32 %v1385, %v1456
        %v1462 = vadd.f32 %v1386, %v1458
        %v1463 = vstv %s303
        %v1464 = vmul.f32 %v1463, %v785
        %v1465 = vmul.f32 %v1463, %v786
        %v1466 = vmul.f32 %v1463, %v787
        %v1470 = vrot.slane %v1464, 5
        %v1471 = vrot.slane %v1465, 5
        %v1472 = vsel %vm743, %v1470, %v1471
        %v1473 = vrot.slane %v1466, 5
        %v1474 = vsel %vm743, %v1471, %v1473
        %1475 = vrot.lane.b32.xlu0 %v1472, 3
        %v1476 = vpop.permute.xlu0 %1475
        %1477 = vrot.lane.b32.xlu0 %v1474, 3
        %v1478 = vpop.permute.xlu0 %1477
        %v1481 = vadd.f32 %v1401, %v1476
        %v1482 = vadd.f32 %v1402, %v1478
        %v1483 = vstv %s304
        %v1484 = vmul.f32 %v1483, %v785
        %v1485 = vmul.f32 %v1483, %v786
        %v1486 = vmul.f32 %v1483, %v787
        %v1490 = vrot.slane %v1484, 5
        %v1491 = vrot.slane %v1485, 5
        %v1492 = vsel %vm743, %v1490, %v1491
        %v1493 = vrot.slane %v1486, 5
        %v1494 = vsel %vm743, %v1491, %v1493
        %1495 = vrot.lane.b32.xlu0 %v1492, 127
        %v1496 = vpop.permute.xlu0 %1495
        %1497 = vrot.lane.b32.xlu0 %v1494, 127
        %v1498 = vpop.permute.xlu0 %1497
        %v1501 = vadd.f32 %v1421, %v1496
        %v1502 = vadd.f32 %v1422, %v1498
        %v1503 = vstv %s305
        %v1504 = vmul.f32 %v1503, %v785
        %v1505 = vmul.f32 %v1503, %v786
        %v1506 = vmul.f32 %v1503, %v787
        %v1510 = vrot.slane %v1504, 5
        %v1511 = vrot.slane %v1505, 5
        %v1512 = vsel %vm743, %v1510, %v1511
        %v1513 = vrot.slane %v1506, 5
        %v1514 = vsel %vm743, %v1511, %v1513
        %1515 = vrot.lane.b32.xlu0 %v1512, 127
        %v1516 = vpop.permute.xlu0 %1515
        %1517 = vrot.lane.b32.xlu0 %v1514, 127
        %v1518 = vpop.permute.xlu0 %1517
        %v1521 = vadd.f32 %v1441, %v1516
        %v1522 = vadd.f32 %v1442, %v1518
        %v1523 = vstv %s306
        %v1524 = vmul.f32 %v1523, %v785
        %v1525 = vmul.f32 %v1523, %v786
        %v1526 = vmul.f32 %v1523, %v787
        %v1530 = vrot.slane %v1524, 5
        %v1531 = vrot.slane %v1525, 5
        %v1532 = vsel %vm743, %v1530, %v1531
        %v1533 = vrot.slane %v1526, 5
        %v1534 = vsel %vm743, %v1531, %v1533
        %1535 = vrot.lane.b32.xlu0 %v1532, 127
        %v1536 = vpop.permute.xlu0 %1535
        %1537 = vrot.lane.b32.xlu0 %v1534, 127
        %v1538 = vpop.permute.xlu0 %1537
        %v1541 = vadd.f32 %v1461, %v1536
        %v1542 = vadd.f32 %v1462, %v1538
        %v1543 = vstv %s307
        %v1544 = vmul.f32 %v1543, %v785
        %v1545 = vmul.f32 %v1543, %v786
        %v1546 = vmul.f32 %v1543, %v787
        %v1550 = vrot.slane %v1544, 5
        %v1551 = vrot.slane %v1545, 5
        %v1552 = vsel %vm743, %v1550, %v1551
        %v1553 = vrot.slane %v1546, 5
        %v1554 = vsel %vm743, %v1551, %v1553
        %1555 = vrot.lane.b32.xlu0 %v1552, 127
        %v1556 = vpop.permute.xlu0 %1555
        %1557 = vrot.lane.b32.xlu0 %v1554, 127
        %v1558 = vpop.permute.xlu0 %1557
        %v1561 = vadd.f32 %v1481, %v1556
        %v1562 = vadd.f32 %v1482, %v1558
        %v1563 = vstv %s308
        %v1564 = vmul.f32 %v1563, %v785
        %v1565 = vmul.f32 %v1563, %v786
        %v1566 = vmul.f32 %v1563, %v787
        %v1570 = vrot.slane %v1564, 5
        %v1571 = vrot.slane %v1565, 5
        %v1572 = vsel %vm743, %v1570, %v1571
        %v1573 = vrot.slane %v1566, 5
        %v1574 = vsel %vm743, %v1571, %v1573
        %1575 = vrot.lane.b32.xlu0 %v1572, 123
        %v1576 = vpop.permute.xlu0 %1575
        %1577 = vrot.lane.b32.xlu0 %v1574, 123
        %v1578 = vpop.permute.xlu0 %1577
        %v1581 = vadd.f32 %v1501, %v1576
        %v1582 = vadd.f32 %v1502, %v1578
        %v1583 = vstv %s309
        %v1584 = vmul.f32 %v1583, %v785
        %v1585 = vmul.f32 %v1583, %v786
        %v1586 = vmul.f32 %v1583, %v787
        %v1590 = vrot.slane %v1584, 5
        %v1591 = vrot.slane %v1585, 5
        %v1592 = vsel %vm743, %v1590, %v1591
        %v1593 = vrot.slane %v1586, 5
        %v1594 = vsel %vm743, %v1591, %v1593
        %1595 = vrot.lane.b32.xlu0 %v1592, 123
        %v1596 = vpop.permute.xlu0 %1595
        %1597 = vrot.lane.b32.xlu0 %v1594, 123
        %v1598 = vpop.permute.xlu0 %1597
        %v1601 = vadd.f32 %v1521, %v1596
        %v1602 = vadd.f32 %v1522, %v1598
        %v1603 = vstv %s310
        %v1604 = vmul.f32 %v1603, %v785
        %v1605 = vmul.f32 %v1603, %v786
        %v1606 = vmul.f32 %v1603, %v787
        %v1610 = vrot.slane %v1604, 6
        %v1611 = vrot.slane %v1605, 6
        %v1612 = vsel %vm754, %v1610, %v1611
        %v1613 = vrot.slane %v1606, 6
        %v1614 = vsel %vm754, %v1611, %v1613
        %1615 = vrot.lane.b32.xlu0 %v1612, 2
        %v1616 = vpop.permute.xlu0 %1615
        %1617 = vrot.lane.b32.xlu0 %v1614, 2
        %v1618 = vpop.permute.xlu0 %1617
        %v1621 = vadd.f32 %v1541, %v1616
        %v1622 = vadd.f32 %v1542, %v1618
        %v1623 = vstv %s311
        %v1624 = vmul.f32 %v1623, %v785
        %v1625 = vmul.f32 %v1623, %v786
        %v1626 = vmul.f32 %v1623, %v787
        %v1630 = vrot.slane %v1624, 6
        %v1631 = vrot.slane %v1625, 6
        %v1632 = vsel %vm754, %v1630, %v1631
        %v1633 = vrot.slane %v1626, 6
        %v1634 = vsel %vm754, %v1631, %v1633
        %1635 = vrot.lane.b32.xlu0 %v1632, 2
        %v1636 = vpop.permute.xlu0 %1635
        %1637 = vrot.lane.b32.xlu0 %v1634, 2
        %v1638 = vpop.permute.xlu0 %1637
        %v1641 = vadd.f32 %v1561, %v1636
        %v1642 = vadd.f32 %v1562, %v1638
        %v1643 = vstv %s312
        %v1644 = vmul.f32 %v1643, %v785
        %v1645 = vmul.f32 %v1643, %v786
        %v1646 = vmul.f32 %v1643, %v787
        %v1650 = vrot.slane %v1644, 6
        %v1651 = vrot.slane %v1645, 6
        %v1652 = vsel %vm754, %v1650, %v1651
        %v1653 = vrot.slane %v1646, 6
        %v1654 = vsel %vm754, %v1651, %v1653
        %1655 = vrot.lane.b32.xlu0 %v1652, 126
        %v1656 = vpop.permute.xlu0 %1655
        %1657 = vrot.lane.b32.xlu0 %v1654, 126
        %v1658 = vpop.permute.xlu0 %1657
        %v1661 = vadd.f32 %v1581, %v1656
        %v1662 = vadd.f32 %v1582, %v1658
        %v1663 = vstv %s313
        %v1664 = vmul.f32 %v1663, %v785
        %v1665 = vmul.f32 %v1663, %v786
        %v1666 = vmul.f32 %v1663, %v787
        %v1670 = vrot.slane %v1664, 6
        %v1671 = vrot.slane %v1665, 6
        %v1672 = vsel %vm754, %v1670, %v1671
        %v1673 = vrot.slane %v1666, 6
        %v1674 = vsel %vm754, %v1671, %v1673
        %1675 = vrot.lane.b32.xlu0 %v1672, 126
        %v1676 = vpop.permute.xlu0 %1675
        %1677 = vrot.lane.b32.xlu0 %v1674, 126
        %v1678 = vpop.permute.xlu0 %1677
        %v1681 = vadd.f32 %v1601, %v1676
        %v1682 = vadd.f32 %v1602, %v1678
        %v1683 = vstv %s314
        %v1684 = vmul.f32 %v1683, %v785
        %v1685 = vmul.f32 %v1683, %v786
        %v1686 = vmul.f32 %v1683, %v787
        %v1690 = vrot.slane %v1684, 6
        %v1691 = vrot.slane %v1685, 6
        %v1692 = vsel %vm754, %v1690, %v1691
        %v1693 = vrot.slane %v1686, 6
        %v1694 = vsel %vm754, %v1691, %v1693
        %1695 = vrot.lane.b32.xlu0 %v1692, 126
        %v1696 = vpop.permute.xlu0 %1695
        %1697 = vrot.lane.b32.xlu0 %v1694, 126
        %v1698 = vpop.permute.xlu0 %1697
        %v1701 = vadd.f32 %v1621, %v1696
        %v1702 = vadd.f32 %v1622, %v1698
        %v1703 = vstv %s315
        %v1704 = vmul.f32 %v1703, %v785
        %v1705 = vmul.f32 %v1703, %v786
        %v1706 = vmul.f32 %v1703, %v787
        %v1710 = vrot.slane %v1704, 6
        %v1711 = vrot.slane %v1705, 6
        %v1712 = vsel %vm754, %v1710, %v1711
        %v1713 = vrot.slane %v1706, 6
        %v1714 = vsel %vm754, %v1711, %v1713
        %1715 = vrot.lane.b32.xlu0 %v1712, 126
        %v1716 = vpop.permute.xlu0 %1715
        %1717 = vrot.lane.b32.xlu0 %v1714, 126
        %v1718 = vpop.permute.xlu0 %1717
        %v1721 = vadd.f32 %v1641, %v1716
        %v1722 = vadd.f32 %v1642, %v1718
        %v1723 = vstv %s316
        %v1724 = vmul.f32 %v1723, %v785
        %v1725 = vmul.f32 %v1723, %v786
        %v1726 = vmul.f32 %v1723, %v787
        %v1730 = vrot.slane %v1724, 6
        %v1731 = vrot.slane %v1725, 6
        %v1732 = vsel %vm754, %v1730, %v1731
        %v1733 = vrot.slane %v1726, 6
        %v1734 = vsel %vm754, %v1731, %v1733
        %1735 = vrot.lane.b32.xlu0 %v1732, 122
        %v1736 = vpop.permute.xlu0 %1735
        %1737 = vrot.lane.b32.xlu0 %v1734, 122
        %v1738 = vpop.permute.xlu0 %1737
        %v1741 = vadd.f32 %v1661, %v1736
        %v1742 = vadd.f32 %v1662, %v1738
        %v1743 = vstv %s317
        %v1744 = vmul.f32 %v1743, %v857
        %v1745 = vmul.f32 %v1743, %v858
        %1748 = vrot.lane.b32.xlu0 %v1744, 1
        %v1749 = vpop.permute.xlu0 %1748
        %1750 = vrot.lane.b32.xlu0 %v1745, 1
        %v1751 = vpop.permute.xlu0 %1750
        %v1754 = vadd.f32 %v1681, %v1749
        %v1755 = vadd.f32 %v1682, %v1751
        %v1756 = vstv %s318
        %v1757 = vmul.f32 %v1756, %v857
        %v1758 = vmul.f32 %v1756, %v858
        %1761 = vrot.lane.b32.xlu0 %v1757, 1
        %v1762 = vpop.permute.xlu0 %1761
        %1763 = vrot.lane.b32.xlu0 %v1758, 1
        %v1764 = vpop.permute.xlu0 %1763
        %v1767 = vadd.f32 %v1701, %v1762
        %v1768 = vadd.f32 %v1702, %v1764
        %v1769 = vstv %s319
        %v1770 = vmul.f32 %v1769, %v857
        %v1771 = vmul.f32 %v1769, %v858
        %1774 = vrot.lane.b32.xlu0 %v1770, 1
        %v1775 = vpop.permute.xlu0 %1774
        %1776 = vrot.lane.b32.xlu0 %v1771, 1
        %v1777 = vpop.permute.xlu0 %1776
        %v1780 = vadd.f32 %v1721, %v1775
        %v1781 = vadd.f32 %v1722, %v1777
        %v1782 = vstv %s320
        %v1783 = vmul.f32 %v1782, %v857
        %v1784 = vmul.f32 %v1782, %v858
        %1787 = vrot.lane.b32.xlu0 %v1783, 125
        %v1788 = vpop.permute.xlu0 %1787
        %1789 = vrot.lane.b32.xlu0 %v1784, 125
        %v1790 = vpop.permute.xlu0 %1789
        %v1793 = vadd.f32 %v1741, %v1788
        %v1794 = vadd.f32 %v1742, %v1790
        %v1795 = vstv %s321
        %v1796 = vmul.f32 %v1795, %v857
        %v1797 = vmul.f32 %v1795, %v858
        %1800 = vrot.lane.b32.xlu0 %v1796, 125
        %v1801 = vpop.permute.xlu0 %1800
        %1802 = vrot.lane.b32.xlu0 %v1797, 125
        %v1803 = vpop.permute.xlu0 %1802
        %v1806 = vadd.f32 %v1754, %v1801
        %v1807 = vadd.f32 %v1755, %v1803
        %v1808 = vstv %s322
        %v1809 = vmul.f32 %v1808, %v857
        %v1810 = vmul.f32 %v1808, %v858
        %1813 = vrot.lane.b32.xlu0 %v1809, 125
        %v1814 = vpop.permute.xlu0 %1813
        %1815 = vrot.lane.b32.xlu0 %v1810, 125
        %v1816 = vpop.permute.xlu0 %1815
        %v1819 = vadd.f32 %v1767, %v1814
        %v1820 = vadd.f32 %v1768, %v1816
        %v1821 = vstv %s323
        %v1822 = vmul.f32 %v1821, %v857
        %v1823 = vmul.f32 %v1821, %v858
        %1826 = vrot.lane.b32.xlu0 %v1822, 125
        %v1827 = vpop.permute.xlu0 %1826
        %1828 = vrot.lane.b32.xlu0 %v1823, 125
        %v1829 = vpop.permute.xlu0 %1828
        %v1832 = vadd.f32 %v1780, %v1827
        %v1833 = vadd.f32 %v1781, %v1829
        %v1834 = vstv %s324
        %v1835 = vmul.f32 %v1834, %v857
        %v1836 = vmul.f32 %v1834, %v858
        %v1837 = vmul.f32 %v1834, %v859
        %v1841 = vrot.slane %v1835, 1
        %v1842 = vrot.slane %v1836, 1
        %v1843 = vsel %vm751, %v1841, %v1842
        %v1844 = vrot.slane %v1837, 1
        %v1845 = vsel %vm751, %v1842, %v1844
        %v1848 = vadd.f32 %v1793, %v1843
        %v1849 = vadd.f32 %v1794, %v1845
        %v1850 = vstv %s325
        %v1851 = vmul.f32 %v1850, %v857
        %v1852 = vmul.f32 %v1850, %v858
        %v1853 = vmul.f32 %v1850, %v859
        %v1857 = vrot.slane %v1851, 1
        %v1858 = vrot.slane %v1852, 1
        %v1859 = vsel %vm751, %v1857, %v1858
        %v1860 = vrot.slane %v1853, 1
        %v1861 = vsel %vm751, %v1858, %v1860
        %v1864 = vadd.f32 %v1806, %v1859
        %v1865 = vadd.f32 %v1807, %v1861
        %v1866 = vstv %s326
        %v1867 = vmul.f32 %v1866, %v857
        %v1868 = vmul.f32 %v1866, %v858
        %v1869 = vmul.f32 %v1866, %v859
        %v1873 = vrot.slane %v1867, 1
        %v1874 = vrot.slane %v1868, 1
        %v1875 = vsel %vm751, %v1873, %v1874
        %v1876 = vrot.slane %v1869, 1
        %v1877 = vsel %vm751, %v1874, %v1876
        %v1880 = vadd.f32 %v1819, %v1875
        %v1881 = vadd.f32 %v1820, %v1877
        %v1882 = vstv %s327
        %v1883 = vmul.f32 %v1882, %v857
        %v1884 = vmul.f32 %v1882, %v858
        %v1885 = vmul.f32 %v1882, %v859
        %v1889 = vrot.slane %v1883, 1
        %v1890 = vrot.slane %v1884, 1
        %v1891 = vsel %vm751, %v1889, %v1890
        %v1892 = vrot.slane %v1885, 1
        %v1893 = vsel %vm751, %v1890, %v1892
        %v1896 = vadd.f32 %v1832, %v1891
        %v1897 = vadd.f32 %v1833, %v1893
        %v1898 = vstv %s328
        %v1899 = vmul.f32 %v1898, %v857
        %v1900 = vmul.f32 %v1898, %v858
        %v1901 = vmul.f32 %v1898, %v859
        %v1905 = vrot.slane %v1899, 1
        %v1906 = vrot.slane %v1900, 1
        %v1907 = vsel %vm751, %v1905, %v1906
        %v1908 = vrot.slane %v1901, 1
        %v1909 = vsel %vm751, %v1906, %v1908
        %1910 = vrot.lane.b32.xlu0 %v1907, 124
        %v1911 = vpop.permute.xlu0 %1910
        %1912 = vrot.lane.b32.xlu0 %v1909, 124
        %v1913 = vpop.permute.xlu0 %1912
        %v1916 = vadd.f32 %v1848, %v1911
        %v1917 = vadd.f32 %v1849, %v1913
        %v1918 = vstv %s329
        %v1919 = vmul.f32 %v1918, %v857
        %v1920 = vmul.f32 %v1918, %v858
        %v1921 = vmul.f32 %v1918, %v859
        %v1925 = vrot.slane %v1919, 1
        %v1926 = vrot.slane %v1920, 1
        %v1927 = vsel %vm751, %v1925, %v1926
        %v1928 = vrot.slane %v1921, 1
        %v1929 = vsel %vm751, %v1926, %v1928
        %1930 = vrot.lane.b32.xlu0 %v1927, 124
        %v1931 = vpop.permute.xlu0 %1930
        %1932 = vrot.lane.b32.xlu0 %v1929, 124
        %v1933 = vpop.permute.xlu0 %1932
        %v1936 = vadd.f32 %v1864, %v1931
        %v1937 = vadd.f32 %v1865, %v1933
        %v1938 = vstv %s330
        %v1939 = vmul.f32 %v1938, %v857
        %v1940 = vmul.f32 %v1938, %v858
        %v1941 = vmul.f32 %v1938, %v859
        %v1945 = vrot.slane %v1939, 1
        %v1946 = vrot.slane %v1940, 1
        %v1947 = vsel %vm751, %v1945, %v1946
        %v1948 = vrot.slane %v1941, 1
        %v1949 = vsel %vm751, %v1946, %v1948
        %1950 = vrot.lane.b32.xlu0 %v1947, 124
        %v1951 = vpop.permute.xlu0 %1950
        %1952 = vrot.lane.b32.xlu0 %v1949, 124
        %v1953 = vpop.permute.xlu0 %1952
        %v1956 = vadd.f32 %v1880, %v1951
        %v1957 = vadd.f32 %v1881, %v1953
        %v1958 = vstv %s331
        %v1959 = vmul.f32 %v1958, %v857
        %v1960 = vmul.f32 %v1958, %v858
        %v1961 = vmul.f32 %v1958, %v859
        %v1965 = vrot.slane %v1959, 2
        %v1966 = vrot.slane %v1960, 2
        %v1967 = vsel %vm749, %v1965, %v1966
        %v1968 = vrot.slane %v1961, 2
        %v1969 = vsel %vm749, %v1966, %v1968
        %1970 = vrot.lane.b32.xlu0 %v1967, 3
        %v1971 = vpop.permute.xlu0 %1970
        %1972 = vrot.lane.b32.xlu0 %v1969, 3
        %v1973 = vpop.permute.xlu0 %1972
        %v1976 = vadd.f32 %v1896, %v1971
        %v1977 = vadd.f32 %v1897, %v1973
        %v1978 = vstv %s332
        %v1979 = vmul.f32 %v1978, %v857
        %v1980 = vmul.f32 %v1978, %v858
        %v1981 = vmul.f32 %v1978, %v859
        %v1985 = vrot.slane %v1979, 2
        %v1986 = vrot.slane %v1980, 2
        %v1987 = vsel %vm749, %v1985, %v1986
        %v1988 = vrot.slane %v1981, 2
        %v1989 = vsel %vm749, %v1986, %v1988
        %1990 = vrot.lane.b32.xlu0 %v1987, 127
        %v1991 = vpop.permute.xlu0 %1990
        %1992 = vrot.lane.b32.xlu0 %v1989, 127
        %v1993 = vpop.permute.xlu0 %1992
        %v1996 = vadd.f32 %v1916, %v1991
        %v1997 = vadd.f32 %v1917, %v1993
        %v1998 = vstv %s333
        %v1999 = vmul.f32 %v1998, %v857
        %v2000 = vmul.f32 %v1998, %v858
        %v2001 = vmul.f32 %v1998, %v859
        %v2005 = vrot.slane %v1999, 2
        %v2006 = vrot.slane %v2000, 2
        %v2007 = vsel %vm749, %v2005, %v2006
        %v2008 = vrot.slane %v2001, 2
        %v2009 = vsel %vm749, %v2006, %v2008
        %2010 = vrot.lane.b32.xlu0 %v2007, 127
        %v2011 = vpop.permute.xlu0 %2010
        %2012 = vrot.lane.b32.xlu0 %v2009, 127
        %v2013 = vpop.permute.xlu0 %2012
        %v2016 = vadd.f32 %v1936, %v2011
        %v2017 = vadd.f32 %v1937, %v2013
        %v2018 = vstv %s334
        %v2019 = vmul.f32 %v2018, %v857
        %v2020 = vmul.f32 %v2018, %v858
        %v2021 = vmul.f32 %v2018, %v859
        %v2025 = vrot.slane %v2019, 2
        %v2026 = vrot.slane %v2020, 2
        %v2027 = vsel %vm749, %v2025, %v2026
        %v2028 = vrot.slane %v2021, 2
        %v2029 = vsel %vm749, %v2026, %v2028
        %2030 = vrot.lane.b32.xlu0 %v2027, 127
        %v2031 = vpop.permute.xlu0 %2030
        %2032 = vrot.lane.b32.xlu0 %v2029, 127
        %v2033 = vpop.permute.xlu0 %2032
        %v2036 = vadd.f32 %v1956, %v2031
        %v2037 = vadd.f32 %v1957, %v2033
        %v2038 = vstv %s335
        %v2039 = vmul.f32 %v2038, %v857
        %v2040 = vmul.f32 %v2038, %v858
        %v2041 = vmul.f32 %v2038, %v859
        %v2045 = vrot.slane %v2039, 2
        %v2046 = vrot.slane %v2040, 2
        %v2047 = vsel %vm749, %v2045, %v2046
        %v2048 = vrot.slane %v2041, 2
        %v2049 = vsel %vm749, %v2046, %v2048
        %2050 = vrot.lane.b32.xlu0 %v2047, 127
        %v2051 = vpop.permute.xlu0 %2050
        %2052 = vrot.lane.b32.xlu0 %v2049, 127
        %v2053 = vpop.permute.xlu0 %2052
        %v2056 = vadd.f32 %v1976, %v2051
        %v2057 = vadd.f32 %v1977, %v2053
        %v2058 = vstv %s336
        %v2059 = vmul.f32 %v2058, %v857
        %v2060 = vmul.f32 %v2058, %v858
        %v2061 = vmul.f32 %v2058, %v859
        %v2065 = vrot.slane %v2059, 2
        %v2066 = vrot.slane %v2060, 2
        %v2067 = vsel %vm749, %v2065, %v2066
        %v2068 = vrot.slane %v2061, 2
        %v2069 = vsel %vm749, %v2066, %v2068
        %2070 = vrot.lane.b32.xlu0 %v2067, 123
        %v2071 = vpop.permute.xlu0 %2070
        %2072 = vrot.lane.b32.xlu0 %v2069, 123
        %v2073 = vpop.permute.xlu0 %2072
        %v2076 = vadd.f32 %v1996, %v2071
        %v2077 = vadd.f32 %v1997, %v2073
        %v2078 = vstv %s337
        %v2079 = vmul.f32 %v2078, %v857
        %v2080 = vmul.f32 %v2078, %v858
        %v2081 = vmul.f32 %v2078, %v859
        %v2085 = vrot.slane %v2079, 2
        %v2086 = vrot.slane %v2080, 2
        %v2087 = vsel %vm749, %v2085, %v2086
        %v2088 = vrot.slane %v2081, 2
        %v2089 = vsel %vm749, %v2086, %v2088
        %2090 = vrot.lane.b32.xlu0 %v2087, 123
        %v2091 = vpop.permute.xlu0 %2090
        %2092 = vrot.lane.b32.xlu0 %v2089, 123
        %v2093 = vpop.permute.xlu0 %2092
        %v2096 = vadd.f32 %v2016, %v2091
        %v2097 = vadd.f32 %v2017, %v2093
        %v2098 = vstv %s338
        %v2099 = vmul.f32 %v2098, %v857
        %v2100 = vmul.f32 %v2098, %v858
        %v2101 = vmul.f32 %v2098, %v859
        %v2105 = vrot.slane %v2099, 3
        %v2106 = vrot.slane %v2100, 3
        %v2107 = vsel %vm747, %v2105, %v2106
        %v2108 = vrot.slane %v2101, 3
        %v2109 = vsel %vm747, %v2106, %v2108
        %2110 = vrot.lane.b32.xlu0 %v2107, 2
        %v2111 = vpop.permute.xlu0 %2110
        %2112 = vrot.lane.b32.xlu0 %v2109, 2
        %v2113 = vpop.permute.xlu0 %2112
        %v2116 = vadd.f32 %v2036, %v2111
        %v2117 = vadd.f32 %v2037, %v2113
        %v2118 = vstv %s339
        %v2119 = vmul.f32 %v2118, %v857
        %v2120 = vmul.f32 %v2118, %v858
        %v2121 = vmul.f32 %v2118, %v859
        %v2125 = vrot.slane %v2119, 3
        %v2126 = vrot.slane %v2120, 3
        %v2127 = vsel %vm747, %v2125, %v2126
        %v2128 = vrot.slane %v2121, 3
        %v2129 = vsel %vm747, %v2126, %v2128
        %2130 = vrot.lane.b32.xlu0 %v2127, 2
        %v2131 = vpop.permute.xlu0 %2130
        %2132 = vrot.lane.b32.xlu0 %v2129, 2
        %v2133 = vpop.permute.xlu0 %2132
        %v2136 = vadd.f32 %v2056, %v2131
        %v2137 = vadd.f32 %v2057, %v2133
        %v2138 = vstv %s340
        %v2139 = vmul.f32 %v2138, %v857
        %v2140 = vmul.f32 %v2138, %v858
        %v2141 = vmul.f32 %v2138, %v859
        %v2145 = vrot.slane %v2139, 3
        %v2146 = vrot.slane %v2140, 3
        %v2147 = vsel %vm747, %v2145, %v2146
        %v2148 = vrot.slane %v2141, 3
        %v2149 = vsel %vm747, %v2146, %v2148
        %2150 = vrot.lane.b32.xlu0 %v2147, 126
        %v2151 = vpop.permute.xlu0 %2150
        %2152 = vrot.lane.b32.xlu0 %v2149, 126
        %v2153 = vpop.permute.xlu0 %2152
        %v2156 = vadd.f32 %v2076, %v2151
        %v2157 = vadd.f32 %v2077, %v2153
        %v2158 = vstv %s341
        %v2159 = vmul.f32 %v2158, %v857
        %v2160 = vmul.f32 %v2158, %v858
        %v2161 = vmul.f32 %v2158, %v859
        %v2165 = vrot.slane %v2159, 3
        %v2166 = vrot.slane %v2160, 3
        %v2167 = vsel %vm747, %v2165, %v2166
        %v2168 = vrot.slane %v2161, 3
        %v2169 = vsel %vm747, %v2166, %v2168
        %2170 = vrot.lane.b32.xlu0 %v2167, 126
        %v2171 = vpop.permute.xlu0 %2170
        %2172 = vrot.lane.b32.xlu0 %v2169, 126
        %v2173 = vpop.permute.xlu0 %2172
        %v2176 = vadd.f32 %v2096, %v2171
        %v2177 = vadd.f32 %v2097, %v2173
        %v2178 = vstv %s342
        %v2179 = vmul.f32 %v2178, %v857
        %v2180 = vmul.f32 %v2178, %v858
        %v2181 = vmul.f32 %v2178, %v859
        %v2185 = vrot.slane %v2179, 3
        %v2186 = vrot.slane %v2180, 3
        %v2187 = vsel %vm747, %v2185, %v2186
        %v2188 = vrot.slane %v2181, 3
        %v2189 = vsel %vm747, %v2186, %v2188
        %2190 = vrot.lane.b32.xlu0 %v2187, 126
        %v2191 = vpop.permute.xlu0 %2190
        %2192 = vrot.lane.b32.xlu0 %v2189, 126
        %v2193 = vpop.permute.xlu0 %2192
        %v2196 = vadd.f32 %v2116, %v2191
        %v2197 = vadd.f32 %v2117, %v2193
        %v2198 = vstv %s343
        %v2199 = vmul.f32 %v2198, %v857
        %v2200 = vmul.f32 %v2198, %v858
        %v2201 = vmul.f32 %v2198, %v859
        %v2205 = vrot.slane %v2199, 3
        %v2206 = vrot.slane %v2200, 3
        %v2207 = vsel %vm747, %v2205, %v2206
        %v2208 = vrot.slane %v2201, 3
        %v2209 = vsel %vm747, %v2206, %v2208
        %2210 = vrot.lane.b32.xlu0 %v2207, 126
        %v2211 = vpop.permute.xlu0 %2210
        %2212 = vrot.lane.b32.xlu0 %v2209, 126
        %v2213 = vpop.permute.xlu0 %2212
        %v2216 = vadd.f32 %v2136, %v2211
        %v2217 = vadd.f32 %v2137, %v2213
        %v2218 = vstv %s344
        %v2219 = vmul.f32 %v2218, %v857
        %v2220 = vmul.f32 %v2218, %v858
        %v2221 = vmul.f32 %v2218, %v859
        %v2225 = vrot.slane %v2219, 3
        %v2226 = vrot.slane %v2220, 3
        %v2227 = vsel %vm747, %v2225, %v2226
        %v2228 = vrot.slane %v2221, 3
        %v2229 = vsel %vm747, %v2226, %v2228
        %2230 = vrot.lane.b32.xlu0 %v2227, 122
        %v2231 = vpop.permute.xlu0 %2230
        %2232 = vrot.lane.b32.xlu0 %v2229, 122
        %v2233 = vpop.permute.xlu0 %2232
        %v2236 = vadd.f32 %v2156, %v2231
        %v2237 = vadd.f32 %v2157, %v2233
        %v2238 = vstv %s345
        %v2239 = vmul.f32 %v2238, %v857
        %v2240 = vmul.f32 %v2238, %v858
        %v2241 = vmul.f32 %v2238, %v859
        %v2245 = vrot.slane %v2239, 4
        %v2246 = vrot.slane %v2240, 4
        %v2247 = vsel %vm745, %v2245, %v2246
        %v2248 = vrot.slane %v2241, 4
        %v2249 = vsel %vm745, %v2246, %v2248
        %2250 = vrot.lane.b32.xlu0 %v2247, 1
        %v2251 = vpop.permute.xlu0 %2250
        %2252 = vrot.lane.b32.xlu0 %v2249, 1
        %v2253 = vpop.permute.xlu0 %2252
        %v2256 = vadd.f32 %v2176, %v2251
        %v2257 = vadd.f32 %v2177, %v2253
        %v2258 = vstv %s346
        %v2259 = vmul.f32 %v2258, %v857
        %v2260 = vmul.f32 %v2258, %v858
        %v2261 = vmul.f32 %v2258, %v859
        %v2265 = vrot.slane %v2259, 4
        %v2266 = vrot.slane %v2260, 4
        %v2267 = vsel %vm745, %v2265, %v2266
        %v2268 = vrot.slane %v2261, 4
        %v2269 = vsel %vm745, %v2266, %v2268
        %2270 = vrot.lane.b32.xlu0 %v2267, 1
        %v2271 = vpop.permute.xlu0 %2270
        %2272 = vrot.lane.b32.xlu0 %v2269, 1
        %v2273 = vpop.permute.xlu0 %2272
        %v2276 = vadd.f32 %v2196, %v2271
        %v2277 = vadd.f32 %v2197, %v2273
        %v2278 = vstv %s347
        %v2279 = vmul.f32 %v2278, %v857
        %v2280 = vmul.f32 %v2278, %v858
        %v2281 = vmul.f32 %v2278, %v859
        %v2285 = vrot.slane %v2279, 4
        %v2286 = vrot.slane %v2280, 4
        %v2287 = vsel %vm745, %v2285, %v2286
        %v2288 = vrot.slane %v2281, 4
        %v2289 = vsel %vm745, %v2286, %v2288
        %2290 = vrot.lane.b32.xlu0 %v2287, 1
        %v2291 = vpop.permute.xlu0 %2290
        %2292 = vrot.lane.b32.xlu0 %v2289, 1
        %v2293 = vpop.permute.xlu0 %2292
        %v2296 = vadd.f32 %v2216, %v2291
        %v2297 = vadd.f32 %v2217, %v2293
        %v2298 = vstv %s348
        %v2299 = vmul.f32 %v2298, %v857
        %v2300 = vmul.f32 %v2298, %v858
        %v2301 = vmul.f32 %v2298, %v859
        %v2305 = vrot.slane %v2299, 4
        %v2306 = vrot.slane %v2300, 4
        %v2307 = vsel %vm745, %v2305, %v2306
        %v2308 = vrot.slane %v2301, 4
        %v2309 = vsel %vm745, %v2306, %v2308
        %2310 = vrot.lane.b32.xlu0 %v2307, 125
        %v2311 = vpop.permute.xlu0 %2310
        %2312 = vrot.lane.b32.xlu0 %v2309, 125
        %v2313 = vpop.permute.xlu0 %2312
        %v2316 = vadd.f32 %v2236, %v2311
        %v2317 = vadd.f32 %v2237, %v2313
        %v2318 = vstv %s349
        %v2319 = vmul.f32 %v2318, %v857
        %v2320 = vmul.f32 %v2318, %v858
        %v2321 = vmul.f32 %v2318, %v859
        %v2325 = vrot.slane %v2319, 4
        %v2326 = vrot.slane %v2320, 4
        %v2327 = vsel %vm745, %v2325, %v2326
        %v2328 = vrot.slane %v2321, 4
        %v2329 = vsel %vm745, %v2326, %v2328
        %2330 = vrot.lane.b32.xlu0 %v2327, 125
        %v2331 = vpop.permute.xlu0 %2330
        %2332 = vrot.lane.b32.xlu0 %v2329, 125
        %v2333 = vpop.permute.xlu0 %2332
        %v2336 = vadd.f32 %v2256, %v2331
        %v2337 = vadd.f32 %v2257, %v2333
        %v2338 = vstv %s350
        %v2339 = vmul.f32 %v2338, %v857
        %v2340 = vmul.f32 %v2338, %v858
        %v2341 = vmul.f32 %v2338, %v859
        %v2345 = vrot.slane %v2339, 4
        %v2346 = vrot.slane %v2340, 4
        %v2347 = vsel %vm745, %v2345, %v2346
        %v2348 = vrot.slane %v2341, 4
        %v2349 = vsel %vm745, %v2346, %v2348
        %2350 = vrot.lane.b32.xlu0 %v2347, 125
        %v2351 = vpop.permute.xlu0 %2350
        %2352 = vrot.lane.b32.xlu0 %v2349, 125
        %v2353 = vpop.permute.xlu0 %2352
        %v2356 = vadd.f32 %v2276, %v2351
        %v2357 = vadd.f32 %v2277, %v2353
        %v2358 = vstv %s351
        %v2359 = vmul.f32 %v2358, %v857
        %v2360 = vmul.f32 %v2358, %v858
        %v2361 = vmul.f32 %v2358, %v859
        %v2365 = vrot.slane %v2359, 4
        %v2366 = vrot.slane %v2360, 4
        %v2367 = vsel %vm745, %v2365, %v2366
        %v2368 = vrot.slane %v2361, 4
        %v2369 = vsel %vm745, %v2366, %v2368
        %2370 = vrot.lane.b32.xlu0 %v2367, 125
        %v2371 = vpop.permute.xlu0 %2370
        %2372 = vrot.lane.b32.xlu0 %v2369, 125
        %v2373 = vpop.permute.xlu0 %2372
        %v2376 = vadd.f32 %v2296, %v2371
        %v2377 = vadd.f32 %v2297, %v2373
        %v2378 = vstv %s352
        %v2379 = vmul.f32 %v2378, %v857
        %v2380 = vmul.f32 %v2378, %v858
        %v2381 = vmul.f32 %v2378, %v859
        %v2385 = vrot.slane %v2379, 5
        %v2386 = vrot.slane %v2380, 5
        %v2387 = vsel %vm743, %v2385, %v2386
        %v2388 = vrot.slane %v2381, 5
        %v2389 = vsel %vm743, %v2386, %v2388
        %v2392 = vadd.f32 %v2316, %v2387
        %v2393 = vadd.f32 %v2317, %v2389
        %v2394 = vstv %s353
        %v2395 = vmul.f32 %v2394, %v857
        %v2396 = vmul.f32 %v2394, %v858
        %v2397 = vmul.f32 %v2394, %v859
        %v2401 = vrot.slane %v2395, 5
        %v2402 = vrot.slane %v2396, 5
        %v2403 = vsel %vm743, %v2401, %v2402
        %v2404 = vrot.slane %v2397, 5
        %v2405 = vsel %vm743, %v2402, %v2404
        %v2408 = vadd.f32 %v2336, %v2403
        %v2409 = vadd.f32 %v2337, %v2405
        %v2410 = vstv %s354
        %v2411 = vmul.f32 %v2410, %v857
        %v2412 = vmul.f32 %v2410, %v858
        %v2413 = vmul.f32 %v2410, %v859
        %v2417 = vrot.slane %v2411, 5
        %v2418 = vrot.slane %v2412, 5
        %v2419 = vsel %vm743, %v2417, %v2418
        %v2420 = vrot.slane %v2413, 5
        %v2421 = vsel %vm743, %v2418, %v2420
        %v2424 = vadd.f32 %v2356, %v2419
        %v2425 = vadd.f32 %v2357, %v2421
        %v2426 = vstv %s355
        %v2427 = vmul.f32 %v2426, %v857
        %v2428 = vmul.f32 %v2426, %v858
        %v2429 = vmul.f32 %v2426, %v859
        %v2433 = vrot.slane %v2427, 5
        %v2434 = vrot.slane %v2428, 5
        %v2435 = vsel %vm743, %v2433, %v2434
        %v2436 = vrot.slane %v2429, 5
        %v2437 = vsel %vm743, %v2434, %v2436
        %v2440 = vadd.f32 %v2376, %v2435
        %v2441 = vadd.f32 %v2377, %v2437
        %v2442 = vstv %s356
        %v2443 = vmul.f32 %v2442, %v857
        %v2444 = vmul.f32 %v2442, %v858
        %v2445 = vmul.f32 %v2442, %v859
        %v2449 = vrot.slane %v2443, 5
        %v2450 = vrot.slane %v2444, 5
        %v2451 = vsel %vm743, %v2449, %v2450
        %v2452 = vrot.slane %v2445, 5
        %v2453 = vsel %vm743, %v2450, %v2452
        %2454 = vrot.lane.b32.xlu0 %v2451, 124
        %v2455 = vpop.permute.xlu0 %2454
        %2456 = vrot.lane.b32.xlu0 %v2453, 124
        %v2457 = vpop.permute.xlu0 %2456
        %v2460 = vadd.f32 %v2392, %v2455
        %v2461 = vadd.f32 %v2393, %v2457
        %v2462 = vstv %s357
        %v2463 = vmul.f32 %v2462, %v857
        %v2464 = vmul.f32 %v2462, %v858
        %v2465 = vmul.f32 %v2462, %v859
        %v2469 = vrot.slane %v2463, 5
        %v2470 = vrot.slane %v2464, 5
        %v2471 = vsel %vm743, %v2469, %v2470
        %v2472 = vrot.slane %v2465, 5
        %v2473 = vsel %vm743, %v2470, %v2472
        %2474 = vrot.lane.b32.xlu0 %v2471, 124
        %v2475 = vpop.permute.xlu0 %2474
        %2476 = vrot.lane.b32.xlu0 %v2473, 124
        %v2477 = vpop.permute.xlu0 %2476
        %v2480 = vadd.f32 %v2408, %v2475
        %v2481 = vadd.f32 %v2409, %v2477
        %v2482 = vstv %s358
        %v2483 = vmul.f32 %v2482, %v857
        %v2484 = vmul.f32 %v2482, %v858
        %v2485 = vmul.f32 %v2482, %v859
        %v2489 = vrot.slane %v2483, 5
        %v2490 = vrot.slane %v2484, 5
        %v2491 = vsel %vm743, %v2489, %v2490
        %v2492 = vrot.slane %v2485, 5
        %v2493 = vsel %vm743, %v2490, %v2492
        %2494 = vrot.lane.b32.xlu0 %v2491, 124
        %v2495 = vpop.permute.xlu0 %2494
        %2496 = vrot.lane.b32.xlu0 %v2493, 124
        %v2497 = vpop.permute.xlu0 %2496
        %v2500 = vadd.f32 %v2424, %v2495
        %v2501 = vadd.f32 %v2425, %v2497
        %v2502 = vstv %s359
        %v2503 = vmul.f32 %v2502, %v857
        %v2504 = vmul.f32 %v2502, %v858
        %v2505 = vmul.f32 %v2502, %v859
        %v2509 = vrot.slane %v2503, 6
        %v2510 = vrot.slane %v2504, 6
        %v2511 = vsel %vm754, %v2509, %v2510
        %v2512 = vrot.slane %v2505, 6
        %v2513 = vsel %vm754, %v2510, %v2512
        %2514 = vrot.lane.b32.xlu0 %v2511, 3
        %v2515 = vpop.permute.xlu0 %2514
        %2516 = vrot.lane.b32.xlu0 %v2513, 3
        %v2517 = vpop.permute.xlu0 %2516
        %v2520 = vadd.f32 %v2440, %v2515
        %v2521 = vadd.f32 %v2441, %v2517
        %v2522 = vstv %s360
        %v2523 = vmul.f32 %v2522, %v857
        %v2524 = vmul.f32 %v2522, %v858
        %v2525 = vmul.f32 %v2522, %v859
        %v2529 = vrot.slane %v2523, 6
        %v2530 = vrot.slane %v2524, 6
        %v2531 = vsel %vm754, %v2529, %v2530
        %v2532 = vrot.slane %v2525, 6
        %v2533 = vsel %vm754, %v2530, %v2532
        %2534 = vrot.lane.b32.xlu0 %v2531, 127
        %v2535 = vpop.permute.xlu0 %2534
        %2536 = vrot.lane.b32.xlu0 %v2533, 127
        %v2537 = vpop.permute.xlu0 %2536
        %v2540 = vadd.f32 %v2460, %v2535
        %v2541 = vadd.f32 %v2461, %v2537
        %v2542 = vstv %s361
        %v2543 = vmul.f32 %v2542, %v857
        %v2544 = vmul.f32 %v2542, %v858
        %v2545 = vmul.f32 %v2542, %v859
        %v2549 = vrot.slane %v2543, 6
        %v2550 = vrot.slane %v2544, 6
        %v2551 = vsel %vm754, %v2549, %v2550
        %v2552 = vrot.slane %v2545, 6
        %v2553 = vsel %vm754, %v2550, %v2552
        %2554 = vrot.lane.b32.xlu0 %v2551, 127
        %v2555 = vpop.permute.xlu0 %2554
        %2556 = vrot.lane.b32.xlu0 %v2553, 127
        %v2557 = vpop.permute.xlu0 %2556
        %v2560 = vadd.f32 %v2480, %v2555
        %v2561 = vadd.f32 %v2481, %v2557
        %v2562 = vstv %s362
        %v2563 = vmul.f32 %v2562, %v857
        %v2564 = vmul.f32 %v2562, %v858
        %v2565 = vmul.f32 %v2562, %v859
        %v2569 = vrot.slane %v2563, 6
        %v2570 = vrot.slane %v2564, 6
        %v2571 = vsel %vm754, %v2569, %v2570
        %v2572 = vrot.slane %v2565, 6
        %v2573 = vsel %vm754, %v2570, %v2572
        %2574 = vrot.lane.b32.xlu0 %v2571, 127
        %v2575 = vpop.permute.xlu0 %2574
        %2576 = vrot.lane.b32.xlu0 %v2573, 127
        %v2577 = vpop.permute.xlu0 %2576
        %v2580 = vadd.f32 %v2500, %v2575
        %v2581 = vadd.f32 %v2501, %v2577
        %v2582 = vstv %s363
        %v2583 = vmul.f32 %v2582, %v857
        %v2584 = vmul.f32 %v2582, %v858
        %v2585 = vmul.f32 %v2582, %v859
        %v2589 = vrot.slane %v2583, 6
        %v2590 = vrot.slane %v2584, 6
        %v2591 = vsel %vm754, %v2589, %v2590
        %v2592 = vrot.slane %v2585, 6
        %v2593 = vsel %vm754, %v2590, %v2592
        %2594 = vrot.lane.b32.xlu0 %v2591, 127
        %v2595 = vpop.permute.xlu0 %2594
        %2596 = vrot.lane.b32.xlu0 %v2593, 127
        %v2597 = vpop.permute.xlu0 %2596
        %v2600 = vadd.f32 %v2520, %v2595
        %v2601 = vadd.f32 %v2521, %v2597
        %v2602 = vstv %s364
        %v2603 = vmul.f32 %v2602, %v857
        %v2604 = vmul.f32 %v2602, %v858
        %v2605 = vmul.f32 %v2602, %v859
        %v2609 = vrot.slane %v2603, 6
        %v2610 = vrot.slane %v2604, 6
        %v2611 = vsel %vm754, %v2609, %v2610
        %v2612 = vrot.slane %v2605, 6
        %v2613 = vsel %vm754, %v2610, %v2612
        %2614 = vrot.lane.b32.xlu0 %v2611, 123
        %v2615 = vpop.permute.xlu0 %2614
        %2616 = vrot.lane.b32.xlu0 %v2613, 123
        %v2617 = vpop.permute.xlu0 %2616
        %v2620 = vadd.f32 %v2540, %v2615
        %v2621 = vadd.f32 %v2541, %v2617
        %v2622 = vstv %s365
        %v2623 = vmul.f32 %v2622, %v857
        %v2624 = vmul.f32 %v2622, %v858
        %v2625 = vmul.f32 %v2622, %v859
        %v2629 = vrot.slane %v2623, 6
        %v2630 = vrot.slane %v2624, 6
        %v2631 = vsel %vm754, %v2629, %v2630
        %v2632 = vrot.slane %v2625, 6
        %v2633 = vsel %vm754, %v2630, %v2632
        %2634 = vrot.lane.b32.xlu0 %v2631, 123
        %v2635 = vpop.permute.xlu0 %2634
        %2636 = vrot.lane.b32.xlu0 %v2633, 123
        %v2637 = vpop.permute.xlu0 %2636
        %v2640 = vadd.f32 %v2560, %v2635
        %v2641 = vadd.f32 %v2561, %v2637
        %2644 = vrot.lane.b32.xlu0 %v2640, 127
        %v2645 = vpop.permute.xlu0 %2644
        %2646 = vrot.lane.b32.xlu0 %v2641, 127
        %v2647 = vpop.permute.xlu0 %2646
        %v2650 = vadd.f32 %v2620, %v2645
        %v2651 = vadd.f32 %v2621, %v2647
        %2654 = vrot.lane.b32.xlu0 %v2600, 127
        %v2655 = vpop.permute.xlu0 %2654
        %2656 = vrot.lane.b32.xlu0 %v2601, 127
        %v2657 = vpop.permute.xlu0 %2656
        %v2660 = vadd.f32 %v2580, %v2655
        %v2661 = vadd.f32 %v2581, %v2657
        %2664 = vrot.lane.b32.xlu0 %v2660, 126
        %v2665 = vpop.permute.xlu0 %2664
        %2666 = vrot.lane.b32.xlu0 %v2661, 126
        %v2667 = vpop.permute.xlu0 %2666
        %v2670 = vadd.f32 %v2650, %v2665
        %v2671 = vadd.f32 %v2651, %v2667
        %v2672 = vstv %s366
        %v2673 = vadd.f32 %v2670, %v2672
        %v2674 = vadd.f32 %v2671, %v2672
        %v2675 = vxor.u32 %v2673, 2147483648
        %v2676 = vxor.u32 %v2674, 2147483648
        %v2677 = vmul.f32 %v2675, 1.442695
        %v2678 = vpow.pop %v2677
        %v2679 = vmul.f32 %v2676, 1.442695
        %v2680 = vpow.pop %v2679
        %v2681 = vadd.f32 %v2678, 1.0
        %v2682 = vadd.f32 %v2680, 1.0
        %v2683 = vrcp.pop %v2681
        %v2684 = vmul.f32 %v2681, %v2683
        %v2685 = vsub.f32 1.0, %v2684
        %v2686 = vmul.f32 %v2683, %v2685
        %v2687 = vadd.f32 %v2683, %v2686
        %vm2688 = vweird.f32 %v2681
        %vm2689 = vweird.f32 %v2683
        %vm2690 = vmor %vm2688, %vm2689
        %v2691 = vsel %vm2690, %v2683, %v2687
        %v2692 = vand.u32 2147483647, %v2681
        %vm2693 = vcmp.eq.f32.partialorder %v2692, 8.507059e+37
        %v2694 = vand.u32 %v2681, 2147483648
        %v2695 = vor.u32 1.1754944e-38, %v2694
        %v2696 = vsel %vm2693, %v2695, %v2691
        %v2697 = vmul.f32 1.0, %v2696
        %v2698 = vrcp.pop %v2682
        %v2699 = vmul.f32 %v2682, %v2698
        %v2700 = vsub.f32 1.0, %v2699
        %v2701 = vmul.f32 %v2698, %v2700
        %v2702 = vadd.f32 %v2698, %v2701
        %vm2703 = vweird.f32 %v2682
        %vm2704 = vweird.f32 %v2698
        %vm2705 = vmor %vm2703, %vm2704
        %v2706 = vsel %vm2705, %v2698, %v2702
        %v2707 = vand.u32 2147483647, %v2682
        %vm2708 = vcmp.eq.f32.partialorder %v2707, 8.507059e+37
        %v2709 = vand.u32 %v2682, 2147483648
        %v2710 = vor.u32 1.1754944e-38, %v2709
        %v2711 = vsel %vm2708, %v2710, %v2706
        %v2712 = vmul.f32 1.0, %v2711
        %v2714 = vrot.slane %v2697, 1
        %2715 = vrot.lane.b32.xlu0 %v2714, 16
        %v2716 = vpop.permute.xlu0 %2715
        %v2718 = vrot.slane %v2697, 2
        %2719 = vrot.lane.b32.xlu0 %v2718, 32
        %v2720 = vpop.permute.xlu0 %2719
        %v2722 = vrot.slane %v2697, 3
        %2723 = vrot.lane.b32.xlu0 %v2722, 48
        %v2724 = vpop.permute.xlu0 %2723
        %v2726 = vrot.slane %v2697, 4
        %2727 = vrot.lane.b32.xlu0 %v2726, 64
        %v2728 = vpop.permute.xlu0 %2727
        %v2730 = vrot.slane %v2697, 5
        %2731 = vrot.lane.b32.xlu0 %v2730, 80
        %v2732 = vpop.permute.xlu0 %2731
        %v2734 = vrot.slane %v2697, 6
        %2735 = vrot.lane.b32.xlu0 %v2734, 96
        %v2736 = vpop.permute.xlu0 %2735
        %v2738 = vrot.slane %v2697, 7
        %2739 = vrot.lane.b32.xlu0 %v2738, 112
        %v2740 = vpop.permute.xlu0 %2739
        %v2743 = vrot.slane %v2712, 1
        %2744 = vrot.lane.b32.xlu0 %v2743, 16
        %v2745 = vpop.permute.xlu0 %2744
        %v2747 = vrot.slane %v2712, 2
        %2748 = vrot.lane.b32.xlu0 %v2747, 32
        %v2749 = vpop.permute.xlu0 %2748
        %v2751 = vrot.slane %v2712, 3
        %2752 = vrot.lane.b32.xlu0 %v2751, 48
        %v2753 = vpop.permute.xlu0 %2752
        %v2755 = vrot.slane %v2712, 4
        %2756 = vrot.lane.b32.xlu0 %v2755, 64
        %v2757 = vpop.permute.xlu0 %2756
        %v2759 = vrot.slane %v2712, 5
        %2760 = vrot.lane.b32.xlu0 %v2759, 80
        %v2761 = vpop.permute.xlu0 %2760
        %v2763 = vrot.slane %v2712, 6
        %2764 = vrot.lane.b32.xlu0 %v2763, 96
        %v2765 = vpop.permute.xlu0 %2764
        %v2767 = vrot.slane %v2712, 7
        %2768 = vrot.lane.b32.xlu0 %v2767, 112
        %v2769 = vpop.permute.xlu0 %2768
        %vm2771 = vcmask 130048
        %v2772 = vsel %vm2771, %v2697, %v2716
        %vm2773 = vcmask 261120
        %v2774 = vsel %vm2773, %v2772, %v2720
        %vm2775 = vcmask 392192
        %v2776 = vsel %vm2775, %v2774, %v2724
        %vm2777 = vcmask 523264
        %v2778 = vsel %vm2777, %v2776, %v2728
        %vm2779 = vcmask 654336
        %v2780 = vsel %vm2779, %v2778, %v2732
        %vm2781 = vcmask 785408
        %v2782 = vsel %vm2781, %v2780, %v2736
        %vm2783 = vcmask 916480
        %v2784 = vsel %vm2783, %v2782, %v2740
        %v2785 = vsel %vm2771, %v2712, %v2745
        %v2786 = vsel %vm2773, %v2785, %v2749
        %v2787 = vsel %vm2775, %v2786, %v2753
        %v2788 = vsel %vm2777, %v2787, %v2757
        %v2789 = vsel %vm2779, %v2788, %v2761
        %v2790 = vsel %vm2781, %v2789, %v2765
        %v2791 = vsel %vm2783, %v2790, %v2769
        %v2792 = vperm.slane %v2784, 0
        %v2793 = vperm.slane %v2791, 0
        %v2794 = vmul.f32 %v655, %v2792
        %v2795 = vmul.f32 %v656, %v2793
        %v2796 = vmul.f32 %v657, %v2792
        %v2797 = vmul.f32 %v658, %v2793
        %v2798 = vmul.f32 %v659, %v2792
        %v2799 = vmul.f32 %v660, %v2793
        %v2800 = vmul.f32 %v661, %v2792
        %v2801 = vmul.f32 %v662, %v2793
        %2802 = vst [vmem:[%s259] sm:$0xff] %v2794
        %2803 = vst [vmem:[%s259 + $0x8] sm:$0xff] %v2795
        %2804 = vst [vmem:[%s259 + $0x10] sm:$0xff] %v2796
        %2805 = vst [vmem:[%s259 + $0x18] sm:$0xff] %v2797
        %2806 = vst [vmem:[%s259 + $0x20] sm:$0xff] %v2798
        %2807 = vst [vmem:[%s259 + $0x28] sm:$0xff] %v2799
        %2808 = vst [vmem:[%s259 + $0x30] sm:$0xff] %v2800
        %2809 = vst [vmem:[%s259 + $0x38] sm:$0xff] %v2801
        %s2810 = sand.u32 %s142, 1
        %s2811 = scalar_lea.sflag [#allocation5], %s2810
        %s2812 = sand.u32 %s142, 1
        %s2813 = smul.addr %s2812, 64
        %s2814 = scalar_lea.vmem [#allocation8], %s2813
        // Predicated region
        $region49: #{tpu_custom_call.1} parent=39 // pred_check
          %p2815 = pneg %p152
        $region50: #{tpu_custom_call.1} parent=39 // pred_check_branch
          %2817 = sbr.rel (%p2815) target = $region52
        $region51: #{tpu_custom_call.1} parent=39 // pred_region
          %2819 = vsyncadd %s2811, 0
          %s2820 = smul.addr %s24, 8
          %s2821 = smul.addr %s2820, 8
          %s2822 = scalar_lea.hbm %s5, %s2821
          %s2823 = sshll.u32 %s2814, 4
          %s2824 = int_to_ptr.vmem [resolvable:$true] %s2823
          %s2825 = sshll.u32 %s2822, 4
          %s2826 = int_to_ptr.hbm [resolvable:$true] %s2825
          %2831 = dma.vmem_to_hbm [thread:$0]  %s2824, 1024, %s2826, %s2811, 256, 256, 16
        $region52: #{tpu_custom_call.1} parent=39 // pred_fallthru
          _
      $region40: #{tpu_custom_call.1} parent=5 // pred_fallthru
        _
      %p2832 = scmp.le.s32.totalorder 2, %s19
      // Predicated region
      $region53: #{tpu_custom_call.1} parent=5 // pred_check
        %p2833 = pneg %p2832
      $region54: #{tpu_custom_call.1} parent=5 // pred_check_branch
        %2835 = sbr.rel (%p2833) target = $region56
      $region55: #{tpu_custom_call.1} parent=5 // pred_region
        %s2836 = ssub.s32 %s19, 2
        // Predicated region
        $region57: #{tpu_custom_call.1} parent=55 // pred_check
          %p2837 = pneg %p158
        $region58: #{tpu_custom_call.1} parent=55 // pred_check_branch
          %2839 = sbr.rel (%p2837) target = $region60
        $region59: #{tpu_custom_call.1} parent=55 // pred_region
          %s2840 = sand.u32 %s143, 1
          %s2841 = scalar_lea.sflag [#allocation5], %s2840
          %s2842 = sand.u32 %s143, 1
          %s2843 = smul.addr %s2842, 64
          %s2844 = scalar_lea.vmem [#allocation8], %s2843
          %2846 = dma.done %s2841, 1024
        $region60: #{tpu_custom_call.1} parent=55 // pred_fallthru
          _
      $region56: #{tpu_custom_call.1} parent=5 // pred_fallthru
        _
    $region6: #{tpu_custom_call.1} parent=1 // loop_footer
      %s23 = sadd.s32 1, %s19
    $region7: #{tpu_custom_call.1} parent=1 // loop_footer_branch
      %18 = sbr.rel target = $region3
    $region8: #{tpu_custom_call.1} parent=1 // loop_exit
      _
    %2847 = vsyncpa [#allocation4], 1
    %s2848 = scalar_lea.sflag [#allocation4], 1
    %2849 = vsyncpa %s2848, 1
    %2850 = vsyncpa [#allocation5], 1
    %s2851 = scalar_lea.sflag [#allocation5], 1
    %2852 = vsyncpa %s2851, 1
    %2853 = vsyncpa [#allocation6], 1
    %s2854 = scalar_lea.sflag [#allocation6], 1
    %2855 = vsyncpa %s2854, 1

</llo_original>
